<compile_context>
chip_gen: v7x
topology: tpu7x:2x2x1
jax: 0.10.0
libtpu: 0.0.40
codegen_flags: <defaults>
</compile_context>

<pallas_src>
import functools

import numpy as np
import jax
import jax.numpy as jnp
from jax.experimental import pallas as pl
from jax.experimental.pallas import tpu as pltpu


# ------------------------------ fused kernel --------------------------------

def _amc_fused_kernel(local_ref, g_ref, masks_ref, fpe_ref, ape_ref,
                      w1_ref, b1_ref, w2_ref, b2_ref,
                      wq_ref, bq_ref, wkv_ref, bkv_ref,
                      dww_ref, dwb_ref, w1x1_ref, b1x1_ref, ab_ref,
                      uwT_ref, a_ref,
                      out_ref, img_scr, *, C, H, W, TH):
    """Grid = (B, Ho//TH).  j==0 does the full ResidualFusion + AgentAttention
    + 1x1 conv and stages the (H*C, W) image in VMEM scratch; every j does the
    two interpolation matmuls for its Ho tile and writes (1, C, TH, Wo).

    local/g : (1, C, HW)      fpe/ape : (C, 1)
    w1 : (C, 9*2C)  w2 : (C, 9*C)    b* : (C, 1)
    wq : (C, C)     wkv : (2C, C)    bkv : (2C, 1)
    dww : (C, 9)    w1x1 : (C, C)    ab : (1, 2) [agent_bias1, agent_bias2]
    masks : (9, HW) 0/1 tap-validity constants
    uwT : (W, Wo)   a_ref : (1, C*TH, H*C)  H-interp + channel-select for tile j
    out : (1, C, TH, Wo)      img_scr : (H*C, W) f32 scratch
    """
    HW = H * W
    f32 = jnp.float32
    j = pl.program_id(1)

    @pl.when(j == 0)
    def _main():
        local = local_ref[0]                               # (C, HW)
        gpe = g_ref[0] + ape_ref[...]                      # global + AMC pos-embed
        masks = masks_ref[...]                             # (9, HW)

        def taps(x):
            # 9 zero-padded 3x3 shifts of a (Cx, HW) tile, built in VMEM with
            # roll + constant 0/1 masks (no 9x HBM tap tensors, no iota/where).
            parts = []
            for t in range(9):
                dy, dx = t // 3 - 1, t % 3 - 1
                d = dy * W + dx
                shifted = x if d == 0 else pltpu.roll(x, shift=(-d) % HW, axis=1)
                parts.append(shifted * masks[t:t + 1, :])
            return parts

        def conv3x3(x, w_ref_, b_ref_):
            # single MXU matmul with K = 9*Cin (f32 operands, f32 accumulation)
            tap_mat = jnp.concatenate(taps(x), axis=0)     # (9*Cx, HW)
            return jnp.dot(w_ref_[...], tap_mat,
                           preferred_element_type=f32) + b_ref_[...]

        # ---------------- ResidualFusion ----------------
        x_cat = jnp.concatenate([local + fpe_ref[...], gpe], axis=0)   # (2C, HW)
        h1 = jnp.maximum(conv3x3(x_cat, w1_ref, b1_ref), 0.0)
        fm = conv3x3(h1, w2_ref, b2_ref) + local                       # (C, HW)

        # ---------------- AgentAttention ----------------
        # stacked k/v: one MXU dispatch, M = 2C
        kv = jnp.dot(wkv_ref[...], fm, preferred_element_type=f32) + bkv_ref[...]
        k_all = kv[:C, :]                                  # (C, HW)
        v_all = kv[C:, :]                                  # (C, HW)

        pooled = jnp.max(fm, axis=1, keepdims=True)        # adaptive MAX pool -> (C,1)
        wq = wq_ref[...]
        q = bq_ref[...]                                    # (C, 1)
        for jj in range(C):                                # VPU; avoids N=1 MXU dot
            q = q + wq[:, jj:jj + 1] * pooled[jj:jj + 1, :]

        # attention 1: per-pixel score <k_p, q>, softmax over pixels (lane dim)
        s1 = jnp.sum(q * k_all, axis=0, keepdims=True) * (1.0 / (C ** 0.5))
        s1 = s1 - jnp.max(s1, axis=1, keepdims=True)
        p1 = jnp.exp(s1)
        a1 = p1 * pl.reciprocal(jnp.sum(p1, axis=1, keepdims=True), approx=True)
        pv = jnp.sum(v_all * a1, axis=1, keepdims=True) + ab_ref[:, 0:1]   # (C,1)
        # Attention branch 2 of the reference is algebraically the identity on
        # PV: PV is pixel-constant and softmax(attn2) sums to 1 over pixels,
        # so PV' == PV + agent_bias2 exactly.
        pv_prime = pv + ab_ref[:, 1:2]

        # depthwise 3x3 conv (elementwise, VPU)
        dww = dww_ref[...]                                 # (C, 9)
        fm_taps = taps(fm)
        dw = dwb_ref[...] + dww[:, 0:1] * fm_taps[0]
        for t in range(1, 9):
            dw = dw + dww[:, t:t + 1] * fm_taps[t]

        m_att = dw + pv_prime                              # FM_enhanced
        m_comb = m_att + gpe                               # + (global + pos-embed)
        m_final = jnp.dot(w1x1_ref[...], m_comb,
                          preferred_element_type=f32) + b1x1_ref[...]   # 1x1 conv

        # stage (C, HW) -> (H*C, W) "h-major" image rows for the interp matmuls
        # (static lane slices + aligned sublane stores only; no in-kernel reshape)
        for h in range(H):
            img_scr[pl.ds(h * C, C), :] = m_final[:, h * W:(h + 1) * W]

    # --------------- bilinear x16 upsample epilogue (every j) ---------------
    # a_ref[0] folds the H-interpolation for this Ho tile with the channel
    # re-grouping: rows ordered (c, th), cols ordered (h, c).
    r = jnp.dot(a_ref[0], img_scr[...], preferred_element_type=jnp.float32)  # (C*TH, W)
    o = jnp.dot(r, uwT_ref[...], preferred_element_type=jnp.float32)         # (C*TH, Wo)
    for c in range(C):
        out_ref[0, c] = o[c * TH:(c + 1) * TH, :]          # lane-dense (TH, Wo) store


# --------------------------- host-side constants -----------------------------

def _np_bilinear_matrix(in_size, out_size):
    """Interp matrix matching nn.Upsample(mode='bilinear', align_corners=False)."""
    o = np.arange(out_size, dtype=np.float64)
    src = np.maximum((o + 0.5) * (in_size / out_size) - 0.5, 0.0)
    i0 = np.minimum(np.floor(src).astype(np.int64), in_size - 1)
    i1 = np.minimum(i0 + 1, in_size - 1)
    w1 = (src - i0).astype(np.float32)
    w0 = (1.0 - w1).astype(np.float32)
    u = np.zeros((out_size, in_size), np.float32)
    r = np.arange(out_size)
    np.add.at(u, (r, i0), w0)
    np.add.at(u, (r, i1), w1)
    return u


def _np_tap_masks(H, W):
    """(9, H*W) 0/1 validity masks for the rolled 3x3 taps (zero padding)."""
    HW = H * W
    p = np.arange(HW)
    rows, cols = p // W, p % W
    m = np.zeros((9, HW), np.float32)
    for t in range(9):
        dy, dx = t // 3 - 1, t % 3 - 1
        ok = (rows + dy >= 0) & (rows + dy < H) & (cols + dx >= 0) & (cols + dx < W)
        m[t] = ok.astype(np.float32)
    return m


def _np_hinterp_select(uh, C, TH):
    """(NT, C*TH, H*C): A[j, c*TH+th, h*C+c'] = uh[j*TH+th, h] * (c==c')."""
    Ho, H = uh.shape
    NT = Ho // TH
    a = np.zeros((NT, C * TH, H * C), np.float32)
    uh_t = uh.reshape(NT, TH, H)
    for c in range(C):
        a[:, c * TH:(c + 1) * TH, c::C] = uh_t
    return a


# ----------------------------- wrappers / glue -------------------------------

def _const_spec(shape):
    n = len(shape)
    return pl.BlockSpec(shape, lambda b, j: (0,) * n)


def init_params(key, c):
    """Parameters in PyTorch-equivalent shapes."""
    ks = jax.random.split(key, 16)
    s = 0.1
    return {
        # ResidualFusion
        "fpe": jax.random.normal(ks[0], (1, c, 1, 1), jnp.float32),
        "w1": s * jax.random.normal(ks[1], (c, 2 * c, 3, 3), jnp.float32),
        "b1": s * jax.random.normal(ks[2], (c,), jnp.float32),
        "w2": s * jax.random.normal(ks[3], (c, c, 3, 3), jnp.float32),
        "b2": s * jax.random.normal(ks[4], (c,), jnp.float32),
        # AgentAttention
        "wq": s * jax.random.normal(ks[5], (c, c), jnp.float32),
        "bq": s * jax.random.normal(ks[6], (c,), jnp.float32),
        "wk": s * jax.random.normal(ks[7], (c, c), jnp.float32),
        "bk": s * jax.random.normal(ks[8], (c,), jnp.float32),
        "wv": s * jax.random.normal(ks[9], (c, c), jnp.float32),
        "bv": s * jax.random.normal(ks[10], (c,), jnp.float32),
        "dw_w": s * jax.random.normal(ks[11], (c, 1, 3, 3), jnp.float32),
        "dw_b": s * jax.random.normal(ks[12], (c,), jnp.float32),
        "ab1": jnp.zeros((), jnp.float32),        # agent_bias1 (torch.zeros(1))
        "ab2": jnp.zeros((), jnp.float32),        # agent_bias2
        # AMCFeatureIntegrator
        "ape": jax.random.normal(ks[13], (1, c, 1, 1), jnp.float32),
        "w1x1": s * jax.random.normal(ks[14], (c, c, 1, 1), jnp.float32),
        "b1x1": s * jax.random.normal(ks[15], (c,), jnp.float32),
    }


def amc_feature_integrator(local_nchw, global_nchw, p, *, tile_h=64):
    B, C, H, W = local_nchw.shape
    HW = H * W
    Ho, Wo = 16 * H, 16 * W
    assert HW % 128 == 0, "flattened spatial dim must be lane-dense"
    TH = min(tile_h, Ho)
    assert Ho % TH == 0 and TH % 8 == 0
    NT = Ho // TH

    # NCHW -> (B, C, HW): free contiguous reshape, channels in sublanes, HW in lanes
    local = local_nchw.reshape(B, C, HW).astype(jnp.float32)
    gfeat = global_nchw.reshape(B, C, HW).astype(jnp.float32)

    # PyTorch-shaped params -> taps-fused / column-vector layout
    cvec = lambda v: v.reshape(C, 1).astype(jnp.float32)
    w1m = p["w1"].transpose(0, 2, 3, 1).reshape(C, 9 * 2 * C)   # w[co,(ky*3+kx)*Cin+ci]
    w2m = p["w2"].transpose(0, 2, 3, 1).reshape(C, 9 * C)
    dwwm = p["dw_w"].reshape(C, 9)
    w1x1m = p["w1x1"].reshape(C, C)
    wkv = jnp.concatenate([p["wk"], p["wv"]], axis=0)           # (2C, C) stacked k/v
    bkv = jnp.concatenate([p["bk"], p["bv"]]).reshape(2 * C, 1)
    ab = jnp.stack([p["ab1"], p["ab2"]]).reshape(1, 2)

    # host-built (numpy) compile-time constants
    masks = jnp.asarray(_np_tap_masks(H, W))                    # (9, HW)
    uwT = jnp.asarray(_np_bilinear_matrix(W, Wo).T)             # (W, Wo)
    uh = _np_bilinear_matrix(H, Ho)                             # (Ho, H)
    a_sel = jnp.asarray(_np_hinterp_select(uh, C, TH))          # (NT, C*TH, H*C)

    kernel = functools.partial(_amc_fused_kernel, C=C, H=H, W=W, TH=TH)

    out = pl.pallas_call(
        kernel,
        out_shape=jax.ShapeDtypeStruct((B, C, Ho, Wo), jnp.float32),
        grid=(B, NT),
        in_specs=[
            pl.BlockSpec((1, C, HW), lambda b, j: (b, 0, 0)),       # local
            pl.BlockSpec((1, C, HW), lambda b, j: (b, 0, 0)),       # global
            _const_spec((9, HW)),                                   # tap masks
            _const_spec((C, 1)), _const_spec((C, 1)),               # fpe, ape
            _const_spec((C, 9 * 2 * C)), _const_spec((C, 1)),       # w1, b1
            _const_spec((C, 9 * C)), _const_spec((C, 1)),           # w2, b2
            _const_spec((C, C)), _const_spec((C, 1)),               # wq, bq
            _const_spec((2 * C, C)), _const_spec((2 * C, 1)),       # wkv, bkv
            _const_spec((C, 9)), _const_spec((C, 1)),               # dww, dwb
            _const_spec((C, C)), _const_spec((C, 1)),               # w1x1, b1x1
            _const_spec((1, 2)),                                    # agent biases
            _const_spec((W, Wo)),                                   # uwT
            pl.BlockSpec((1, C * TH, H * C), lambda b, j: (j, 0, 0)),  # H-interp tile j
        ],
        out_specs=pl.BlockSpec((1, C, TH, Wo), lambda b, j: (b, 0, j, 0)),
        scratch_shapes=[pltpu.VMEM((H * C, W), jnp.float32)],
        compiler_params=pltpu.CompilerParams(
            dimension_semantics=("parallel", "arbitrary")),         # batch across TCs
    )(local, gfeat, masks,
      cvec(p["fpe"]), cvec(p["ape"]),
      w1m, cvec(p["b1"]), w2m, cvec(p["b2"]),
      p["wq"], cvec(p["bq"]), wkv, bkv,
      dwwm, cvec(p["dw_b"]), w1x1m, cvec(p["b1x1"]), ab,
      uwT, a_sel)
    return out                                  # (B, C, 16H, 16W) NCHW, f32


if __name__ == "__main__":
    B, C, H, W = 2, 8, 16, 16
    key = jax.random.PRNGKey(0)
    k1, k2, k3 = jax.random.split(key, 3)
    local_feat = jax.random.normal(k1, (B, C, H, W), jnp.float32)
    global_feat = jax.random.normal(k2, (B, C, H, W), jnp.float32)
    params = init_params(k3, C)

    fwd = jax.jit(lambda a, g: amc_feature_integrator(a, g, params))
    out = fwd(local_feat, global_feat)
    jax.block_until_ready(out)
    assert out.shape == (B, C, 16 * H, 16 * W), out.shape
    assert out.dtype == jnp.float32
    print("KERNEL_OK")
</pallas_src>

<mosaic_0001>
module attributes {stable_mosaic.version = 11 : i64} {
  func.func @_amc_fused_kernel(%arg0: i32, %arg1: i32, %arg2: memref<1x8x256xf32, #tpu.memory_space<vmem>>, %arg3: memref<1x8x256xf32, #tpu.memory_space<vmem>>, %arg4: memref<9x256xf32, #tpu.memory_space<vmem>>, %arg5: memref<8x1xf32, #tpu.memory_space<vmem>>, %arg6: memref<8x1xf32, #tpu.memory_space<vmem>>, %arg7: memref<8x144xf32, #tpu.memory_space<vmem>>, %arg8: memref<8x1xf32, #tpu.memory_space<vmem>>, %arg9: memref<8x72xf32, #tpu.memory_space<vmem>>, %arg10: memref<8x1xf32, #tpu.memory_space<vmem>>, %arg11: memref<8x8xf32, #tpu.memory_space<vmem>>, %arg12: memref<8x1xf32, #tpu.memory_space<vmem>>, %arg13: memref<16x8xf32, #tpu.memory_space<vmem>>, %arg14: memref<16x1xf32, #tpu.memory_space<vmem>>, %arg15: memref<8x9xf32, #tpu.memory_space<vmem>>, %arg16: memref<8x1xf32, #tpu.memory_space<vmem>>, %arg17: memref<8x8xf32, #tpu.memory_space<vmem>>, %arg18: memref<8x1xf32, #tpu.memory_space<vmem>>, %arg19: memref<1x2xf32, #tpu.memory_space<vmem>>, %arg20: memref<16x256xf32, #tpu.memory_space<vmem>>, %arg21: memref<1x512x128xf32, #tpu.memory_space<vmem>>, %arg22: memref<1x8x64x256xf32, #tpu.memory_space<vmem>>, %arg23: memref<128x16xf32, #tpu.memory_space<vmem>>) attributes {dimension_semantics = [#tpu.dimension_semantics<parallel>, #tpu.dimension_semantics<arbitrary>], iteration_bounds = array<i64: 2, 4>, scalar_prefetch = 0 : i64, scratch_operands = 1 : i64, tpu.core_type = #tpu.core_type<tc>, window_params = [{transform_indices = @transform_0, window_bounds = array<i64: 1, 8, 256>}, {transform_indices = @transform_1, window_bounds = array<i64: 1, 8, 256>}, {pipeline_mode = #tpu.pipeline_mode<synchronous>, transform_indices = @transform_2, window_bounds = array<i64: 9, 256>}, {pipeline_mode = #tpu.pipeline_mode<synchronous>, transform_indices = @transform_3, window_bounds = array<i64: 8, 1>}, {pipeline_mode = #tpu.pipeline_mode<synchronous>, transform_indices = @transform_4, window_bounds = array<i64: 8, 1>}, {pipeline_mode = #tpu.pipeline_mode<synchronous>, transform_indices = @transform_5, window_bounds = array<i64: 8, 144>}, {pipeline_mode = #tpu.pipeline_mode<synchronous>, transform_indices = @transform_6, window_bounds = array<i64: 8, 1>}, {pipeline_mode = #tpu.pipeline_mode<synchronous>, transform_indices = @transform_7, window_bounds = array<i64: 8, 72>}, {pipeline_mode = #tpu.pipeline_mode<synchronous>, transform_indices = @transform_8, window_bounds = array<i64: 8, 1>}, {pipeline_mode = #tpu.pipeline_mode<synchronous>, transform_indices = @transform_9, window_bounds = array<i64: 8, 8>}, {pipeline_mode = #tpu.pipeline_mode<synchronous>, transform_indices = @transform_10, window_bounds = array<i64: 8, 1>}, {pipeline_mode = #tpu.pipeline_mode<synchronous>, transform_indices = @transform_11, window_bounds = array<i64: 16, 8>}, {pipeline_mode = #tpu.pipeline_mode<synchronous>, transform_indices = @transform_12, window_bounds = array<i64: 16, 1>}, {pipeline_mode = #tpu.pipeline_mode<synchronous>, transform_indices = @transform_13, window_bounds = array<i64: 8, 9>}, {pipeline_mode = #tpu.pipeline_mode<synchronous>, transform_indices = @transform_14, window_bounds = array<i64: 8, 1>}, {pipeline_mode = #tpu.pipeline_mode<synchronous>, transform_indices = @transform_15, window_bounds = array<i64: 8, 8>}, {pipeline_mode = #tpu.pipeline_mode<synchronous>, transform_indices = @transform_16, window_bounds = array<i64: 8, 1>}, {pipeline_mode = #tpu.pipeline_mode<synchronous>, transform_indices = @transform_17, window_bounds = array<i64: 1, 2>}, {pipeline_mode = #tpu.pipeline_mode<synchronous>, transform_indices = @transform_18, window_bounds = array<i64: 16, 256>}, {transform_indices = @transform_19, window_bounds = array<i64: 1, 512, 128>}, {transform_indices = @transform_20, window_bounds = array<i64: 1, 8, 64, 256>}]} {
    %c0_i32 = arith.constant 0 : i32
    %0 = arith.cmpi eq, %arg1, %c0_i32 : i32
    %1 = arith.extui %0 : i1 to i32
    %c0_i32_0 = arith.constant 0 : i32
    %2 = arith.cmpi ne, %1, %c0_i32_0 : i32
    scf.if %2 {
      %c0_33 = arith.constant 0 : index
      %c0_34 = arith.constant 0 : index
      %c0_35 = arith.constant 0 : index
      %41 = vector.load %arg2[%c0_33, %c0_34, %c0_35] : memref<1x8x256xf32, #tpu.memory_space<vmem>>, vector<1x8x256xf32>
      %42 = vector.shape_cast %41 : vector<1x8x256xf32> to vector<8x256xf32>
      %c0_36 = arith.constant 0 : index
      %c0_37 = arith.constant 0 : index
      %c0_38 = arith.constant 0 : index
      %43 = vector.load %arg3[%c0_36, %c0_37, %c0_38] : memref<1x8x256xf32, #tpu.memory_space<vmem>>, vector<1x8x256xf32>
      %44 = vector.shape_cast %43 : vector<1x8x256xf32> to vector<8x256xf32>
      %c0_39 = arith.constant 0 : index
      %c0_40 = arith.constant 0 : index
      %45 = vector.load %arg6[%c0_39, %c0_40] : memref<8x1xf32, #tpu.memory_space<vmem>>, vector<8x1xf32>
      %46 = vector.broadcast %45 : vector<8x1xf32> to vector<8x256xf32>
      %47 = arith.addf %44, %46 : vector<8x256xf32>
      %c0_41 = arith.constant 0 : index
      %c0_42 = arith.constant 0 : index
      %48 = vector.load %arg4[%c0_41, %c0_42] : memref<9x256xf32, #tpu.memory_space<vmem>>, vector<9x256xf32>
      %c0_43 = arith.constant 0 : index
      %c0_44 = arith.constant 0 : index
      %49 = vector.load %arg5[%c0_43, %c0_44] : memref<8x1xf32, #tpu.memory_space<vmem>>, vector<8x1xf32>
      %50 = vector.broadcast %49 : vector<8x1xf32> to vector<8x256xf32>
      %51 = arith.addf %42, %50 : vector<8x256xf32>
      %52 = tpu.concatenate %51, %47 in 0 : vector<8x256xf32>, vector<8x256xf32> -> vector<16x256xf32>
      %c17_i32 = arith.constant 17 : i32
      %53 = tpu.dynamic_rotate %52 by %c17_i32 dim 1 : vector<16x256xf32>, i32 -> vector<16x256xf32>
      %54 = vector.extract_strided_slice %48 {offsets = [0, 0], sizes = [1, 256], strides = [1, 1]} : vector<9x256xf32> to vector<1x256xf32>
      %55 = vector.broadcast %54 : vector<1x256xf32> to vector<16x256xf32>
      %56 = arith.mulf %53, %55 : vector<16x256xf32>
      %c16_i32 = arith.constant 16 : i32
      %57 = tpu.dynamic_rotate %52 by %c16_i32 dim 1 : vector<16x256xf32>, i32 -> vector<16x256xf32>
      %58 = vector.extract_strided_slice %48 {offsets = [1, 0], sizes = [1, 256], strides = [1, 1]} : vector<9x256xf32> to vector<1x256xf32>
      %59 = vector.broadcast %58 : vector<1x256xf32> to vector<16x256xf32>
      %60 = arith.mulf %57, %59 : vector<16x256xf32>
      %c15_i32 = arith.constant 15 : i32
      %61 = tpu.dynamic_rotate %52 by %c15_i32 dim 1 : vector<16x256xf32>, i32 -> vector<16x256xf32>
      %62 = vector.extract_strided_slice %48 {offsets = [2, 0], sizes = [1, 256], strides = [1, 1]} : vector<9x256xf32> to vector<1x256xf32>
      %63 = vector.broadcast %62 : vector<1x256xf32> to vector<16x256xf32>
      %64 = arith.mulf %61, %63 : vector<16x256xf32>
      %c1_i32 = arith.constant 1 : i32
      %65 = tpu.dynamic_rotate %52 by %c1_i32 dim 1 : vector<16x256xf32>, i32 -> vector<16x256xf32>
      %66 = vector.extract_strided_slice %48 {offsets = [3, 0], sizes = [1, 256], strides = [1, 1]} : vector<9x256xf32> to vector<1x256xf32>
      %67 = vector.broadcast %66 : vector<1x256xf32> to vector<16x256xf32>
      %68 = arith.mulf %65, %67 : vector<16x256xf32>
      %69 = vector.extract_strided_slice %48 {offsets = [4, 0], sizes = [1, 256], strides = [1, 1]} : vector<9x256xf32> to vector<1x256xf32>
      %70 = vector.broadcast %69 : vector<1x256xf32> to vector<16x256xf32>
      %71 = arith.mulf %52, %70 : vector<16x256xf32>
      %c255_i32 = arith.constant 255 : i32
      %72 = tpu.dynamic_rotate %52 by %c255_i32 dim 1 : vector<16x256xf32>, i32 -> vector<16x256xf32>
      %73 = vector.extract_strided_slice %48 {offsets = [5, 0], sizes = [1, 256], strides = [1, 1]} : vector<9x256xf32> to vector<1x256xf32>
      %74 = vector.broadcast %73 : vector<1x256xf32> to vector<16x256xf32>
      %75 = arith.mulf %72, %74 : vector<16x256xf32>
      %c241_i32 = arith.constant 241 : i32
      %76 = tpu.dynamic_rotate %52 by %c241_i32 dim 1 : vector<16x256xf32>, i32 -> vector<16x256xf32>
      %77 = vector.extract_strided_slice %48 {offsets = [6, 0], sizes = [1, 256], strides = [1, 1]} : vector<9x256xf32> to vector<1x256xf32>
      %78 = vector.broadcast %77 : vector<1x256xf32> to vector<16x256xf32>
      %79 = arith.mulf %76, %78 : vector<16x256xf32>
      %c240_i32 = arith.constant 240 : i32
      %80 = tpu.dynamic_rotate %52 by %c240_i32 dim 1 : vector<16x256xf32>, i32 -> vector<16x256xf32>
      %81 = vector.extract_strided_slice %48 {offsets = [7, 0], sizes = [1, 256], strides = [1, 1]} : vector<9x256xf32> to vector<1x256xf32>
      %82 = vector.broadcast %81 : vector<1x256xf32> to vector<16x256xf32>
      %83 = arith.mulf %80, %82 : vector<16x256xf32>
      %c239_i32 = arith.constant 239 : i32
      %84 = tpu.dynamic_rotate %52 by %c239_i32 dim 1 : vector<16x256xf32>, i32 -> vector<16x256xf32>
      %85 = vector.extract_strided_slice %48 {offsets = [8, 0], sizes = [1, 256], strides = [1, 1]} : vector<9x256xf32> to vector<1x256xf32>
      %86 = vector.broadcast %85 : vector<1x256xf32> to vector<16x256xf32>
      %87 = arith.mulf %84, %86 : vector<16x256xf32>
      %88 = tpu.concatenate %56, %60, %64, %68, %71, %75, %79, %83, %87 in 0 : vector<16x256xf32>, vector<16x256xf32>, vector<16x256xf32>, vector<16x256xf32>, vector<16x256xf32>, vector<16x256xf32>, vector<16x256xf32>, vector<16x256xf32>, vector<16x256xf32> -> vector<144x256xf32>
      %c0_45 = arith.constant 0 : index
      %c0_46 = arith.constant 0 : index
      %89 = vector.load %arg7[%c0_45, %c0_46] : memref<8x144xf32, #tpu.memory_space<vmem>>, vector<8x144xf32>
      %cst_47 = arith.constant dense<0.000000e+00> : vector<8x256xf32>
      %90 = tpu.matmul %89, %88, %cst_47 {dimension_numbers = #tpu.dot_dimension_numbers<[1], [0], [0], [1], [0, 0, 1, 1], [], []>} : vector<8x144xf32>, vector<144x256xf32>, vector<8x256xf32> -> vector<8x256xf32>
      %c0_48 = arith.constant 0 : index
      %c0_49 = arith.constant 0 : index
      %91 = vector.load %arg8[%c0_48, %c0_49] : memref<8x1xf32, #tpu.memory_space<vmem>>, vector<8x1xf32>
      %92 = vector.broadcast %91 : vector<8x1xf32> to vector<8x256xf32>
      %93 = arith.addf %90, %92 : vector<8x256xf32>
      %cst_50 = arith.constant 0.000000e+00 : f32
      %94 = vector.broadcast %cst_50 : f32 to vector<8x256xf32>
      %95 = arith.maximumf %93, %94 : vector<8x256xf32>
      %c17_i32_51 = arith.constant 17 : i32
      %96 = tpu.dynamic_rotate %95 by %c17_i32_51 dim 1 : vector<8x256xf32>, i32 -> vector<8x256xf32>
      %97 = vector.extract_strided_slice %48 {offsets = [0, 0], sizes = [1, 256], strides = [1, 1]} : vector<9x256xf32> to vector<1x256xf32>
      %98 = vector.broadcast %97 : vector<1x256xf32> to vector<8x256xf32>
      %99 = arith.mulf %96, %98 : vector<8x256xf32>
      %c16_i32_52 = arith.constant 16 : i32
      %100 = tpu.dynamic_rotate %95 by %c16_i32_52 dim 1 : vector<8x256xf32>, i32 -> vector<8x256xf32>
      %101 = vector.extract_strided_slice %48 {offsets = [1, 0], sizes = [1, 256], strides = [1, 1]} : vector<9x256xf32> to vector<1x256xf32>
      %102 = vector.broadcast %101 : vector<1x256xf32> to vector<8x256xf32>
      %103 = arith.mulf %100, %102 : vector<8x256xf32>
      %c15_i32_53 = arith.constant 15 : i32
      %104 = tpu.dynamic_rotate %95 by %c15_i32_53 dim 1 : vector<8x256xf32>, i32 -> vector<8x256xf32>
      %105 = vector.extract_strided_slice %48 {offsets = [2, 0], sizes = [1, 256], strides = [1, 1]} : vector<9x256xf32> to vector<1x256xf32>
      %106 = vector.broadcast %105 : vector<1x256xf32> to vector<8x256xf32>
      %107 = arith.mulf %104, %106 : vector<8x256xf32>
      %c1_i32_54 = arith.constant 1 : i32
      %108 = tpu.dynamic_rotate %95 by %c1_i32_54 dim 1 : vector<8x256xf32>, i32 -> vector<8x256xf32>
      %109 = vector.extract_strided_slice %48 {offsets = [3, 0], sizes = [1, 256], strides = [1, 1]} : vector<9x256xf32> to vector<1x256xf32>
      %110 = vector.broadcast %109 : vector<1x256xf32> to vector<8x256xf32>
      %111 = arith.mulf %108, %110 : vector<8x256xf32>
      %112 = vector.extract_strided_slice %48 {offsets = [4, 0], sizes = [1, 256], strides = [1, 1]} : vector<9x256xf32> to vector<1x256xf32>
      %113 = vector.broadcast %112 : vector<1x256xf32> to vector<8x256xf32>
      %114 = arith.mulf %95, %113 : vector<8x256xf32>
      %c255_i32_55 = arith.constant 255 : i32
      %115 = tpu.dynamic_rotate %95 by %c255_i32_55 dim 1 : vector<8x256xf32>, i32 -> vector<8x256xf32>
      %116 = vector.extract_strided_slice %48 {offsets = [5, 0], sizes = [1, 256], strides = [1, 1]} : vector<9x256xf32> to vector<1x256xf32>
      %117 = vector.broadcast %116 : vector<1x256xf32> to vector<8x256xf32>
      %118 = arith.mulf %115, %117 : vector<8x256xf32>
      %c241_i32_56 = arith.constant 241 : i32
      %119 = tpu.dynamic_rotate %95 by %c241_i32_56 dim 1 : vector<8x256xf32>, i32 -> vector<8x256xf32>
      %120 = vector.extract_strided_slice %48 {offsets = [6, 0], sizes = [1, 256], strides = [1, 1]} : vector<9x256xf32> to vector<1x256xf32>
      %121 = vector.broadcast %120 : vector<1x256xf32> to vector<8x256xf32>
      %122 = arith.mulf %119, %121 : vector<8x256xf32>
      %c240_i32_57 = arith.constant 240 : i32
      %123 = tpu.dynamic_rotate %95 by %c240_i32_57 dim 1 : vector<8x256xf32>, i32 -> vector<8x256xf32>
      %124 = vector.extract_strided_slice %48 {offsets = [7, 0], sizes = [1, 256], strides = [1, 1]} : vector<9x256xf32> to vector<1x256xf32>
      %125 = vector.broadcast %124 : vector<1x256xf32> to vector<8x256xf32>
      %126 = arith.mulf %123, %125 : vector<8x256xf32>
      %c239_i32_58 = arith.constant 239 : i32
      %127 = tpu.dynamic_rotate %95 by %c239_i32_58 dim 1 : vector<8x256xf32>, i32 -> vector<8x256xf32>
      %128 = vector.extract_strided_slice %48 {offsets = [8, 0], sizes = [1, 256], strides = [1, 1]} : vector<9x256xf32> to vector<1x256xf32>
      %129 = vector.broadcast %128 : vector<1x256xf32> to vector<8x256xf32>
      %130 = arith.mulf %127, %129 : vector<8x256xf32>
      %131 = tpu.concatenate %99, %103, %107, %111, %114, %118, %122, %126, %130 in 0 : vector<8x256xf32>, vector<8x256xf32>, vector<8x256xf32>, vector<8x256xf32>, vector<8x256xf32>, vector<8x256xf32>, vector<8x256xf32>, vector<8x256xf32>, vector<8x256xf32> -> vector<72x256xf32>
      %c0_59 = arith.constant 0 : index
      %c0_60 = arith.constant 0 : index
      %132 = vector.load %arg9[%c0_59, %c0_60] : memref<8x72xf32, #tpu.memory_space<vmem>>, vector<8x72xf32>
      %cst_61 = arith.constant dense<0.000000e+00> : vector<8x256xf32>
      %133 = tpu.matmul %132, %131, %cst_61 {dimension_numbers = #tpu.dot_dimension_numbers<[1], [0], [0], [1], [0, 0, 1, 1], [], []>} : vector<8x72xf32>, vector<72x256xf32>, vector<8x256xf32> -> vector<8x256xf32>
      %c0_62 = arith.constant 0 : index
      %c0_63 = arith.constant 0 : index
      %134 = vector.load %arg10[%c0_62, %c0_63] : memref<8x1xf32, #tpu.memory_space<vmem>>, vector<8x1xf32>
      %135 = vector.broadcast %134 : vector<8x1xf32> to vector<8x256xf32>
      %136 = arith.addf %133, %135 : vector<8x256xf32>
      %137 = arith.addf %136, %42 : vector<8x256xf32>
      %c0_64 = arith.constant 0 : index
      %c0_65 = arith.constant 0 : index
      %138 = vector.load %arg13[%c0_64, %c0_65] : memref<16x8xf32, #tpu.memory_space<vmem>>, vector<16x8xf32>
      %cst_66 = arith.constant dense<0.000000e+00> : vector<16x256xf32>
      %139 = tpu.matmul %138, %137, %cst_66 {dimension_numbers = #tpu.dot_dimension_numbers<[1], [0], [0], [1], [0, 0, 1, 1], [], []>} : vector<16x8xf32>, vector<8x256xf32>, vector<16x256xf32> -> vector<16x256xf32>
      %c0_67 = arith.constant 0 : index
      %c0_68 = arith.constant 0 : index
      %140 = vector.load %arg14[%c0_67, %c0_68] : memref<16x1xf32, #tpu.memory_space<vmem>>, vector<16x1xf32>
      %141 = vector.broadcast %140 : vector<16x1xf32> to vector<16x256xf32>
      %142 = arith.addf %139, %141 : vector<16x256xf32>
      %143 = vector.extract_strided_slice %142 {offsets = [0, 0], sizes = [8, 256], strides = [1, 1]} : vector<16x256xf32> to vector<8x256xf32>
      %144 = vector.extract_strided_slice %142 {offsets = [8, 0], sizes = [8, 256], strides = [1, 1]} : vector<16x256xf32> to vector<8x256xf32>
      %cst_69 = arith.constant dense<0xFF800000> : vector<8xf32>
      %145 = vector.multi_reduction <maximumf>, %137, %cst_69 [1] : vector<8x256xf32> to vector<8xf32>
      %146 = vector.shape_cast %145 : vector<8xf32> to vector<8x1xf32>
      %c0_70 = arith.constant 0 : index
      %c0_71 = arith.constant 0 : index
      %147 = vector.load %arg11[%c0_70, %c0_71] : memref<8x8xf32, #tpu.memory_space<vmem>>, vector<8x8xf32>
      %c0_72 = arith.constant 0 : index
      %c0_73 = arith.constant 0 : index
      %148 = vector.load %arg12[%c0_72, %c0_73] : memref<8x1xf32, #tpu.memory_space<vmem>>, vector<8x1xf32>
      %149 = vector.extract_strided_slice %147 {offsets = [0, 0], sizes = [8, 1], strides = [1, 1]} : vector<8x8xf32> to vector<8x1xf32>
      %150 = vector.extract_strided_slice %146 {offsets = [0, 0], sizes = [1, 1], strides = [1, 1]} : vector<8x1xf32> to vector<1x1xf32>
      %151 = vector.broadcast %150 : vector<1x1xf32> to vector<8x1xf32>
      %152 = arith.mulf %149, %151 : vector<8x1xf32>
      %153 = arith.addf %148, %152 : vector<8x1xf32>
      %154 = vector.extract_strided_slice %147 {offsets = [0, 1], sizes = [8, 1], strides = [1, 1]} : vector<8x8xf32> to vector<8x1xf32>
      %155 = vector.extract_strided_slice %146 {offsets = [1, 0], sizes = [1, 1], strides = [1, 1]} : vector<8x1xf32> to vector<1x1xf32>
      %156 = vector.broadcast %155 : vector<1x1xf32> to vector<8x1xf32>
      %157 = arith.mulf %154, %156 : vector<8x1xf32>
      %158 = arith.addf %153, %157 : vector<8x1xf32>
      %159 = vector.extract_strided_slice %147 {offsets = [0, 2], sizes = [8, 1], strides = [1, 1]} : vector<8x8xf32> to vector<8x1xf32>
      %160 = vector.extract_strided_slice %146 {offsets = [2, 0], sizes = [1, 1], strides = [1, 1]} : vector<8x1xf32> to vector<1x1xf32>
      %161 = vector.broadcast %160 : vector<1x1xf32> to vector<8x1xf32>
      %162 = arith.mulf %159, %161 : vector<8x1xf32>
      %163 = arith.addf %158, %162 : vector<8x1xf32>
      %164 = vector.extract_strided_slice %147 {offsets = [0, 3], sizes = [8, 1], strides = [1, 1]} : vector<8x8xf32> to vector<8x1xf32>
      %165 = vector.extract_strided_slice %146 {offsets = [3, 0], sizes = [1, 1], strides = [1, 1]} : vector<8x1xf32> to vector<1x1xf32>
      %166 = vector.broadcast %165 : vector<1x1xf32> to vector<8x1xf32>
      %167 = arith.mulf %164, %166 : vector<8x1xf32>
      %168 = arith.addf %163, %167 : vector<8x1xf32>
      %169 = vector.extract_strided_slice %147 {offsets = [0, 4], sizes = [8, 1], strides = [1, 1]} : vector<8x8xf32> to vector<8x1xf32>
      %170 = vector.extract_strided_slice %146 {offsets = [4, 0], sizes = [1, 1], strides = [1, 1]} : vector<8x1xf32> to vector<1x1xf32>
      %171 = vector.broadcast %170 : vector<1x1xf32> to vector<8x1xf32>
      %172 = arith.mulf %169, %171 : vector<8x1xf32>
      %173 = arith.addf %168, %172 : vector<8x1xf32>
      %174 = vector.extract_strided_slice %147 {offsets = [0, 5], sizes = [8, 1], strides = [1, 1]} : vector<8x8xf32> to vector<8x1xf32>
      %175 = vector.extract_strided_slice %146 {offsets = [5, 0], sizes = [1, 1], strides = [1, 1]} : vector<8x1xf32> to vector<1x1xf32>
      %176 = vector.broadcast %175 : vector<1x1xf32> to vector<8x1xf32>
      %177 = arith.mulf %174, %176 : vector<8x1xf32>
      %178 = arith.addf %173, %177 : vector<8x1xf32>
      %179 = vector.extract_strided_slice %147 {offsets = [0, 6], sizes = [8, 1], strides = [1, 1]} : vector<8x8xf32> to vector<8x1xf32>
      %180 = vector.extract_strided_slice %146 {offsets = [6, 0], sizes = [1, 1], strides = [1, 1]} : vector<8x1xf32> to vector<1x1xf32>
      %181 = vector.broadcast %180 : vector<1x1xf32> to vector<8x1xf32>
      %182 = arith.mulf %179, %181 : vector<8x1xf32>
      %183 = arith.addf %178, %182 : vector<8x1xf32>
      %184 = vector.extract_strided_slice %147 {offsets = [0, 7], sizes = [8, 1], strides = [1, 1]} : vector<8x8xf32> to vector<8x1xf32>
      %185 = vector.extract_strided_slice %146 {offsets = [7, 0], sizes = [1, 1], strides = [1, 1]} : vector<8x1xf32> to vector<1x1xf32>
      %186 = vector.broadcast %185 : vector<1x1xf32> to vector<8x1xf32>
      %187 = arith.mulf %184, %186 : vector<8x1xf32>
      %188 = arith.addf %183, %187 : vector<8x1xf32>
      %189 = vector.broadcast %188 : vector<8x1xf32> to vector<8x256xf32>
      %190 = arith.mulf %189, %143 : vector<8x256xf32>
      %cst_74 = arith.constant dense<0.000000e+00> : vector<256xf32>
      %191 = vector.multi_reduction <add>, %190, %cst_74 [0] : vector<8x256xf32> to vector<256xf32>
      %192 = vector.shape_cast %191 : vector<256xf32> to vector<1x256xf32>
      %cst_75 = arith.constant 0.353553385 : f32
      %193 = vector.broadcast %cst_75 : f32 to vector<1x256xf32>
      %194 = arith.mulf %192, %193 : vector<1x256xf32>
      %cst_76 = arith.constant dense<0xFF800000> : vector<1xf32>
      %195 = vector.multi_reduction <maximumf>, %194, %cst_76 [1] : vector<1x256xf32> to vector<1xf32>
      %196 = vector.shape_cast %195 : vector<1xf32> to vector<1x1xf32>
      %197 = vector.broadcast %196 : vector<1x1xf32> to vector<1x256xf32>
      %198 = arith.subf %194, %197 : vector<1x256xf32>
      %199 = math.exp %198 : vector<1x256xf32>
      %cst_77 = arith.constant dense<0.000000e+00> : vector<1xf32>
      %200 = vector.multi_reduction <add>, %199, %cst_77 [1] : vector<1x256xf32> to vector<1xf32>
      %201 = vector.shape_cast %200 : vector<1xf32> to vector<1x1xf32>
      %202 = tpu.reciprocal %201 {approx = true} : vector<1x1xf32> -> vector<1x1xf32>
      %203 = vector.broadcast %202 : vector<1x1xf32> to vector<1x256xf32>
      %204 = arith.mulf %199, %203 : vector<1x256xf32>
      %205 = vector.broadcast %204 : vector<1x256xf32> to vector<8x256xf32>
      %206 = arith.mulf %144, %205 : vector<8x256xf32>
      %cst_78 = arith.constant dense<0.000000e+00> : vector<8xf32>
      %207 = vector.multi_reduction <add>, %206, %cst_78 [1] : vector<8x256xf32> to vector<8xf32>
      %208 = vector.shape_cast %207 : vector<8xf32> to vector<8x1xf32>
      %c0_79 = arith.constant 0 : index
      %c0_80 = arith.constant 0 : index
      %209 = vector.load %arg19[%c0_79, %c0_80] : memref<1x2xf32, #tpu.memory_space<vmem>>, vector<1x1xf32>
      %210 = vector.broadcast %209 : vector<1x1xf32> to vector<8x1xf32>
      %211 = arith.addf %208, %210 : vector<8x1xf32>
      %c0_81 = arith.constant 0 : index
      %c1_82 = arith.constant 1 : index
      %212 = vector.load %arg19[%c0_81, %c1_82] : memref<1x2xf32, #tpu.memory_space<vmem>>, vector<1x1xf32>
      %213 = vector.broadcast %212 : vector<1x1xf32> to vector<8x1xf32>
      %214 = arith.addf %211, %213 : vector<8x1xf32>
      %c0_83 = arith.constant 0 : index
      %c0_84 = arith.constant 0 : index
      %215 = vector.load %arg15[%c0_83, %c0_84] : memref<8x9xf32, #tpu.memory_space<vmem>>, vector<8x9xf32>
      %c17_i32_85 = arith.constant 17 : i32
      %216 = tpu.dynamic_rotate %137 by %c17_i32_85 dim 1 : vector<8x256xf32>, i32 -> vector<8x256xf32>
      %217 = vector.extract_strided_slice %48 {offsets = [0, 0], sizes = [1, 256], strides = [1, 1]} : vector<9x256xf32> to vector<1x256xf32>
      %218 = vector.broadcast %217 : vector<1x256xf32> to vector<8x256xf32>
      %219 = arith.mulf %216, %218 : vector<8x256xf32>
      %c16_i32_86 = arith.constant 16 : i32
      %220 = tpu.dynamic_rotate %137 by %c16_i32_86 dim 1 : vector<8x256xf32>, i32 -> vector<8x256xf32>
      %221 = vector.extract_strided_slice %48 {offsets = [1, 0], sizes = [1, 256], strides = [1, 1]} : vector<9x256xf32> to vector<1x256xf32>
      %222 = vector.broadcast %221 : vector<1x256xf32> to vector<8x256xf32>
      %223 = arith.mulf %220, %222 : vector<8x256xf32>
      %c15_i32_87 = arith.constant 15 : i32
      %224 = tpu.dynamic_rotate %137 by %c15_i32_87 dim 1 : vector<8x256xf32>, i32 -> vector<8x256xf32>
      %225 = vector.extract_strided_slice %48 {offsets = [2, 0], sizes = [1, 256], strides = [1, 1]} : vector<9x256xf32> to vector<1x256xf32>
      %226 = vector.broadcast %225 : vector<1x256xf32> to vector<8x256xf32>
      %227 = arith.mulf %224, %226 : vector<8x256xf32>
      %c1_i32_88 = arith.constant 1 : i32
      %228 = tpu.dynamic_rotate %137 by %c1_i32_88 dim 1 : vector<8x256xf32>, i32 -> vector<8x256xf32>
      %229 = vector.extract_strided_slice %48 {offsets = [3, 0], sizes = [1, 256], strides = [1, 1]} : vector<9x256xf32> to vector<1x256xf32>
      %230 = vector.broadcast %229 : vector<1x256xf32> to vector<8x256xf32>
      %231 = arith.mulf %228, %230 : vector<8x256xf32>
      %232 = vector.extract_strided_slice %48 {offsets = [4, 0], sizes = [1, 256], strides = [1, 1]} : vector<9x256xf32> to vector<1x256xf32>
      %233 = vector.broadcast %232 : vector<1x256xf32> to vector<8x256xf32>
      %234 = arith.mulf %137, %233 : vector<8x256xf32>
      %c255_i32_89 = arith.constant 255 : i32
      %235 = tpu.dynamic_rotate %137 by %c255_i32_89 dim 1 : vector<8x256xf32>, i32 -> vector<8x256xf32>
      %236 = vector.extract_strided_slice %48 {offsets = [5, 0], sizes = [1, 256], strides = [1, 1]} : vector<9x256xf32> to vector<1x256xf32>
      %237 = vector.broadcast %236 : vector<1x256xf32> to vector<8x256xf32>
      %238 = arith.mulf %235, %237 : vector<8x256xf32>
      %c241_i32_90 = arith.constant 241 : i32
      %239 = tpu.dynamic_rotate %137 by %c241_i32_90 dim 1 : vector<8x256xf32>, i32 -> vector<8x256xf32>
      %240 = vector.extract_strided_slice %48 {offsets = [6, 0], sizes = [1, 256], strides = [1, 1]} : vector<9x256xf32> to vector<1x256xf32>
      %241 = vector.broadcast %240 : vector<1x256xf32> to vector<8x256xf32>
      %242 = arith.mulf %239, %241 : vector<8x256xf32>
      %c240_i32_91 = arith.constant 240 : i32
      %243 = tpu.dynamic_rotate %137 by %c240_i32_91 dim 1 : vector<8x256xf32>, i32 -> vector<8x256xf32>
      %244 = vector.extract_strided_slice %48 {offsets = [7, 0], sizes = [1, 256], strides = [1, 1]} : vector<9x256xf32> to vector<1x256xf32>
      %245 = vector.broadcast %244 : vector<1x256xf32> to vector<8x256xf32>
      %246 = arith.mulf %243, %245 : vector<8x256xf32>
      %c239_i32_92 = arith.constant 239 : i32
      %247 = tpu.dynamic_rotate %137 by %c239_i32_92 dim 1 : vector<8x256xf32>, i32 -> vector<8x256xf32>
      %248 = vector.extract_strided_slice %48 {offsets = [8, 0], sizes = [1, 256], strides = [1, 1]} : vector<9x256xf32> to vector<1x256xf32>
      %249 = vector.broadcast %248 : vector<1x256xf32> to vector<8x256xf32>
      %250 = arith.mulf %247, %249 : vector<8x256xf32>
      %c0_93 = arith.constant 0 : index
      %c0_94 = arith.constant 0 : index
      %251 = vector.load %arg16[%c0_93, %c0_94] : memref<8x1xf32, #tpu.memory_space<vmem>>, vector<8x1xf32>
      %252 = vector.extract_strided_slice %215 {offsets = [0, 0], sizes = [8, 1], strides = [1, 1]} : vector<8x9xf32> to vector<8x1xf32>
      %253 = vector.broadcast %252 : vector<8x1xf32> to vector<8x256xf32>
      %254 = arith.mulf %253, %219 : vector<8x256xf32>
      %255 = vector.broadcast %251 : vector<8x1xf32> to vector<8x256xf32>
      %256 = arith.addf %255, %254 : vector<8x256xf32>
      %257 = vector.extract_strided_slice %215 {offsets = [0, 1], sizes = [8, 1], strides = [1, 1]} : vector<8x9xf32> to vector<8x1xf32>
      %258 = vector.broadcast %257 : vector<8x1xf32> to vector<8x256xf32>
      %259 = arith.mulf %258, %223 : vector<8x256xf32>
      %260 = arith.addf %256, %259 : vector<8x256xf32>
      %261 = vector.extract_strided_slice %215 {offsets = [0, 2], sizes = [8, 1], strides = [1, 1]} : vector<8x9xf32> to vector<8x1xf32>
      %262 = vector.broadcast %261 : vector<8x1xf32> to vector<8x256xf32>
      %263 = arith.mulf %262, %227 : vector<8x256xf32>
      %264 = arith.addf %260, %263 : vector<8x256xf32>
      %265 = vector.extract_strided_slice %215 {offsets = [0, 3], sizes = [8, 1], strides = [1, 1]} : vector<8x9xf32> to vector<8x1xf32>
      %266 = vector.broadcast %265 : vector<8x1xf32> to vector<8x256xf32>
      %267 = arith.mulf %266, %231 : vector<8x256xf32>
      %268 = arith.addf %264, %267 : vector<8x256xf32>
      %269 = vector.extract_strided_slice %215 {offsets = [0, 4], sizes = [8, 1], strides = [1, 1]} : vector<8x9xf32> to vector<8x1xf32>
      %270 = vector.broadcast %269 : vector<8x1xf32> to vector<8x256xf32>
      %271 = arith.mulf %270, %234 : vector<8x256xf32>
      %272 = arith.addf %268, %271 : vector<8x256xf32>
      %273 = vector.extract_strided_slice %215 {offsets = [0, 5], sizes = [8, 1], strides = [1, 1]} : vector<8x9xf32> to vector<8x1xf32>
      %274 = vector.broadcast %273 : vector<8x1xf32> to vector<8x256xf32>
      %275 = arith.mulf %274, %238 : vector<8x256xf32>
      %276 = arith.addf %272, %275 : vector<8x256xf32>
      %277 = vector.extract_strided_slice %215 {offsets = [0, 6], sizes = [8, 1], strides = [1, 1]} : vector<8x9xf32> to vector<8x1xf32>
      %278 = vector.broadcast %277 : vector<8x1xf32> to vector<8x256xf32>
      %279 = arith.mulf %278, %242 : vector<8x256xf32>
      %280 = arith.addf %276, %279 : vector<8x256xf32>
      %281 = vector.extract_strided_slice %215 {offsets = [0, 7], sizes = [8, 1], strides = [1, 1]} : vector<8x9xf32> to vector<8x1xf32>
      %282 = vector.broadcast %281 : vector<8x1xf32> to vector<8x256xf32>
      %283 = arith.mulf %282, %246 : vector<8x256xf32>
      %284 = arith.addf %280, %283 : vector<8x256xf32>
      %285 = vector.extract_strided_slice %215 {offsets = [0, 8], sizes = [8, 1], strides = [1, 1]} : vector<8x9xf32> to vector<8x1xf32>
      %286 = vector.broadcast %285 : vector<8x1xf32> to vector<8x256xf32>
      %287 = arith.mulf %286, %250 : vector<8x256xf32>
      %288 = arith.addf %284, %287 : vector<8x256xf32>
      %289 = vector.broadcast %214 : vector<8x1xf32> to vector<8x256xf32>
      %290 = arith.addf %288, %289 : vector<8x256xf32>
      %291 = arith.addf %290, %47 : vector<8x256xf32>
      %c0_95 = arith.constant 0 : index
      %c0_96 = arith.constant 0 : index
      %292 = vector.load %arg17[%c0_95, %c0_96] : memref<8x8xf32, #tpu.memory_space<vmem>>, vector<8x8xf32>
      %cst_97 = arith.constant dense<0.000000e+00> : vector<8x256xf32>
      %293 = tpu.matmul %292, %291, %cst_97 {dimension_numbers = #tpu.dot_dimension_numbers<[1], [0], [0], [1], [0, 0, 1, 1], [], []>} : vector<8x8xf32>, vector<8x256xf32>, vector<8x256xf32> -> vector<8x256xf32>
      %c0_98 = arith.constant 0 : index
      %c0_99 = arith.constant 0 : index
      %294 = vector.load %arg18[%c0_98, %c0_99] : memref<8x1xf32, #tpu.memory_space<vmem>>, vector<8x1xf32>
      %295 = vector.broadcast %294 : vector<8x1xf32> to vector<8x256xf32>
      %296 = arith.addf %293, %295 : vector<8x256xf32>
      %297 = vector.extract_strided_slice %296 {offsets = [0, 0], sizes = [8, 16], strides = [1, 1]} : vector<8x256xf32> to vector<8x16xf32>
      %c0_100 = arith.constant 0 : index
      %c0_101 = arith.constant 0 : index
      %298 = vector.load %arg23[%c0_100, %c0_101] : memref<128x16xf32, #tpu.memory_space<vmem>>, vector<8x16xf32>
      tpu.vector_store %arg23[%c0_100, %c0_101], %297 {strides = array<i32>} : memref<128x16xf32, #tpu.memory_space<vmem>>, vector<8x16xf32>,
      %299 = vector.extract_strided_slice %296 {offsets = [0, 16], sizes = [8, 16], strides = [1, 1]} : vector<8x256xf32> to vector<8x16xf32>
      %c8 = arith.constant 8 : index
      %c0_102 = arith.constant 0 : index
      %300 = vector.load %arg23[%c8, %c0_102] : memref<128x16xf32, #tpu.memory_space<vmem>>, vector<8x16xf32>
      tpu.vector_store %arg23[%c8, %c0_102], %299 {strides = array<i32>} : memref<128x16xf32, #tpu.memory_space<vmem>>, vector<8x16xf32>,
      %301 = vector.extract_strided_slice %296 {offsets = [0, 32], sizes = [8, 16], strides = [1, 1]} : vector<8x256xf32> to vector<8x16xf32>
      %c16 = arith.constant 16 : index
      %c0_103 = arith.constant 0 : index
      %302 = vector.load %arg23[%c16, %c0_103] : memref<128x16xf32, #tpu.memory_space<vmem>>, vector<8x16xf32>
      tpu.vector_store %arg23[%c16, %c0_103], %301 {strides = array<i32>} : memref<128x16xf32, #tpu.memory_space<vmem>>, vector<8x16xf32>,
      %303 = vector.extract_strided_slice %296 {offsets = [0, 48], sizes = [8, 16], strides = [1, 1]} : vector<8x256xf32> to vector<8x16xf32>
      %c24 = arith.constant 24 : index
      %c0_104 = arith.constant 0 : index
      %304 = vector.load %arg23[%c24, %c0_104] : memref<128x16xf32, #tpu.memory_space<vmem>>, vector<8x16xf32>
      tpu.vector_store %arg23[%c24, %c0_104], %303 {strides = array<i32>} : memref<128x16xf32, #tpu.memory_space<vmem>>, vector<8x16xf32>,
      %305 = vector.extract_strided_slice %296 {offsets = [0, 64], sizes = [8, 16], strides = [1, 1]} : vector<8x256xf32> to vector<8x16xf32>
      %c32 = arith.constant 32 : index
      %c0_105 = arith.constant 0 : index
      %306 = vector.load %arg23[%c32, %c0_105] : memref<128x16xf32, #tpu.memory_space<vmem>>, vector<8x16xf32>
      tpu.vector_store %arg23[%c32, %c0_105], %305 {strides = array<i32>} : memref<128x16xf32, #tpu.memory_space<vmem>>, vector<8x16xf32>,
      %307 = vector.extract_strided_slice %296 {offsets = [0, 80], sizes = [8, 16], strides = [1, 1]} : vector<8x256xf32> to vector<8x16xf32>
      %c40 = arith.constant 40 : index
      %c0_106 = arith.constant 0 : index
      %308 = vector.load %arg23[%c40, %c0_106] : memref<128x16xf32, #tpu.memory_space<vmem>>, vector<8x16xf32>
      tpu.vector_store %arg23[%c40, %c0_106], %307 {strides = array<i32>} : memref<128x16xf32, #tpu.memory_space<vmem>>, vector<8x16xf32>,
      %309 = vector.extract_strided_slice %296 {offsets = [0, 96], sizes = [8, 16], strides = [1, 1]} : vector<8x256xf32> to vector<8x16xf32>
      %c48 = arith.constant 48 : index
      %c0_107 = arith.constant 0 : index
      %310 = vector.load %arg23[%c48, %c0_107] : memref<128x16xf32, #tpu.memory_space<vmem>>, vector<8x16xf32>
      tpu.vector_store %arg23[%c48, %c0_107], %309 {strides = array<i32>} : memref<128x16xf32, #tpu.memory_space<vmem>>, vector<8x16xf32>,
      %311 = vector.extract_strided_slice %296 {offsets = [0, 112], sizes = [8, 16], strides = [1, 1]} : vector<8x256xf32> to vector<8x16xf32>
      %c56 = arith.constant 56 : index
      %c0_108 = arith.constant 0 : index
      %312 = vector.load %arg23[%c56, %c0_108] : memref<128x16xf32, #tpu.memory_space<vmem>>, vector<8x16xf32>
      tpu.vector_store %arg23[%c56, %c0_108], %311 {strides = array<i32>} : memref<128x16xf32, #tpu.memory_space<vmem>>, vector<8x16xf32>,
      %313 = vector.extract_strided_slice %296 {offsets = [0, 128], sizes = [8, 16], strides = [1, 1]} : vector<8x256xf32> to vector<8x16xf32>
      %c64 = arith.constant 64 : index
      %c0_109 = arith.constant 0 : index
      %314 = vector.load %arg23[%c64, %c0_109] : memref<128x16xf32, #tpu.memory_space<vmem>>, vector<8x16xf32>
      tpu.vector_store %arg23[%c64, %c0_109], %313 {strides = array<i32>} : memref<128x16xf32, #tpu.memory_space<vmem>>, vector<8x16xf32>,
      %315 = vector.extract_strided_slice %296 {offsets = [0, 144], sizes = [8, 16], strides = [1, 1]} : vector<8x256xf32> to vector<8x16xf32>
      %c72 = arith.constant 72 : index
      %c0_110 = arith.constant 0 : index
      %316 = vector.load %arg23[%c72, %c0_110] : memref<128x16xf32, #tpu.memory_space<vmem>>, vector<8x16xf32>
      tpu.vector_store %arg23[%c72, %c0_110], %315 {strides = array<i32>} : memref<128x16xf32, #tpu.memory_space<vmem>>, vector<8x16xf32>,
      %317 = vector.extract_strided_slice %296 {offsets = [0, 160], sizes = [8, 16], strides = [1, 1]} : vector<8x256xf32> to vector<8x16xf32>
      %c80 = arith.constant 80 : index
      %c0_111 = arith.constant 0 : index
      %318 = vector.load %arg23[%c80, %c0_111] : memref<128x16xf32, #tpu.memory_space<vmem>>, vector<8x16xf32>
      tpu.vector_store %arg23[%c80, %c0_111], %317 {strides = array<i32>} : memref<128x16xf32, #tpu.memory_space<vmem>>, vector<8x16xf32>,
      %319 = vector.extract_strided_slice %296 {offsets = [0, 176], sizes = [8, 16], strides = [1, 1]} : vector<8x256xf32> to vector<8x16xf32>
      %c88 = arith.constant 88 : index
      %c0_112 = arith.constant 0 : index
      %320 = vector.load %arg23[%c88, %c0_112] : memref<128x16xf32, #tpu.memory_space<vmem>>, vector<8x16xf32>
      tpu.vector_store %arg23[%c88, %c0_112], %319 {strides = array<i32>} : memref<128x16xf32, #tpu.memory_space<vmem>>, vector<8x16xf32>,
      %321 = vector.extract_strided_slice %296 {offsets = [0, 192], sizes = [8, 16], strides = [1, 1]} : vector<8x256xf32> to vector<8x16xf32>
      %c96 = arith.constant 96 : index
      %c0_113 = arith.constant 0 : index
      %322 = vector.load %arg23[%c96, %c0_113] : memref<128x16xf32, #tpu.memory_space<vmem>>, vector<8x16xf32>
      tpu.vector_store %arg23[%c96, %c0_113], %321 {strides = array<i32>} : memref<128x16xf32, #tpu.memory_space<vmem>>, vector<8x16xf32>,
      %323 = vector.extract_strided_slice %296 {offsets = [0, 208], sizes = [8, 16], strides = [1, 1]} : vector<8x256xf32> to vector<8x16xf32>
      %c104 = arith.constant 104 : index
      %c0_114 = arith.constant 0 : index
      %324 = vector.load %arg23[%c104, %c0_114] : memref<128x16xf32, #tpu.memory_space<vmem>>, vector<8x16xf32>
      tpu.vector_store %arg23[%c104, %c0_114], %323 {strides = array<i32>} : memref<128x16xf32, #tpu.memory_space<vmem>>, vector<8x16xf32>,
      %325 = vector.extract_strided_slice %296 {offsets = [0, 224], sizes = [8, 16], strides = [1, 1]} : vector<8x256xf32> to vector<8x16xf32>
      %c112 = arith.constant 112 : index
      %c0_115 = arith.constant 0 : index
      %326 = vector.load %arg23[%c112, %c0_115] : memref<128x16xf32, #tpu.memory_space<vmem>>, vector<8x16xf32>
      tpu.vector_store %arg23[%c112, %c0_115], %325 {strides = array<i32>} : memref<128x16xf32, #tpu.memory_space<vmem>>, vector<8x16xf32>,
      %327 = vector.extract_strided_slice %296 {offsets = [0, 240], sizes = [8, 16], strides = [1, 1]} : vector<8x256xf32> to vector<8x16xf32>
      %c120 = arith.constant 120 : index
      %c0_116 = arith.constant 0 : index
      %328 = vector.load %arg23[%c120, %c0_116] : memref<128x16xf32, #tpu.memory_space<vmem>>, vector<8x16xf32>
      tpu.vector_store %arg23[%c120, %c0_116], %327 {strides = array<i32>} : memref<128x16xf32, #tpu.memory_space<vmem>>, vector<8x16xf32>,
    } else {
    }
    %c0 = arith.constant 0 : index
    %c0_1 = arith.constant 0 : index
    %c0_2 = arith.constant 0 : index
    %3 = vector.load %arg21[%c0, %c0_1, %c0_2] : memref<1x512x128xf32, #tpu.memory_space<vmem>>, vector<1x512x128xf32>
    %4 = vector.shape_cast %3 : vector<1x512x128xf32> to vector<512x128xf32>
    %c0_3 = arith.constant 0 : index
    %c0_4 = arith.constant 0 : index
    %5 = vector.load %arg23[%c0_3, %c0_4] : memref<128x16xf32, #tpu.memory_space<vmem>>, vector<128x16xf32>
    %cst = arith.constant dense<0.000000e+00> : vector<512x16xf32>
    %6 = tpu.matmul %4, %5, %cst {dimension_numbers = #tpu.dot_dimension_numbers<[1], [0], [0], [1], [0, 0, 1, 1], [], []>} : vector<512x128xf32>, vector<128x16xf32>, vector<512x16xf32> -> vector<512x16xf32>
    %c0_5 = arith.constant 0 : index
    %c0_6 = arith.constant 0 : index
    %7 = vector.load %arg20[%c0_5, %c0_6] : memref<16x256xf32, #tpu.memory_space<vmem>>, vector<16x256xf32>
    %cst_7 = arith.constant dense<0.000000e+00> : vector<512x256xf32>
    %8 = tpu.matmul %6, %7, %cst_7 {dimension_numbers = #tpu.dot_dimension_numbers<[1], [0], [0], [1], [0, 0, 1, 1], [], []>} : vector<512x16xf32>, vector<16x256xf32>, vector<512x256xf32> -> vector<512x256xf32>
    %9 = vector.extract_strided_slice %8 {offsets = [0, 0], sizes = [64, 256], strides = [1, 1]} : vector<512x256xf32> to vector<64x256xf32>
    %c0_8 = arith.constant 0 : index
    %c0_9 = arith.constant 0 : index
    %c0_10 = arith.constant 0 : index
    %c0_11 = arith.constant 0 : index
    %10 = vector.load %arg22[%c0_8, %c0_9, %c0_10, %c0_11] : memref<1x8x64x256xf32, #tpu.memory_space<vmem>>, vector<1x1x64x256xf32>
    %11 = vector.shape_cast %10 : vector<1x1x64x256xf32> to vector<64x256xf32>
    %12 = vector.shape_cast %9 : vector<64x256xf32> to vector<1x1x64x256xf32>
    tpu.vector_store %arg22[%c0_8, %c0_9, %c0_10, %c0_11], %12 {strides = array<i32>} : memref<1x8x64x256xf32, #tpu.memory_space<vmem>>, vector<1x1x64x256xf32>,
    %13 = vector.extract_strided_slice %8 {offsets = [64, 0], sizes = [64, 256], strides = [1, 1]} : vector<512x256xf32> to vector<64x256xf32>
    %c0_12 = arith.constant 0 : index
    %c1 = arith.constant 1 : index
    %c0_13 = arith.constant 0 : index
    %c0_14 = arith.constant 0 : index
    %14 = vector.load %arg22[%c0_12, %c1, %c0_13, %c0_14] : memref<1x8x64x256xf32, #tpu.memory_space<vmem>>, vector<1x1x64x256xf32>
    %15 = vector.shape_cast %14 : vector<1x1x64x256xf32> to vector<64x256xf32>
    %16 = vector.shape_cast %13 : vector<64x256xf32> to vector<1x1x64x256xf32>
    tpu.vector_store %arg22[%c0_12, %c1, %c0_13, %c0_14], %16 {strides = array<i32>} : memref<1x8x64x256xf32, #tpu.memory_space<vmem>>, vector<1x1x64x256xf32>,
    %17 = vector.extract_strided_slice %8 {offsets = [128, 0], sizes = [64, 256], strides = [1, 1]} : vector<512x256xf32> to vector<64x256xf32>
    %c0_15 = arith.constant 0 : index
    %c2 = arith.constant 2 : index
    %c0_16 = arith.constant 0 : index
    %c0_17 = arith.constant 0 : index
    %18 = vector.load %arg22[%c0_15, %c2, %c0_16, %c0_17] : memref<1x8x64x256xf32, #tpu.memory_space<vmem>>, vector<1x1x64x256xf32>
    %19 = vector.shape_cast %18 : vector<1x1x64x256xf32> to vector<64x256xf32>
    %20 = vector.shape_cast %17 : vector<64x256xf32> to vector<1x1x64x256xf32>
    tpu.vector_store %arg22[%c0_15, %c2, %c0_16, %c0_17], %20 {strides = array<i32>} : memref<1x8x64x256xf32, #tpu.memory_space<vmem>>, vector<1x1x64x256xf32>,
    %21 = vector.extract_strided_slice %8 {offsets = [192, 0], sizes = [64, 256], strides = [1, 1]} : vector<512x256xf32> to vector<64x256xf32>
    %c0_18 = arith.constant 0 : index
    %c3 = arith.constant 3 : index
    %c0_19 = arith.constant 0 : index
    %c0_20 = arith.constant 0 : index
    %22 = vector.load %arg22[%c0_18, %c3, %c0_19, %c0_20] : memref<1x8x64x256xf32, #tpu.memory_space<vmem>>, vector<1x1x64x256xf32>
    %23 = vector.shape_cast %22 : vector<1x1x64x256xf32> to vector<64x256xf32>
    %24 = vector.shape_cast %21 : vector<64x256xf32> to vector<1x1x64x256xf32>
    tpu.vector_store %arg22[%c0_18, %c3, %c0_19, %c0_20], %24 {strides = array<i32>} : memref<1x8x64x256xf32, #tpu.memory_space<vmem>>, vector<1x1x64x256xf32>,
    %25 = vector.extract_strided_slice %8 {offsets = [256, 0], sizes = [64, 256], strides = [1, 1]} : vector<512x256xf32> to vector<64x256xf32>
    %c0_21 = arith.constant 0 : index
    %c4 = arith.constant 4 : index
    %c0_22 = arith.constant 0 : index
    %c0_23 = arith.constant 0 : index
    %26 = vector.load %arg22[%c0_21, %c4, %c0_22, %c0_23] : memref<1x8x64x256xf32, #tpu.memory_space<vmem>>, vector<1x1x64x256xf32>
    %27 = vector.shape_cast %26 : vector<1x1x64x256xf32> to vector<64x256xf32>
    %28 = vector.shape_cast %25 : vector<64x256xf32> to vector<1x1x64x256xf32>
    tpu.vector_store %arg22[%c0_21, %c4, %c0_22, %c0_23], %28 {strides = array<i32>} : memref<1x8x64x256xf32, #tpu.memory_space<vmem>>, vector<1x1x64x256xf32>,
    %29 = vector.extract_strided_slice %8 {offsets = [320, 0], sizes = [64, 256], strides = [1, 1]} : vector<512x256xf32> to vector<64x256xf32>
    %c0_24 = arith.constant 0 : index
    %c5 = arith.constant 5 : index
    %c0_25 = arith.constant 0 : index
    %c0_26 = arith.constant 0 : index
    %30 = vector.load %arg22[%c0_24, %c5, %c0_25, %c0_26] : memref<1x8x64x256xf32, #tpu.memory_space<vmem>>, vector<1x1x64x256xf32>
    %31 = vector.shape_cast %30 : vector<1x1x64x256xf32> to vector<64x256xf32>
    %32 = vector.shape_cast %29 : vector<64x256xf32> to vector<1x1x64x256xf32>
    tpu.vector_store %arg22[%c0_24, %c5, %c0_25, %c0_26], %32 {strides = array<i32>} : memref<1x8x64x256xf32, #tpu.memory_space<vmem>>, vector<1x1x64x256xf32>,
    %33 = vector.extract_strided_slice %8 {offsets = [384, 0], sizes = [64, 256], strides = [1, 1]} : vector<512x256xf32> to vector<64x256xf32>
    %c0_27 = arith.constant 0 : index
    %c6 = arith.constant 6 : index
    %c0_28 = arith.constant 0 : index
    %c0_29 = arith.constant 0 : index
    %34 = vector.load %arg22[%c0_27, %c6, %c0_28, %c0_29] : memref<1x8x64x256xf32, #tpu.memory_space<vmem>>, vector<1x1x64x256xf32>
    %35 = vector.shape_cast %34 : vector<1x1x64x256xf32> to vector<64x256xf32>
    %36 = vector.shape_cast %33 : vector<64x256xf32> to vector<1x1x64x256xf32>
    tpu.vector_store %arg22[%c0_27, %c6, %c0_28, %c0_29], %36 {strides = array<i32>} : memref<1x8x64x256xf32, #tpu.memory_space<vmem>>, vector<1x1x64x256xf32>,
    %37 = vector.extract_strided_slice %8 {offsets = [448, 0], sizes = [64, 256], strides = [1, 1]} : vector<512x256xf32> to vector<64x256xf32>
    %c0_30 = arith.constant 0 : index
    %c7 = arith.constant 7 : index
    %c0_31 = arith.constant 0 : index
    %c0_32 = arith.constant 0 : index
    %38 = vector.load %arg22[%c0_30, %c7, %c0_31, %c0_32] : memref<1x8x64x256xf32, #tpu.memory_space<vmem>>, vector<1x1x64x256xf32>
    %39 = vector.shape_cast %38 : vector<1x1x64x256xf32> to vector<64x256xf32>
    %40 = vector.shape_cast %37 : vector<64x256xf32> to vector<1x1x64x256xf32>
    tpu.vector_store %arg22[%c0_30, %c7, %c0_31, %c0_32], %40 {strides = array<i32>} : memref<1x8x64x256xf32, #tpu.memory_space<vmem>>, vector<1x1x64x256xf32>,
    return
  }
  func.func @transform_0(%arg0: i32, %arg1: i32) -> (i32, i32, i32) {
    %c0_i32 = arith.constant 0 : i32
    %c0_i32_0 = arith.constant 0 : i32
    %c0_i32_1 = arith.constant 0 : i32
    return %arg0, %c0_i32, %c0_i32_0 : i32, i32, i32
  }
  func.func @transform_1(%arg0: i32, %arg1: i32) -> (i32, i32, i32) {
    %c0_i32 = arith.constant 0 : i32
    %c0_i32_0 = arith.constant 0 : i32
    %c0_i32_1 = arith.constant 0 : i32
    return %arg0, %c0_i32, %c0_i32_0 : i32, i32, i32
  }
  func.func @transform_2(%arg0: i32, %arg1: i32) -> (i32, i32) {
    %c0_i32 = arith.constant 0 : i32
    %c0_i32_0 = arith.constant 0 : i32
    %c0_i32_1 = arith.constant 0 : i32
    return %c0_i32, %c0_i32_0 : i32, i32
  }
  func.func @transform_3(%arg0: i32, %arg1: i32) -> (i32, i32) {
    %c0_i32 = arith.constant 0 : i32
    %c0_i32_0 = arith.constant 0 : i32
    %c0_i32_1 = arith.constant 0 : i32
    return %c0_i32, %c0_i32_0 : i32, i32
  }
  func.func @transform_4(%arg0: i32, %arg1: i32) -> (i32, i32) {
    %c0_i32 = arith.constant 0 : i32
    %c0_i32_0 = arith.constant 0 : i32
    %c0_i32_1 = arith.constant 0 : i32
    return %c0_i32, %c0_i32_0 : i32, i32
  }
  func.func @transform_5(%arg0: i32, %arg1: i32) -> (i32, i32) {
    %c0_i32 = arith.constant 0 : i32
    %c0_i32_0 = arith.constant 0 : i32
    %c0_i32_1 = arith.constant 0 : i32
    return %c0_i32, %c0_i32_0 : i32, i32
  }
  func.func @transform_6(%arg0: i32, %arg1: i32) -> (i32, i32) {
    %c0_i32 = arith.constant 0 : i32
    %c0_i32_0 = arith.constant 0 : i32
    %c0_i32_1 = arith.constant 0 : i32
    return %c0_i32, %c0_i32_0 : i32, i32
  }
  func.func @transform_7(%arg0: i32, %arg1: i32) -> (i32, i32) {
    %c0_i32 = arith.constant 0 : i32
    %c0_i32_0 = arith.constant 0 : i32
    %c0_i32_1 = arith.constant 0 : i32
    return %c0_i32, %c0_i32_0 : i32, i32
  }
  func.func @transform_8(%arg0: i32, %arg1: i32) -> (i32, i32) {
    %c0_i32 = arith.constant 0 : i32
    %c0_i32_0 = arith.constant 0 : i32
    %c0_i32_1 = arith.constant 0 : i32
    return %c0_i32, %c0_i32_0 : i32, i32
  }
  func.func @transform_9(%arg0: i32, %arg1: i32) -> (i32, i32) {
    %c0_i32 = arith.constant 0 : i32
    %c0_i32_0 = arith.constant 0 : i32
    %c0_i32_1 = arith.constant 0 : i32
    return %c0_i32, %c0_i32_0 : i32, i32
  }
  func.func @transform_10(%arg0: i32, %arg1: i32) -> (i32, i32) {
    %c0_i32 = arith.constant 0 : i32
    %c0_i32_0 = arith.constant 0 : i32
    %c0_i32_1 = arith.constant 0 : i32
    return %c0_i32, %c0_i32_0 : i32, i32
  }
  func.func @transform_11(%arg0: i32, %arg1: i32) -> (i32, i32) {
    %c0_i32 = arith.constant 0 : i32
    %c0_i32_0 = arith.constant 0 : i32
    %c0_i32_1 = arith.constant 0 : i32
    return %c0_i32, %c0_i32_0 : i32, i32
  }
  func.func @transform_12(%arg0: i32, %arg1: i32) -> (i32, i32) {
    %c0_i32 = arith.constant 0 : i32
    %c0_i32_0 = arith.constant 0 : i32
    %c0_i32_1 = arith.constant 0 : i32
    return %c0_i32, %c0_i32_0 : i32, i32
  }
  func.func @transform_13(%arg0: i32, %arg1: i32) -> (i32, i32) {
    %c0_i32 = arith.constant 0 : i32
    %c0_i32_0 = arith.constant 0 : i32
    %c0_i32_1 = arith.constant 0 : i32
    return %c0_i32, %c0_i32_0 : i32, i32
  }
  func.func @transform_14(%arg0: i32, %arg1: i32) -> (i32, i32) {
    %c0_i32 = arith.constant 0 : i32
    %c0_i32_0 = arith.constant 0 : i32
    %c0_i32_1 = arith.constant 0 : i32
    return %c0_i32, %c0_i32_0 : i32, i32
  }
  func.func @transform_15(%arg0: i32, %arg1: i32) -> (i32, i32) {
    %c0_i32 = arith.constant 0 : i32
    %c0_i32_0 = arith.constant 0 : i32
    %c0_i32_1 = arith.constant 0 : i32
    return %c0_i32, %c0_i32_0 : i32, i32
  }
  func.func @transform_16(%arg0: i32, %arg1: i32) -> (i32, i32) {
    %c0_i32 = arith.constant 0 : i32
    %c0_i32_0 = arith.constant 0 : i32
    %c0_i32_1 = arith.constant 0 : i32
    return %c0_i32, %c0_i32_0 : i32, i32
  }
  func.func @transform_17(%arg0: i32, %arg1: i32) -> (i32, i32) {
    %c0_i32 = arith.constant 0 : i32
    %c0_i32_0 = arith.constant 0 : i32
    %c0_i32_1 = arith.constant 0 : i32
    return %c0_i32, %c0_i32_0 : i32, i32
  }
  func.func @transform_18(%arg0: i32, %arg1: i32) -> (i32, i32) {
    %c0_i32 = arith.constant 0 : i32
    %c0_i32_0 = arith.constant 0 : i32
    %c0_i32_1 = arith.constant 0 : i32
    return %c0_i32, %c0_i32_0 : i32, i32
  }
  func.func @transform_19(%arg0: i32, %arg1: i32) -> (i32, i32, i32) {
    %c0_i32 = arith.constant 0 : i32
    %c0_i32_0 = arith.constant 0 : i32
    %c0_i32_1 = arith.constant 0 : i32
    return %arg1, %c0_i32, %c0_i32_0 : i32, i32, i32
  }
  func.func @transform_20(%arg0: i32, %arg1: i32) -> (i32, i32, i32, i32) {
    %c0_i32 = arith.constant 0 : i32
    %c0_i32_0 = arith.constant 0 : i32
    %c0_i32_1 = arith.constant 0 : i32
    return %arg0, %c0_i32, %arg1, %c0_i32_0 : i32, i32, i32, i32
  }
}

</mosaic_0001>

<llo_original>
// kernel: _lambda_.1
$region0: #{_lambda_.1}
  #allocation0 [shape = 'u32[]', space=smem, size = 0x4, offset = 0x4, fixed_abs, tag = 'smem constant byte address 0x4 - core index']
  #allocation1 [shape = 'u32[144,128]{1,0:T(1,128)}', space=vmem, size = 0x12000, scoped, tag = 'internal scratch']
  #allocation2 [shape = 'f32[128,16]{1,0:T(8,128)}', space=vmem, size = 0x10000, scoped, tag = 'scratch operand']
  #allocation31 [shape = 's32[]', space=sflag, size = 0x4, offset = 0, fixed_abs, tag = 'sflag constant byte address 0x0 - dummy sync flag']
  %s0 = inlined_call_operand.vmem [shape: f32[2,8,256], index: 0, kind: input, shape index: {}]
  %s1 = inlined_call_operand.vmem [shape: f32[2,8,256], index: 1, kind: input, shape index: {}]
  %s2 = inlined_call_operand.hbm [shape: f32[9,256], index: 2, kind: input, shape index: {}]
  %s3 = inlined_call_operand.hbm [shape: f32[8,1], index: 3, kind: input, shape index: {}]
  %s4 = inlined_call_operand.hbm [shape: f32[8,1], index: 4, kind: input, shape index: {}]
  %s5 = inlined_call_operand.hbm [shape: f32[8,144], index: 5, kind: input, shape index: {}]
  %s6 = inlined_call_operand.hbm [shape: f32[8,1], index: 6, kind: input, shape index: {}]
  %s7 = inlined_call_operand.hbm [shape: f32[8,72], index: 7, kind: input, shape index: {}]
  %s8 = inlined_call_operand.hbm [shape: f32[8,1], index: 8, kind: input, shape index: {}]
  %s9 = inlined_call_operand.hbm [shape: f32[8,8], index: 9, kind: input, shape index: {}]
  %s10 = inlined_call_operand.hbm [shape: f32[8,1], index: 10, kind: input, shape index: {}]
  %s11 = inlined_call_operand.hbm [shape: f32[16,8], index: 11, kind: input, shape index: {}]
  %s12 = inlined_call_operand.hbm [shape: f32[16,1], index: 12, kind: input, shape index: {}]
  %s13 = inlined_call_operand.hbm [shape: f32[8,9], index: 13, kind: input, shape index: {}]
  %s14 = inlined_call_operand.hbm [shape: f32[8,1], index: 14, kind: input, shape index: {}]
  %s15 = inlined_call_operand.hbm [shape: f32[8,8], index: 15, kind: input, shape index: {}]
  %s16 = inlined_call_operand.hbm [shape: f32[8,1], index: 16, kind: input, shape index: {}]
  %s17 = inlined_call_operand.vmem [shape: f32[1,2], index: 17, kind: input, shape index: {}]
  %s18 = inlined_call_operand.hbm [shape: f32[16,256], index: 18, kind: input, shape index: {}]
  %s19 = inlined_call_operand.hbm [shape: f32[4,512,128], index: 19, kind: input, shape index: {}]
  %s20 = inlined_call_operand.hbm [shape: f32[2,8,256,256], index: 20, kind: output, shape index: {}]
  %s21 = sld [smem:[#allocation0]]
  $region185: #{_lambda_.1} parent=0
    _
  %s23 = ssub.s32 1, %s21
  %s24 = scalar_select 0, %s23, %s21
  $region1: #{_lambda_.1} parent=0
    #allocation3 [shape = 'u8[16384]{0}', space=vmem, size = 0x4000, scoped, tag = 'input window, operand 2, single buffered']
    #allocation4 [shape = 's32[2]{0}', space=sflag, size = 0x8, scoped, tag = 'scoped memory for _lambda_.1']
    #allocation5 [shape = 's32[2]{0}', space=sflag, size = 0x8, scoped, tag = 'scoped memory for _lambda_.1']
    #allocation6 [shape = 'u8[4096]{0}', space=vmem, size = 0x1000, scoped, tag = 'input window, operand 3, single buffered']
    #allocation7 [shape = 's32[1]{0}', space=sflag, size = 0x4, scoped, tag = 'scoped memory for _lambda_.1']
    #allocation8 [shape = 'u8[4096]{0}', space=vmem, size = 0x1000, scoped, tag = 'input window, operand 4, single buffered']
    #allocation9 [shape = 'u8[8192]{0}', space=vmem, size = 0x2000, scoped, tag = 'input window, operand 5, single buffered']
    #allocation10 [shape = 's32[1]{0}', space=sflag, size = 0x4, scoped, tag = 'scoped memory for _lambda_.1']
    #allocation11 [shape = 'u8[4096]{0}', space=vmem, size = 0x1000, scoped, tag = 'input window, operand 6, single buffered']
    #allocation12 [shape = 'u8[4096]{0}', space=vmem, size = 0x1000, scoped, tag = 'input window, operand 7, single buffered']
    #allocation13 [shape = 's32[1]{0}', space=sflag, size = 0x4, scoped, tag = 'scoped memory for _lambda_.1']
    #allocation14 [shape = 'u8[4096]{0}', space=vmem, size = 0x1000, scoped, tag = 'input window, operand 8, single buffered']
    #allocation15 [shape = 'u8[4096]{0}', space=vmem, size = 0x1000, scoped, tag = 'input window, operand 9, single buffered']
    #allocation16 [shape = 's32[1]{0}', space=sflag, size = 0x4, scoped, tag = 'scoped memory for _lambda_.1']
    #allocation17 [shape = 'u8[4096]{0}', space=vmem, size = 0x1000, scoped, tag = 'input window, operand 10, single buffered']
    #allocation18 [shape = 'u8[8192]{0}', space=vmem, size = 0x2000, scoped, tag = 'input window, operand 11, single buffered']
    #allocation19 [shape = 's32[1]{0}', space=sflag, size = 0x4, scoped, tag = 'scoped memory for _lambda_.1']
    #allocation20 [shape = 'u8[8192]{0}', space=vmem, size = 0x2000, scoped, tag = 'input window, operand 12, single buffered']
    #allocation21 [shape = 'u8[4096]{0}', space=vmem, size = 0x1000, scoped, tag = 'input window, operand 13, single buffered']
    #allocation22 [shape = 's32[1]{0}', space=sflag, size = 0x4, scoped, tag = 'scoped memory for _lambda_.1']
    #allocation23 [shape = 'u8[4096]{0}', space=vmem, size = 0x1000, scoped, tag = 'input window, operand 14, single buffered']
    #allocation24 [shape = 'u8[4096]{0}', space=vmem, size = 0x1000, scoped, tag = 'input window, operand 15, single buffered']
    #allocation25 [shape = 's32[1]{0}', space=sflag, size = 0x4, scoped, tag = 'scoped memory for _lambda_.1']
    #allocation26 [shape = 'u8[4096]{0}', space=vmem, size = 0x1000, scoped, tag = 'input window, operand 16, single buffered']
    #allocation27 [shape = 'u8[16384]{0}', space=vmem, size = 0x4000, scoped, tag = 'input window, operand 18, single buffered']
    #allocation28 [shape = 's32[1]{0}', space=sflag, size = 0x4, scoped, tag = 'scoped memory for _lambda_.1']
    #allocation29 [shape = 'u8[524288]{0}', space=vmem, size = 0x80000, scoped, tag = 'input window, operand 19']
    #allocation30 [shape = 'u8[1048576]{0}', space=vmem, size = 0x100000, scoped, tag = 'output window, operand 0']
    %25 = vsyncpa [#allocation4], 0
    %26 = vsyncpa [#allocation7], 0
    %27 = vsyncpa [#allocation10], 0
    %28 = vsyncpa [#allocation13], 0
    %29 = vsyncpa [#allocation16], 0
    %30 = vsyncpa [#allocation19], 0
    %31 = vsyncpa [#allocation22], 0
    %32 = vsyncpa [#allocation25], 0
    %33 = vsyncpa [#allocation28], 0
    %34 = vsyncpa [#allocation5], 0
    %s35 = scalar_lea.sflag [#allocation5], 1
    %36 = vsyncpa %s35, 0
    loop: start=0, step=1, limit=10
    $region2: #{_lambda_.1} parent=1 // loop_pre_header
      _
    $region3: #{_lambda_.1} parent=1 // loop_header
      %s38 = sphi 0, %s42
      %p39 = scmp.ge.s32.totalorder %s38, 10
      %s45 = sphi 0, %s57
      %s46 = sphi 0, %s53
      %s47 = sphi 0, %s45
      %s48 = sphi 0, %s46
      %s49 = sphi 0, %s47
      %s50 = sphi 0, %s48
      %s60 = sphi 0, %s62
      %s63 = sphi 0, %s60
      %s64 = sphi 0, %s63
      %s80 = sphi 0, %s64
      %s86 = sphi 0, %s88
      %s89 = sphi 0, %s86
      %s90 = sphi 0, %s89
      %s106 = sphi 0, %s90
      %s110 = sphi 0, %s110
      %s112 = sphi 0, %s110
      %s113 = sphi 0, %s112
      %s127 = sphi 0, %s113
      %s131 = sphi 0, %s131
      %s133 = sphi 0, %s131
      %s134 = sphi 0, %s133
      %s148 = sphi 0, %s134
      %s152 = sphi 0, %s152
      %s154 = sphi 0, %s152
      %s155 = sphi 0, %s154
      %s169 = sphi 0, %s155
      %s173 = sphi 0, %s173
      %s175 = sphi 0, %s173
      %s176 = sphi 0, %s175
      %s190 = sphi 0, %s176
      %s194 = sphi 0, %s194
      %s196 = sphi 0, %s194
      %s197 = sphi 0, %s196
      %s211 = sphi 0, %s197
      %s215 = sphi 0, %s215
      %s217 = sphi 0, %s215
      %s218 = sphi 0, %s217
      %s232 = sphi 0, %s218
      %s236 = sphi 0, %s236
      %s238 = sphi 0, %s236
      %s239 = sphi 0, %s238
      %s253 = sphi 0, %s239
      %s257 = sphi 0, %s257
      %s259 = sphi 0, %s257
      %s260 = sphi 0, %s259
      %s274 = sphi 0, %s260
      %s278 = sphi 0, %s278
      %s280 = sphi 0, %s278
      %s281 = sphi 0, %s280
      %s295 = sphi 0, %s281
      %s299 = sphi 0, %s299
      %s301 = sphi 0, %s299
      %s302 = sphi 0, %s301
      %s316 = sphi 0, %s302
      %s320 = sphi 0, %s320
      %s322 = sphi 0, %s320
      %s323 = sphi 0, %s322
      %s337 = sphi 0, %s323
      %s341 = sphi 0, %s341
      %s343 = sphi 0, %s341
      %s344 = sphi 0, %s343
      %s358 = sphi 0, %s344
      %s362 = sphi 0, %s362
      %s364 = sphi 0, %s362
      %s365 = sphi 0, %s364
      %s379 = sphi 0, %s365
      %s383 = sphi 0, %s383
      %s385 = sphi 0, %s383
      %s386 = sphi 0, %s385
      %s400 = sphi 0, %s386
      %s404 = sphi 0, %s404
      %s406 = sphi 0, %s404
      %s407 = sphi 0, %s406
      %s421 = sphi 0, %s407
      %s425 = sphi 0, %s425
      %s427 = sphi 0, %s425
      %s428 = sphi 0, %s427
      %s442 = sphi 0, %s428
      %s446 = sphi 0, %s446
      %s448 = sphi 0, %s446
      %s449 = sphi 0, %s448
      %s463 = sphi 0, %s449
      %s469 = sphi 0, %s471
      %s472 = sphi 0, %s469
      %s473 = sphi 0, %s472
      %s489 = sphi 0, %s473
      %s497 = sphi 0, %s499
      %s500 = sphi 0, %s497
      %s501 = sphi 0, %s500
      %s517 = sphi 0, %s501
    $region4: #{_lambda_.1} parent=1 // loop_header_branch
      %41 = sbr.rel (%p39) target = $region8
    $region5: #{_lambda_.1} parent=1 // loop_body
      %s43 = ssub.s32 %s38, 1
      %s44 = ssub.s32 %s38, 2
      %s51 = sadd.s32 1, %s46
      %p52 = scmp.ge.s32.totalorder %s51, 4
      %s53 = scalar_select %p52, 0, %s51
      %s54 = sadd.s32 1, %s45
      %s55 = scalar_select %p52, %s54, %s45
      %p56 = scmp.ge.s32.totalorder %s55, 2
      %s57 = scalar_select %p56, 0, %s55
      %s58 = ssub.s32 %s45, %s57
      %p59 = scmp.eq.s32.totalorder %s58, 0
      %s61 = sadd.s32 %s60, 1
      %s62 = scalar_select %p59, %s60, %s61
      %p65 = pneg %p59
      %p66 = scmp.eq.s32.totalorder %s38, 7
      %p67 = por %p65, %p66
      %p68 = scmp.ne.s32.totalorder %s60, %s63
      %p69 = scmp.eq.s32.totalorder %s38, 0
      %p70 = por %p68, %p69
      %p71 = scmp.ne.s32.totalorder %s60, %s63
      %p72 = scmp.eq.s32.totalorder %s43, 7
      %p73 = por %p71, %p72
      %p74 = scmp.ne.s32.totalorder %s63, %s64
      %p75 = scmp.eq.s32.totalorder %s43, 0
      %p76 = por %p74, %p75
      %p77 = scmp.ne.s32.totalorder %s63, %s64
      %p78 = scmp.eq.s32.totalorder %s44, 7
      %p79 = por %p77, %p78
      %p81 = scmp.ne.s32.totalorder %s64, %s80
      %p82 = scmp.eq.s32.totalorder %s44, 0
      %p83 = por %p81, %p82
      %s84 = ssub.s32 %s45, %s57
      %p85 = scmp.eq.s32.totalorder %s84, 0
      %s87 = sadd.s32 %s86, 1
      %s88 = scalar_select %p85, %s86, %s87
      %p91 = pneg %p85
      %p92 = scmp.eq.s32.totalorder %s38, 7
      %p93 = por %p91, %p92
      %p94 = scmp.ne.s32.totalorder %s86, %s89
      %p95 = scmp.eq.s32.totalorder %s38, 0
      %p96 = por %p94, %p95
      %p97 = scmp.ne.s32.totalorder %s86, %s89
      %p98 = scmp.eq.s32.totalorder %s43, 7
      %p99 = por %p97, %p98
      %p100 = scmp.ne.s32.totalorder %s89, %s90
      %p101 = scmp.eq.s32.totalorder %s43, 0
      %p102 = por %p100, %p101
      %p103 = scmp.ne.s32.totalorder %s89, %s90
      %p104 = scmp.eq.s32.totalorder %s44, 7
      %p105 = por %p103, %p104
      %p107 = scmp.ne.s32.totalorder %s90, %s106
      %p108 = scmp.eq.s32.totalorder %s44, 0
      %p109 = por %p107, %p108
      %s111 = sadd.s32 %s110, 1
      %p114 = scmp.eq.s32.totalorder %s38, 7
      %p115 = scmp.ne.s32.totalorder %s110, %s112
      %p116 = scmp.eq.s32.totalorder %s38, 0
      %p117 = por %p115, %p116
      %p118 = scmp.ne.s32.totalorder %s110, %s112
      %p119 = scmp.eq.s32.totalorder %s43, 7
      %p120 = por %p118, %p119
      %p121 = scmp.ne.s32.totalorder %s112, %s113
      %p122 = scmp.eq.s32.totalorder %s43, 0
      %p123 = por %p121, %p122
      %p124 = scmp.ne.s32.totalorder %s112, %s113
      %p125 = scmp.eq.s32.totalorder %s44, 7
      %p126 = por %p124, %p125
      %p128 = scmp.ne.s32.totalorder %s113, %s127
      %p129 = scmp.eq.s32.totalorder %s44, 0
      %p130 = por %p128, %p129
      %s132 = sadd.s32 %s131, 1
      %p135 = scmp.eq.s32.totalorder %s38, 7
      %p136 = scmp.ne.s32.totalorder %s131, %s133
      %p137 = scmp.eq.s32.totalorder %s38, 0
      %p138 = por %p136, %p137
      %p139 = scmp.ne.s32.totalorder %s131, %s133
      %p140 = scmp.eq.s32.totalorder %s43, 7
      %p141 = por %p139, %p140
      %p142 = scmp.ne.s32.totalorder %s133, %s134
      %p143 = scmp.eq.s32.totalorder %s43, 0
      %p144 = por %p142, %p143
      %p145 = scmp.ne.s32.totalorder %s133, %s134
      %p146 = scmp.eq.s32.totalorder %s44, 7
      %p147 = por %p145, %p146
      %p149 = scmp.ne.s32.totalorder %s134, %s148
      %p150 = scmp.eq.s32.totalorder %s44, 0
      %p151 = por %p149, %p150
      %s153 = sadd.s32 %s152, 1
      %p156 = scmp.eq.s32.totalorder %s38, 7
      %p157 = scmp.ne.s32.totalorder %s152, %s154
      %p158 = scmp.eq.s32.totalorder %s38, 0
      %p159 = por %p157, %p158
      %p160 = scmp.ne.s32.totalorder %s152, %s154
      %p161 = scmp.eq.s32.totalorder %s43, 7
      %p162 = por %p160, %p161
      %p163 = scmp.ne.s32.totalorder %s154, %s155
      %p164 = scmp.eq.s32.totalorder %s43, 0
      %p165 = por %p163, %p164
      %p166 = scmp.ne.s32.totalorder %s154, %s155
      %p167 = scmp.eq.s32.totalorder %s44, 7
      %p168 = por %p166, %p167
      %p170 = scmp.ne.s32.totalorder %s155, %s169
      %p171 = scmp.eq.s32.totalorder %s44, 0
      %p172 = por %p170, %p171
      %s174 = sadd.s32 %s173, 1
      %p177 = scmp.eq.s32.totalorder %s38, 7
      %p178 = scmp.ne.s32.totalorder %s173, %s175
      %p179 = scmp.eq.s32.totalorder %s38, 0
      %p180 = por %p178, %p179
      %p181 = scmp.ne.s32.totalorder %s173, %s175
      %p182 = scmp.eq.s32.totalorder %s43, 7
      %p183 = por %p181, %p182
      %p184 = scmp.ne.s32.totalorder %s175, %s176
      %p185 = scmp.eq.s32.totalorder %s43, 0
      %p186 = por %p184, %p185
      %p187 = scmp.ne.s32.totalorder %s175, %s176
      %p188 = scmp.eq.s32.totalorder %s44, 7
      %p189 = por %p187, %p188
      %p191 = scmp.ne.s32.totalorder %s176, %s190
      %p192 = scmp.eq.s32.totalorder %s44, 0
      %p193 = por %p191, %p192
      %s195 = sadd.s32 %s194, 1
      %p198 = scmp.eq.s32.totalorder %s38, 7
      %p199 = scmp.ne.s32.totalorder %s194, %s196
      %p200 = scmp.eq.s32.totalorder %s38, 0
      %p201 = por %p199, %p200
      %p202 = scmp.ne.s32.totalorder %s194, %s196
      %p203 = scmp.eq.s32.totalorder %s43, 7
      %p204 = por %p202, %p203
      %p205 = scmp.ne.s32.totalorder %s196, %s197
      %p206 = scmp.eq.s32.totalorder %s43, 0
      %p207 = por %p205, %p206
      %p208 = scmp.ne.s32.totalorder %s196, %s197
      %p209 = scmp.eq.s32.totalorder %s44, 7
      %p210 = por %p208, %p209
      %p212 = scmp.ne.s32.totalorder %s197, %s211
      %p213 = scmp.eq.s32.totalorder %s44, 0
      %p214 = por %p212, %p213
      %s216 = sadd.s32 %s215, 1
      %p219 = scmp.eq.s32.totalorder %s38, 7
      %p220 = scmp.ne.s32.totalorder %s215, %s217
      %p221 = scmp.eq.s32.totalorder %s38, 0
      %p222 = por %p220, %p221
      %p223 = scmp.ne.s32.totalorder %s215, %s217
      %p224 = scmp.eq.s32.totalorder %s43, 7
      %p225 = por %p223, %p224
      %p226 = scmp.ne.s32.totalorder %s217, %s218
      %p227 = scmp.eq.s32.totalorder %s43, 0
      %p228 = por %p226, %p227
      %p229 = scmp.ne.s32.totalorder %s217, %s218
      %p230 = scmp.eq.s32.totalorder %s44, 7
      %p231 = por %p229, %p230
      %p233 = scmp.ne.s32.totalorder %s218, %s232
      %p234 = scmp.eq.s32.totalorder %s44, 0
      %p235 = por %p233, %p234
      %s237 = sadd.s32 %s236, 1
      %p240 = scmp.eq.s32.totalorder %s38, 7
      %p241 = scmp.ne.s32.totalorder %s236, %s238
      %p242 = scmp.eq.s32.totalorder %s38, 0
      %p243 = por %p241, %p242
      %p244 = scmp.ne.s32.totalorder %s236, %s238
      %p245 = scmp.eq.s32.totalorder %s43, 7
      %p246 = por %p244, %p245
      %p247 = scmp.ne.s32.totalorder %s238, %s239
      %p248 = scmp.eq.s32.totalorder %s43, 0
      %p249 = por %p247, %p248
      %p250 = scmp.ne.s32.totalorder %s238, %s239
      %p251 = scmp.eq.s32.totalorder %s44, 7
      %p252 = por %p250, %p251
      %p254 = scmp.ne.s32.totalorder %s239, %s253
      %p255 = scmp.eq.s32.totalorder %s44, 0
      %p256 = por %p254, %p255
      %s258 = sadd.s32 %s257, 1
      %p261 = scmp.eq.s32.totalorder %s38, 7
      %p262 = scmp.ne.s32.totalorder %s257, %s259
      %p263 = scmp.eq.s32.totalorder %s38, 0
      %p264 = por %p262, %p263
      %p265 = scmp.ne.s32.totalorder %s257, %s259
      %p266 = scmp.eq.s32.totalorder %s43, 7
      %p267 = por %p265, %p266
      %p268 = scmp.ne.s32.totalorder %s259, %s260
      %p269 = scmp.eq.s32.totalorder %s43, 0
      %p270 = por %p268, %p269
      %p271 = scmp.ne.s32.totalorder %s259, %s260
      %p272 = scmp.eq.s32.totalorder %s44, 7
      %p273 = por %p271, %p272
      %p275 = scmp.ne.s32.totalorder %s260, %s274
      %p276 = scmp.eq.s32.totalorder %s44, 0
      %p277 = por %p275, %p276
      %s279 = sadd.s32 %s278, 1
      %p282 = scmp.eq.s32.totalorder %s38, 7
      %p283 = scmp.ne.s32.totalorder %s278, %s280
      %p284 = scmp.eq.s32.totalorder %s38, 0
      %p285 = por %p283, %p284
      %p286 = scmp.ne.s32.totalorder %s278, %s280
      %p287 = scmp.eq.s32.totalorder %s43, 7
      %p288 = por %p286, %p287
      %p289 = scmp.ne.s32.totalorder %s280, %s281
      %p290 = scmp.eq.s32.totalorder %s43, 0
      %p291 = por %p289, %p290
      %p292 = scmp.ne.s32.totalorder %s280, %s281
      %p293 = scmp.eq.s32.totalorder %s44, 7
      %p294 = por %p292, %p293
      %p296 = scmp.ne.s32.totalorder %s281, %s295
      %p297 = scmp.eq.s32.totalorder %s44, 0
      %p298 = por %p296, %p297
      %s300 = sadd.s32 %s299, 1
      %p303 = scmp.eq.s32.totalorder %s38, 7
      %p304 = scmp.ne.s32.totalorder %s299, %s301
      %p305 = scmp.eq.s32.totalorder %s38, 0
      %p306 = por %p304, %p305
      %p307 = scmp.ne.s32.totalorder %s299, %s301
      %p308 = scmp.eq.s32.totalorder %s43, 7
      %p309 = por %p307, %p308
      %p310 = scmp.ne.s32.totalorder %s301, %s302
      %p311 = scmp.eq.s32.totalorder %s43, 0
      %p312 = por %p310, %p311
      %p313 = scmp.ne.s32.totalorder %s301, %s302
      %p314 = scmp.eq.s32.totalorder %s44, 7
      %p315 = por %p313, %p314
      %p317 = scmp.ne.s32.totalorder %s302, %s316
      %p318 = scmp.eq.s32.totalorder %s44, 0
      %p319 = por %p317, %p318
      %s321 = sadd.s32 %s320, 1
      %p324 = scmp.eq.s32.totalorder %s38, 7
      %p325 = scmp.ne.s32.totalorder %s320, %s322
      %p326 = scmp.eq.s32.totalorder %s38, 0
      %p327 = por %p325, %p326
      %p328 = scmp.ne.s32.totalorder %s320, %s322
      %p329 = scmp.eq.s32.totalorder %s43, 7
      %p330 = por %p328, %p329
      %p331 = scmp.ne.s32.totalorder %s322, %s323
      %p332 = scmp.eq.s32.totalorder %s43, 0
      %p333 = por %p331, %p332
      %p334 = scmp.ne.s32.totalorder %s322, %s323
      %p335 = scmp.eq.s32.totalorder %s44, 7
      %p336 = por %p334, %p335
      %p338 = scmp.ne.s32.totalorder %s323, %s337
      %p339 = scmp.eq.s32.totalorder %s44, 0
      %p340 = por %p338, %p339
      %s342 = sadd.s32 %s341, 1
      %p345 = scmp.eq.s32.totalorder %s38, 7
      %p346 = scmp.ne.s32.totalorder %s341, %s343
      %p347 = scmp.eq.s32.totalorder %s38, 0
      %p348 = por %p346, %p347
      %p349 = scmp.ne.s32.totalorder %s341, %s343
      %p350 = scmp.eq.s32.totalorder %s43, 7
      %p351 = por %p349, %p350
      %p352 = scmp.ne.s32.totalorder %s343, %s344
      %p353 = scmp.eq.s32.totalorder %s43, 0
      %p354 = por %p352, %p353
      %p355 = scmp.ne.s32.totalorder %s343, %s344
      %p356 = scmp.eq.s32.totalorder %s44, 7
      %p357 = por %p355, %p356
      %p359 = scmp.ne.s32.totalorder %s344, %s358
      %p360 = scmp.eq.s32.totalorder %s44, 0
      %p361 = por %p359, %p360
      %s363 = sadd.s32 %s362, 1
      %p366 = scmp.eq.s32.totalorder %s38, 7
      %p367 = scmp.ne.s32.totalorder %s362, %s364
      %p368 = scmp.eq.s32.totalorder %s38, 0
      %p369 = por %p367, %p368
      %p370 = scmp.ne.s32.totalorder %s362, %s364
      %p371 = scmp.eq.s32.totalorder %s43, 7
      %p372 = por %p370, %p371
      %p373 = scmp.ne.s32.totalorder %s364, %s365
      %p374 = scmp.eq.s32.totalorder %s43, 0
      %p375 = por %p373, %p374
      %p376 = scmp.ne.s32.totalorder %s364, %s365
      %p377 = scmp.eq.s32.totalorder %s44, 7
      %p378 = por %p376, %p377
      %p380 = scmp.ne.s32.totalorder %s365, %s379
      %p381 = scmp.eq.s32.totalorder %s44, 0
      %p382 = por %p380, %p381
      %s384 = sadd.s32 %s383, 1
      %p387 = scmp.eq.s32.totalorder %s38, 7
      %p388 = scmp.ne.s32.totalorder %s383, %s385
      %p389 = scmp.eq.s32.totalorder %s38, 0
      %p390 = por %p388, %p389
      %p391 = scmp.ne.s32.totalorder %s383, %s385
      %p392 = scmp.eq.s32.totalorder %s43, 7
      %p393 = por %p391, %p392
      %p394 = scmp.ne.s32.totalorder %s385, %s386
      %p395 = scmp.eq.s32.totalorder %s43, 0
      %p396 = por %p394, %p395
      %p397 = scmp.ne.s32.totalorder %s385, %s386
      %p398 = scmp.eq.s32.totalorder %s44, 7
      %p399 = por %p397, %p398
      %p401 = scmp.ne.s32.totalorder %s386, %s400
      %p402 = scmp.eq.s32.totalorder %s44, 0
      %p403 = por %p401, %p402
      %s405 = sadd.s32 %s404, 1
      %p408 = scmp.eq.s32.totalorder %s38, 7
      %p409 = scmp.ne.s32.totalorder %s404, %s406
      %p410 = scmp.eq.s32.totalorder %s38, 0
      %p411 = por %p409, %p410
      %p412 = scmp.ne.s32.totalorder %s404, %s406
      %p413 = scmp.eq.s32.totalorder %s43, 7
      %p414 = por %p412, %p413
      %p415 = scmp.ne.s32.totalorder %s406, %s407
      %p416 = scmp.eq.s32.totalorder %s43, 0
      %p417 = por %p415, %p416
      %p418 = scmp.ne.s32.totalorder %s406, %s407
      %p419 = scmp.eq.s32.totalorder %s44, 7
      %p420 = por %p418, %p419
      %p422 = scmp.ne.s32.totalorder %s407, %s421
      %p423 = scmp.eq.s32.totalorder %s44, 0
      %p424 = por %p422, %p423
      %s426 = sadd.s32 %s425, 1
      %p429 = scmp.eq.s32.totalorder %s38, 7
      %p430 = scmp.ne.s32.totalorder %s425, %s427
      %p431 = scmp.eq.s32.totalorder %s38, 0
      %p432 = por %p430, %p431
      %p433 = scmp.ne.s32.totalorder %s425, %s427
      %p434 = scmp.eq.s32.totalorder %s43, 7
      %p435 = por %p433, %p434
      %p436 = scmp.ne.s32.totalorder %s427, %s428
      %p437 = scmp.eq.s32.totalorder %s43, 0
      %p438 = por %p436, %p437
      %p439 = scmp.ne.s32.totalorder %s427, %s428
      %p440 = scmp.eq.s32.totalorder %s44, 7
      %p441 = por %p439, %p440
      %p443 = scmp.ne.s32.totalorder %s428, %s442
      %p444 = scmp.eq.s32.totalorder %s44, 0
      %p445 = por %p443, %p444
      %s447 = sadd.s32 %s446, 1
      %p450 = scmp.eq.s32.totalorder %s38, 7
      %p451 = scmp.ne.s32.totalorder %s446, %s448
      %p452 = scmp.eq.s32.totalorder %s38, 0
      %p453 = por %p451, %p452
      %p454 = scmp.ne.s32.totalorder %s446, %s448
      %p455 = scmp.eq.s32.totalorder %s43, 7
      %p456 = por %p454, %p455
      %p457 = scmp.ne.s32.totalorder %s448, %s449
      %p458 = scmp.eq.s32.totalorder %s43, 0
      %p459 = por %p457, %p458
      %p460 = scmp.ne.s32.totalorder %s448, %s449
      %p461 = scmp.eq.s32.totalorder %s44, 7
      %p462 = por %p460, %p461
      %p464 = scmp.ne.s32.totalorder %s449, %s463
      %p465 = scmp.eq.s32.totalorder %s44, 0
      %p466 = por %p464, %p465
      %s467 = ssub.s32 %s46, %s53
      %p468 = scmp.eq.s32.totalorder %s467, 0
      %s470 = sadd.s32 %s469, 1
      %s471 = scalar_select %p468, %s469, %s470
      %p474 = pneg %p468
      %p475 = scmp.eq.s32.totalorder %s38, 7
      %p476 = por %p474, %p475
      %p477 = scmp.ne.s32.totalorder %s469, %s472
      %p478 = scmp.eq.s32.totalorder %s38, 0
      %p479 = por %p477, %p478
      %p480 = scmp.ne.s32.totalorder %s469, %s472
      %p481 = scmp.eq.s32.totalorder %s43, 7
      %p482 = por %p480, %p481
      %p483 = scmp.ne.s32.totalorder %s472, %s473
      %p484 = scmp.eq.s32.totalorder %s43, 0
      %p485 = por %p483, %p484
      %p486 = scmp.ne.s32.totalorder %s472, %s473
      %p487 = scmp.eq.s32.totalorder %s44, 7
      %p488 = por %p486, %p487
      %p490 = scmp.ne.s32.totalorder %s473, %s489
      %p491 = scmp.eq.s32.totalorder %s44, 0
      %p492 = por %p490, %p491
      %s493 = ssub.s32 %s45, %s57
      %s494 = ssub.s32 %s46, %s53
      %s495 = sor.u32 %s493, %s494
      %p496 = scmp.eq.s32.totalorder %s495, 0
      %s498 = sadd.s32 %s497, 1
      %s499 = scalar_select %p496, %s497, %s498
      %p502 = pneg %p496
      %p503 = scmp.eq.s32.totalorder %s38, 7
      %p504 = por %p502, %p503
      %p505 = scmp.ne.s32.totalorder %s497, %s500
      %p506 = scmp.eq.s32.totalorder %s38, 0
      %p507 = por %p505, %p506
      %p508 = scmp.ne.s32.totalorder %s497, %s500
      %p509 = scmp.eq.s32.totalorder %s43, 7
      %p510 = por %p508, %p509
      %p511 = scmp.ne.s32.totalorder %s500, %s501
      %p512 = scmp.eq.s32.totalorder %s43, 0
      %p513 = por %p511, %p512
      %p514 = scmp.ne.s32.totalorder %s500, %s501
      %p515 = scmp.eq.s32.totalorder %s44, 7
      %p516 = por %p514, %p515
      %p518 = scmp.ne.s32.totalorder %s501, %s517
      %p519 = scmp.eq.s32.totalorder %s44, 0
      %p520 = por %p518, %p519
      %p521 = scmp.le.s32.totalorder 1, %s38
      %p522 = scmp.lt.s32.totalorder %s38, 9
      %p523 = pnand %p521, %p522
      %p524 = pneg %p523
      // Predicated region
      $region9: #{_lambda_.1} parent=5 // pred_check
        _
      $region10: #{_lambda_.1} parent=5 // pred_check_branch
        %526 = sbr.rel (%p523) target = $region12
      $region11: #{_lambda_.1} parent=5 // pred_region
        %s527 = ssub.s32 %s38, 1
        // Predicated region
        $region13: #{_lambda_.1} parent=11 // pred_check
          %p528 = pneg %p123
        $region14: #{_lambda_.1} parent=11 // pred_check_branch
          %530 = sbr.rel (%p528) target = $region16
        $region15: #{_lambda_.1} parent=11 // pred_region
          %s532 = ssub.s32 512, 512
          %533 = vsyncadd [#allocation4], %s532
          %s534 = sshll.u32 [#allocation3], 4
          %s535 = int_to_ptr.vmem [resolvable:$true] %s534
          %540 = dma.hbm_to_vmem [thread:$0]  %s2, 512, %s535, [#allocation4], 256, 256, 16
        $region16: #{_lambda_.1} parent=11 // pred_fallthru
          _
        // Predicated region
        $region17: #{_lambda_.1} parent=11 // pred_check
          %p541 = pneg %p144
        $region18: #{_lambda_.1} parent=11 // pred_check_branch
          %543 = sbr.rel (%p541) target = $region20
        $region19: #{_lambda_.1} parent=11 // pred_region
          %s545 = ssub.s32 128, 128
          %546 = vsyncadd [#allocation7], %s545
          %s548 = sshll.u32 [#allocation6], 4
          %s549 = int_to_ptr.vmem [resolvable:$true] %s548
          %551 = dma.hbm_to_vmem [thread:$0]  %s3, 128, %s549, [#allocation7]
        $region20: #{_lambda_.1} parent=11 // pred_fallthru
          _
        // Predicated region
        $region21: #{_lambda_.1} parent=11 // pred_check
          %p552 = pneg %p165
        $region22: #{_lambda_.1} parent=11 // pred_check_branch
          %554 = sbr.rel (%p552) target = $region24
        $region23: #{_lambda_.1} parent=11 // pred_region
          %s556 = ssub.s32 128, 128
          %557 = vsyncadd [#allocation7], %s556
          %s559 = sshll.u32 [#allocation8], 4
          %s560 = int_to_ptr.vmem [resolvable:$true] %s559
          %562 = dma.hbm_to_vmem [thread:$0]  %s4, 128, %s560, [#allocation7]
        $region24: #{_lambda_.1} parent=11 // pred_fallthru
          _
        // Predicated region
        $region25: #{_lambda_.1} parent=11 // pred_check
          %p563 = pneg %p186
        $region26: #{_lambda_.1} parent=11 // pred_check_branch
          %565 = sbr.rel (%p563) target = $region28
        $region27: #{_lambda_.1} parent=11 // pred_region
          %s567 = ssub.s32 256, 256
          %568 = vsyncadd [#allocation10], %s567
          %s570 = sshll.u32 [#allocation9], 4
          %s571 = int_to_ptr.vmem [resolvable:$true] %s570
          %573 = dma.hbm_to_vmem [thread:$0]  %s5, 256, %s571, [#allocation10]
        $region28: #{_lambda_.1} parent=11 // pred_fallthru
          _
        // Predicated region
        $region29: #{_lambda_.1} parent=11 // pred_check
          %p574 = pneg %p207
        $region30: #{_lambda_.1} parent=11 // pred_check_branch
          %576 = sbr.rel (%p574) target = $region32
        $region31: #{_lambda_.1} parent=11 // pred_region
          %s578 = ssub.s32 128, 128
          %579 = vsyncadd [#allocation10], %s578
          %s581 = sshll.u32 [#allocation11], 4
          %s582 = int_to_ptr.vmem [resolvable:$true] %s581
          %584 = dma.hbm_to_vmem [thread:$0]  %s6, 128, %s582, [#allocation10]
        $region32: #{_lambda_.1} parent=11 // pred_fallthru
          _
        // Predicated region
        $region33: #{_lambda_.1} parent=11 // pred_check
          %p585 = pneg %p228
        $region34: #{_lambda_.1} parent=11 // pred_check_branch
          %587 = sbr.rel (%p585) target = $region36
        $region35: #{_lambda_.1} parent=11 // pred_region
          %s589 = ssub.s32 128, 128
          %590 = vsyncadd [#allocation13], %s589
          %s592 = sshll.u32 [#allocation12], 4
          %s593 = int_to_ptr.vmem [resolvable:$true] %s592
          %595 = dma.hbm_to_vmem [thread:$0]  %s7, 128, %s593, [#allocation13]
        $region36: #{_lambda_.1} parent=11 // pred_fallthru
          _
        // Predicated region
        $region37: #{_lambda_.1} parent=11 // pred_check
          %p596 = pneg %p249
        $region38: #{_lambda_.1} parent=11 // pred_check_branch
          %598 = sbr.rel (%p596) target = $region40
        $region39: #{_lambda_.1} parent=11 // pred_region
          %s600 = ssub.s32 128, 128
          %601 = vsyncadd [#allocation13], %s600
          %s603 = sshll.u32 [#allocation14], 4
          %s604 = int_to_ptr.vmem [resolvable:$true] %s603
          %606 = dma.hbm_to_vmem [thread:$0]  %s8, 128, %s604, [#allocation13]
        $region40: #{_lambda_.1} parent=11 // pred_fallthru
          _
        // Predicated region
        $region41: #{_lambda_.1} parent=11 // pred_check
          %p607 = pneg %p270
        $region42: #{_lambda_.1} parent=11 // pred_check_branch
          %609 = sbr.rel (%p607) target = $region44
        $region43: #{_lambda_.1} parent=11 // pred_region
          %s611 = ssub.s32 128, 128
          %612 = vsyncadd [#allocation16], %s611
          %s614 = sshll.u32 [#allocation15], 4
          %s615 = int_to_ptr.vmem [resolvable:$true] %s614
          %617 = dma.hbm_to_vmem [thread:$0]  %s9, 128, %s615, [#allocation16]
        $region44: #{_lambda_.1} parent=11 // pred_fallthru
          _
        // Predicated region
        $region45: #{_lambda_.1} parent=11 // pred_check
          %p618 = pneg %p291
        $region46: #{_lambda_.1} parent=11 // pred_check_branch
          %620 = sbr.rel (%p618) target = $region48
        $region47: #{_lambda_.1} parent=11 // pred_region
          %s622 = ssub.s32 128, 128
          %623 = vsyncadd [#allocation16], %s622
          %s625 = sshll.u32 [#allocation17], 4
          %s626 = int_to_ptr.vmem [resolvable:$true] %s625
          %628 = dma.hbm_to_vmem [thread:$0]  %s10, 128, %s626, [#allocation16]
        $region48: #{_lambda_.1} parent=11 // pred_fallthru
          _
        // Predicated region
        $region49: #{_lambda_.1} parent=11 // pred_check
          %p629 = pneg %p312
        $region50: #{_lambda_.1} parent=11 // pred_check_branch
          %631 = sbr.rel (%p629) target = $region52
        $region51: #{_lambda_.1} parent=11 // pred_region
          %s633 = ssub.s32 256, 256
          %634 = vsyncadd [#allocation19], %s633
          %s635 = sshll.u32 [#allocation18], 4
          %s636 = int_to_ptr.vmem [resolvable:$true] %s635
          %641 = dma.hbm_to_vmem [thread:$0]  %s11, 256, %s636, [#allocation19], 128, 128, 8
        $region52: #{_lambda_.1} parent=11 // pred_fallthru
          _
        // Predicated region
        $region53: #{_lambda_.1} parent=11 // pred_check
          %p642 = pneg %p333
        $region54: #{_lambda_.1} parent=11 // pred_check_branch
          %644 = sbr.rel (%p642) target = $region56
        $region55: #{_lambda_.1} parent=11 // pred_region
          %s646 = ssub.s32 256, 256
          %647 = vsyncadd [#allocation19], %s646
          %s648 = sshll.u32 [#allocation20], 4
          %s649 = int_to_ptr.vmem [resolvable:$true] %s648
          %654 = dma.hbm_to_vmem [thread:$0]  %s12, 256, %s649, [#allocation19], 128, 128, 8
        $region56: #{_lambda_.1} parent=11 // pred_fallthru
          _
        // Predicated region
        $region57: #{_lambda_.1} parent=11 // pred_check
          %p655 = pneg %p354
        $region58: #{_lambda_.1} parent=11 // pred_check_branch
          %657 = sbr.rel (%p655) target = $region60
        $region59: #{_lambda_.1} parent=11 // pred_region
          %s659 = ssub.s32 128, 128
          %660 = vsyncadd [#allocation22], %s659
          %s662 = sshll.u32 [#allocation21], 4
          %s663 = int_to_ptr.vmem [resolvable:$true] %s662
          %665 = dma.hbm_to_vmem [thread:$0]  %s13, 128, %s663, [#allocation22]
        $region60: #{_lambda_.1} parent=11 // pred_fallthru
          _
        // Predicated region
        $region61: #{_lambda_.1} parent=11 // pred_check
          %p666 = pneg %p375
        $region62: #{_lambda_.1} parent=11 // pred_check_branch
          %668 = sbr.rel (%p666) target = $region64
        $region63: #{_lambda_.1} parent=11 // pred_region
          %s670 = ssub.s32 128, 128
          %671 = vsyncadd [#allocation22], %s670
          %s673 = sshll.u32 [#allocation23], 4
          %s674 = int_to_ptr.vmem [resolvable:$true] %s673
          %676 = dma.hbm_to_vmem [thread:$0]  %s14, 128, %s674, [#allocation22]
        $region64: #{_lambda_.1} parent=11 // pred_fallthru
          _
        // Predicated region
        $region65: #{_lambda_.1} parent=11 // pred_check
          %p677 = pneg %p396
        $region66: #{_lambda_.1} parent=11 // pred_check_branch
          %679 = sbr.rel (%p677) target = $region68
        $region67: #{_lambda_.1} parent=11 // pred_region
          %s681 = ssub.s32 128, 128
          %682 = vsyncadd [#allocation25], %s681
          %s684 = sshll.u32 [#allocation24], 4
          %s685 = int_to_ptr.vmem [resolvable:$true] %s684
          %687 = dma.hbm_to_vmem [thread:$0]  %s15, 128, %s685, [#allocation25]
        $region68: #{_lambda_.1} parent=11 // pred_fallthru
          _
        // Predicated region
        $region69: #{_lambda_.1} parent=11 // pred_check
          %p688 = pneg %p417
        $region70: #{_lambda_.1} parent=11 // pred_check_branch
          %690 = sbr.rel (%p688) target = $region72
        $region71: #{_lambda_.1} parent=11 // pred_region
          %s692 = ssub.s32 128, 128
          %693 = vsyncadd [#allocation25], %s692
          %s695 = sshll.u32 [#allocation26], 4
          %s696 = int_to_ptr.vmem [resolvable:$true] %s695
          %698 = dma.hbm_to_vmem [thread:$0]  %s16, 128, %s696, [#allocation25]
        $region72: #{_lambda_.1} parent=11 // pred_fallthru
          _
        // Predicated region
        $region73: #{_lambda_.1} parent=11 // pred_check
          %p699 = pneg %p438
        $region74: #{_lambda_.1} parent=11 // pred_check_branch
          %701 = sbr.rel (%p699) target = $region76
        $region75: #{_lambda_.1} parent=11 // pred_region
          _
        $region76: #{_lambda_.1} parent=11 // pred_fallthru
          _
        // Predicated region
        $region77: #{_lambda_.1} parent=11 // pred_check
          %p702 = pneg %p459
        $region78: #{_lambda_.1} parent=11 // pred_check_branch
          %704 = sbr.rel (%p702) target = $region80
        $region79: #{_lambda_.1} parent=11 // pred_region
          %s706 = ssub.s32 512, 512
          %707 = vsyncadd [#allocation28], %s706
          %s708 = sshll.u32 [#allocation27], 4
          %s709 = int_to_ptr.vmem [resolvable:$true] %s708
          %714 = dma.hbm_to_vmem [thread:$0]  %s18, 512, %s709, [#allocation28], 256, 256, 16
        $region80: #{_lambda_.1} parent=11 // pred_fallthru
          _
      $region12: #{_lambda_.1} parent=5 // pred_fallthru
        _
      %p715 = scmp.lt.s32.totalorder %s38, 8
      // Predicated region
      $region81: #{_lambda_.1} parent=5 // pred_check
        %p716 = pneg %p715
      $region82: #{_lambda_.1} parent=5 // pred_check_branch
        %718 = sbr.rel (%p716) target = $region84
      $region83: #{_lambda_.1} parent=5 // pred_region
        // Predicated region
        $region85: #{_lambda_.1} parent=83 // pred_check
          %p719 = pneg %p70
        $region86: #{_lambda_.1} parent=83 // pred_check_branch
          %721 = sbr.rel (%p719) target = $region88
        $region87: #{_lambda_.1} parent=83 // pred_region
          %p722 = scmp.lt.s32.totalorder %s45, 1
          %s723 = scalar_select %p722, %s45, 1
          %s724 = smul.addr %s723, 2
          %s725 = smul.addr %s724, 8
          %s726 = scalar_lea.vmem %s0, %s725
        $region88: #{_lambda_.1} parent=83 // pred_fallthru
          _
        // Predicated region
        $region89: #{_lambda_.1} parent=83 // pred_check
          %p727 = pneg %p96
        $region90: #{_lambda_.1} parent=83 // pred_check_branch
          %729 = sbr.rel (%p727) target = $region92
        $region91: #{_lambda_.1} parent=83 // pred_region
          %p730 = scmp.lt.s32.totalorder %s45, 1
          %s731 = scalar_select %p730, %s45, 1
          %s732 = smul.addr %s731, 2
          %s733 = smul.addr %s732, 8
          %s734 = scalar_lea.vmem %s1, %s733
        $region92: #{_lambda_.1} parent=83 // pred_fallthru
          _
        // Predicated region
        $region93: #{_lambda_.1} parent=83 // pred_check
          %p735 = pneg %p479
        $region94: #{_lambda_.1} parent=83 // pred_check_branch
          %737 = sbr.rel (%p735) target = $region96
        $region95: #{_lambda_.1} parent=83 // pred_region
          %s738 = sand.u32 %s38, 1
          %s739 = scalar_lea.sflag [#allocation4], %s738
          %s740 = sand.u32 %s469, 1
          %s741 = smul.addr %s740, 512
          %s742 = scalar_lea.vmem [#allocation29], %s741
          %s744 = ssub.s32 8192, 8192
          %745 = vsyncadd %s739, %s744
          %s746 = smul.addr %s46, 64
          %s747 = smul.addr %s746, 128
          %s748 = scalar_lea.hbm %s19, %s747
          %s749 = sshll.u32 %s742, 4
          %s750 = int_to_ptr.vmem [resolvable:$true] %s749
          %755 = dma.hbm_to_vmem [thread:$0]  %s748, 8192, %s750, %s739, 128, 128, 8
        $region96: #{_lambda_.1} parent=83 // pred_fallthru
          _
      $region84: #{_lambda_.1} parent=5 // pred_fallthru
        _
      %p756 = scmp.le.s32.totalorder 1, %s38
      %p757 = scmp.lt.s32.totalorder %s38, 9
      %p758 = pnand %p756, %p757
      %p759 = pneg %p758
      // Predicated region
      $region97: #{_lambda_.1} parent=5 // pred_check
        _
      $region98: #{_lambda_.1} parent=5 // pred_check_branch
        %761 = sbr.rel (%p758) target = $region100
      $region99: #{_lambda_.1} parent=5 // pred_region
        %s762 = ssub.s32 %s38, 1
        // Predicated region
        $region101: #{_lambda_.1} parent=99 // pred_check
          %p763 = pneg %p123
        $region102: #{_lambda_.1} parent=99 // pred_check_branch
          %765 = sbr.rel (%p763) target = $region104
        $region103: #{_lambda_.1} parent=99 // pred_region
          %766 = dma.done [#allocation4], 512
        $region104: #{_lambda_.1} parent=99 // pred_fallthru
          _
        // Predicated region
        $region105: #{_lambda_.1} parent=99 // pred_check
          %p767 = pneg %p144
        $region106: #{_lambda_.1} parent=99 // pred_check_branch
          %769 = sbr.rel (%p767) target = $region108
        $region107: #{_lambda_.1} parent=99 // pred_region
          %770 = dma.done [#allocation7], 128
        $region108: #{_lambda_.1} parent=99 // pred_fallthru
          _
        // Predicated region
        $region109: #{_lambda_.1} parent=99 // pred_check
          %p771 = pneg %p165
        $region110: #{_lambda_.1} parent=99 // pred_check_branch
          %773 = sbr.rel (%p771) target = $region112
        $region111: #{_lambda_.1} parent=99 // pred_region
          %774 = dma.done [#allocation7], 128
        $region112: #{_lambda_.1} parent=99 // pred_fallthru
          _
        // Predicated region
        $region113: #{_lambda_.1} parent=99 // pred_check
          %p775 = pneg %p186
        $region114: #{_lambda_.1} parent=99 // pred_check_branch
          %777 = sbr.rel (%p775) target = $region116
        $region115: #{_lambda_.1} parent=99 // pred_region
          %778 = dma.done [#allocation10], 256
        $region116: #{_lambda_.1} parent=99 // pred_fallthru
          _
        // Predicated region
        $region117: #{_lambda_.1} parent=99 // pred_check
          %p779 = pneg %p207
        $region118: #{_lambda_.1} parent=99 // pred_check_branch
          %781 = sbr.rel (%p779) target = $region120
        $region119: #{_lambda_.1} parent=99 // pred_region
          %782 = dma.done [#allocation10], 128
        $region120: #{_lambda_.1} parent=99 // pred_fallthru
          _
        // Predicated region
        $region121: #{_lambda_.1} parent=99 // pred_check
          %p783 = pneg %p228
        $region122: #{_lambda_.1} parent=99 // pred_check_branch
          %785 = sbr.rel (%p783) target = $region124
        $region123: #{_lambda_.1} parent=99 // pred_region
          %786 = dma.done [#allocation13], 128
        $region124: #{_lambda_.1} parent=99 // pred_fallthru
          _
        // Predicated region
        $region125: #{_lambda_.1} parent=99 // pred_check
          %p787 = pneg %p249
        $region126: #{_lambda_.1} parent=99 // pred_check_branch
          %789 = sbr.rel (%p787) target = $region128
        $region127: #{_lambda_.1} parent=99 // pred_region
          %790 = dma.done [#allocation13], 128
        $region128: #{_lambda_.1} parent=99 // pred_fallthru
          _
        // Predicated region
        $region129: #{_lambda_.1} parent=99 // pred_check
          %p791 = pneg %p270
        $region130: #{_lambda_.1} parent=99 // pred_check_branch
          %793 = sbr.rel (%p791) target = $region132
        $region131: #{_lambda_.1} parent=99 // pred_region
          %794 = dma.done [#allocation16], 128
        $region132: #{_lambda_.1} parent=99 // pred_fallthru
          _
        // Predicated region
        $region133: #{_lambda_.1} parent=99 // pred_check
          %p795 = pneg %p291
        $region134: #{_lambda_.1} parent=99 // pred_check_branch
          %797 = sbr.rel (%p795) target = $region136
        $region135: #{_lambda_.1} parent=99 // pred_region
          %798 = dma.done [#allocation16], 128
        $region136: #{_lambda_.1} parent=99 // pred_fallthru
          _
        // Predicated region
        $region137: #{_lambda_.1} parent=99 // pred_check
          %p799 = pneg %p312
        $region138: #{_lambda_.1} parent=99 // pred_check_branch
          %801 = sbr.rel (%p799) target = $region140
        $region139: #{_lambda_.1} parent=99 // pred_region
          %802 = dma.done [#allocation19], 256
        $region140: #{_lambda_.1} parent=99 // pred_fallthru
          _
        // Predicated region
        $region141: #{_lambda_.1} parent=99 // pred_check
          %p803 = pneg %p333
        $region142: #{_lambda_.1} parent=99 // pred_check_branch
          %805 = sbr.rel (%p803) target = $region144
        $region143: #{_lambda_.1} parent=99 // pred_region
          %806 = dma.done [#allocation19], 256
        $region144: #{_lambda_.1} parent=99 // pred_fallthru
          _
        // Predicated region
        $region145: #{_lambda_.1} parent=99 // pred_check
          %p807 = pneg %p354
        $region146: #{_lambda_.1} parent=99 // pred_check_branch
          %809 = sbr.rel (%p807) target = $region148
        $region147: #{_lambda_.1} parent=99 // pred_region
          %810 = dma.done [#allocation22], 128
        $region148: #{_lambda_.1} parent=99 // pred_fallthru
          _
        // Predicated region
        $region149: #{_lambda_.1} parent=99 // pred_check
          %p811 = pneg %p375
        $region150: #{_lambda_.1} parent=99 // pred_check_branch
          %813 = sbr.rel (%p811) target = $region152
        $region151: #{_lambda_.1} parent=99 // pred_region
          %814 = dma.done [#allocation22], 128
        $region152: #{_lambda_.1} parent=99 // pred_fallthru
          _
        // Predicated region
        $region153: #{_lambda_.1} parent=99 // pred_check
          %p815 = pneg %p396
        $region154: #{_lambda_.1} parent=99 // pred_check_branch
          %817 = sbr.rel (%p815) target = $region156
        $region155: #{_lambda_.1} parent=99 // pred_region
          %818 = dma.done [#allocation25], 128
        $region156: #{_lambda_.1} parent=99 // pred_fallthru
          _
        // Predicated region
        $region157: #{_lambda_.1} parent=99 // pred_check
          %p819 = pneg %p417
        $region158: #{_lambda_.1} parent=99 // pred_check_branch
          %821 = sbr.rel (%p819) target = $region160
        $region159: #{_lambda_.1} parent=99 // pred_region
          %822 = dma.done [#allocation25], 128
        $region160: #{_lambda_.1} parent=99 // pred_fallthru
          _
        // Predicated region
        $region161: #{_lambda_.1} parent=99 // pred_check
          %p823 = pneg %p459
        $region162: #{_lambda_.1} parent=99 // pred_check_branch
          %825 = sbr.rel (%p823) target = $region164
        $region163: #{_lambda_.1} parent=99 // pred_region
          %826 = dma.done [#allocation28], 512
        $region164: #{_lambda_.1} parent=99 // pred_fallthru
          _
        %s827 = sand.u32 %s43, 1
        %s828 = scalar_lea.sflag [#allocation4], %s827
        %s829 = sand.u32 %s472, 1
        %s830 = smul.addr %s829, 512
        %s831 = scalar_lea.vmem [#allocation29], %s830
        // Predicated region
        $region165: #{_lambda_.1} parent=99 // pred_check
          %p832 = pneg %p485
        $region166: #{_lambda_.1} parent=99 // pred_check_branch
          %834 = sbr.rel (%p832) target = $region168
        $region167: #{_lambda_.1} parent=99 // pred_region
          %835 = dma.done %s828, 8192
        $region168: #{_lambda_.1} parent=99 // pred_fallthru
          _
        %p836 = scmp.lt.s32.totalorder %s47, 1
        %s837 = scalar_select %p836, %s47, 1
        %s838 = smul.addr %s837, 2
        %s839 = smul.addr %s838, 8
        %s840 = scalar_lea.vmem %s0, %s839
        %p841 = pneg %p76
        %p842 = pneg %p73
        %p843 = scmp.lt.s32.totalorder %s47, 1
        %s844 = scalar_select %p843, %s47, 1
        %s845 = smul.addr %s844, 2
        %s846 = smul.addr %s845, 8
        %s847 = scalar_lea.vmem %s1, %s846
        %p848 = pneg %p102
        %p849 = pneg %p99
        %p850 = pneg %p123
        %p851 = pneg %p120
        %p852 = pneg %p144
        %p853 = pneg %p141
        %p854 = pneg %p165
        %p855 = pneg %p162
        %p856 = pneg %p186
        %p857 = pneg %p183
        %p858 = pneg %p207
        %p859 = pneg %p204
        %p860 = pneg %p228
        %p861 = pneg %p225
        %p862 = pneg %p249
        %p863 = pneg %p246
        %p864 = pneg %p270
        %p865 = pneg %p267
        %p866 = pneg %p291
        %p867 = pneg %p288
        %p868 = pneg %p312
        %p869 = pneg %p309
        %p870 = pneg %p333
        %p871 = pneg %p330
        %p872 = pneg %p354
        %p873 = pneg %p351
        %p874 = pneg %p375
        %p875 = pneg %p372
        %p876 = pneg %p396
        %p877 = pneg %p393
        %p878 = pneg %p417
        %p879 = pneg %p414
        %p880 = pneg %p438
        %p881 = pneg %p435
        %p882 = pneg %p459
        %p883 = pneg %p456
        %s884 = sand.u32 %s43, 1
        %s885 = scalar_lea.sflag [#allocation4], %s884
        %s886 = sand.u32 %s472, 1
        %s887 = smul.addr %s886, 512
        %s888 = scalar_lea.vmem [#allocation29], %s887
        %p889 = pneg %p485
        %p890 = pneg %p482
        %p891 = pneg %p513
        %p892 = pneg %p510
        %s893 = sand.u32 %s500, 1
        %s894 = scalar_lea.sflag [#allocation5], %s893
        %s895 = sand.u32 %s500, 1
        %s896 = smul.addr %s895, 1024
        %s897 = scalar_lea.vmem [#allocation30], %s896
        %p898 = scmp.lt.s32.totalorder %s47, 1
        %s899 = scalar_select %p898, %s47, 1
        %s900 = smul.addr %s899, 2
        %s901 = smul.addr %s900, 8
        %s902 = scalar_lea.vmem %s0, %s901
        %p903 = scmp.lt.s32.totalorder %s47, 1
        %s904 = scalar_select %p903, %s47, 1
        %s905 = smul.addr %s904, 2
        %s906 = smul.addr %s905, 8
        %s907 = scalar_lea.vmem %s1, %s906
        %s908 = smul.u32 8, %s48
        %p909 = scmp.eq.s32.totalorder %s48, 0
        // Predicated region
        $region169: #{_lambda_.1} parent=99 // pred_check
          %p910 = pneg %p909
        $region170: #{_lambda_.1} parent=99 // pred_check_branch
          %912 = sbr.rel (%p910) target = $region172
        $region171: #{_lambda_.1} parent=99 // pred_region
          %v913 = vld [vmem:[%s902] sm:$0xff]
          %v914 = vld [vmem:[%s902 + $0x8] sm:$0xff]
          %v915 = vld [vmem:[%s907] sm:$0xff]
          %v916 = vld [vmem:[%s907 + $0x8] sm:$0xff]
          %v917 = vld [vmem:[#allocation8] sm:$0xff]
          %919 = vset.pattern.permute.xlu0 0
          %920 = vperm.xlu0 %919, %v917
          %v921 = vpop.permute.xlu0 %920
          %v923 = vadd.f32 %v915, %v921
          %v924 = vadd.f32 %v916, %v921
          %v925 = vld [vmem:[#allocation3] sm:$0xff]
          %v926 = vld [vmem:[#allocation3 + $0x8] sm:$0xff]
          %v927 = vld [vmem:[#allocation3 + $0x10] sm:$0x1]
          %v928 = vld [vmem:[#allocation3 + $0x18] sm:$0x1]
          %v929 = vld [vmem:[#allocation6] sm:$0xff]
          %931 = vset.pattern.permute.xlu0 0
          %932 = vperm.xlu0 %931, %v929
          %v933 = vpop.permute.xlu0 %932
          %v935 = vadd.f32 %v913, %v933
          %v936 = vadd.f32 %v914, %v933
          %937 = vrot.lane.b32.xlu0 %v935, 17
          %v938 = vpop.permute.xlu0 %937
          %939 = vrot.lane.b32.xlu0 %v923, 17
          %v940 = vpop.permute.xlu0 %939
          %941 = vrot.lane.b32.xlu0 %v936, 17
          %v942 = vpop.permute.xlu0 %941
          %943 = vrot.lane.b32.xlu0 %v924, 17
          %v944 = vpop.permute.xlu0 %943
          %v945 = vlaneseq
          %v946 = vand.u32 %v945, 127
          %vm947 = vcmp.lt.s32.totalorder %v946, 17
          %v948 = vsel %vm947, %v938, %v942
          %v949 = vsel %vm947, %v940, %v944
          %v950 = vsel %vm947, %v942, %v938
          %v951 = vsel %vm947, %v944, %v940
          %v952 = vlaneseq
          %v953 = vshrl.u32 %v952, 7
          %v954 = vsub.s32 0, %v953
          %v955 = vrot.slane %v925, %v954
          %v956 = vlaneseq
          %v957 = vshrl.u32 %v956, 7
          %v958 = vsub.s32 0, %v957
          %v959 = vrot.slane %v926, %v958
          %v960 = vmul.f32 %v950, %v955
          %v961 = vmul.f32 %v948, %v959
          %v962 = vmul.f32 %v951, %v955
          %v963 = vmul.f32 %v949, %v959
          %964 = vrot.lane.b32.xlu0 %v935, 16
          %v965 = vpop.permute.xlu0 %964
          %966 = vrot.lane.b32.xlu0 %v923, 16
          %v967 = vpop.permute.xlu0 %966
          %968 = vrot.lane.b32.xlu0 %v936, 16
          %v969 = vpop.permute.xlu0 %968
          %970 = vrot.lane.b32.xlu0 %v924, 16
          %v971 = vpop.permute.xlu0 %970
          %vm972 = vcmp.lt.s32.totalorder %v946, 16
          %v973 = vsel %vm972, %v965, %v969
          %v974 = vsel %vm972, %v967, %v971
          %v975 = vsel %vm972, %v969, %v965
          %v976 = vsel %vm972, %v971, %v967
          %v977 = vlaneseq
          %v978 = vshrl.u32 %v977, 7
          %v979 = vsub.s32 1, %v978
          %v980 = vrot.slane %v925, %v979
          %v981 = vlaneseq
          %v982 = vshrl.u32 %v981, 7
          %v983 = vsub.s32 1, %v982
          %v984 = vrot.slane %v926, %v983
          %v985 = vmul.f32 %v975, %v980
          %v986 = vmul.f32 %v973, %v984
          %v987 = vmul.f32 %v976, %v980
          %v988 = vmul.f32 %v974, %v984
          %989 = vrot.lane.b32.xlu0 %v935, 15
          %v990 = vpop.permute.xlu0 %989
          %991 = vrot.lane.b32.xlu0 %v923, 15
          %v992 = vpop.permute.xlu0 %991
          %993 = vrot.lane.b32.xlu0 %v936, 15
          %v994 = vpop.permute.xlu0 %993
          %995 = vrot.lane.b32.xlu0 %v924, 15
          %v996 = vpop.permute.xlu0 %995
          %vm997 = vcmp.lt.s32.totalorder %v946, 15
          %v998 = vsel %vm997, %v990, %v994
          %v999 = vsel %vm997, %v992, %v996
          %v1000 = vsel %vm997, %v994, %v990
          %v1001 = vsel %vm997, %v996, %v992
          %v1002 = vlaneseq
          %v1003 = vshrl.u32 %v1002, 7
          %v1004 = vsub.s32 2, %v1003
          %v1005 = vrot.slane %v925, %v1004
          %v1006 = vlaneseq
          %v1007 = vshrl.u32 %v1006, 7
          %v1008 = vsub.s32 2, %v1007
          %v1009 = vrot.slane %v926, %v1008
          %v1010 = vmul.f32 %v1000, %v1005
          %v1011 = vmul.f32 %v998, %v1009
          %v1012 = vmul.f32 %v1001, %v1005
          %v1013 = vmul.f32 %v999, %v1009
          %1014 = vrot.lane.b32.xlu0 %v935, 1
          %v1015 = vpop.permute.xlu0 %1014
          %1016 = vrot.lane.b32.xlu0 %v923, 1
          %v1017 = vpop.permute.xlu0 %1016
          %1018 = vrot.lane.b32.xlu0 %v936, 1
          %v1019 = vpop.permute.xlu0 %1018
          %1020 = vrot.lane.b32.xlu0 %v924, 1
          %v1021 = vpop.permute.xlu0 %1020
          %vm1022 = vcmp.lt.s32.totalorder %v946, 1
          %v1023 = vsel %vm1022, %v1015, %v1019
          %v1024 = vsel %vm1022, %v1017, %v1021
          %v1025 = vsel %vm1022, %v1019, %v1015
          %v1026 = vsel %vm1022, %v1021, %v1017
          %v1027 = vlaneseq
          %v1028 = vshrl.u32 %v1027, 7
          %v1029 = vsub.s32 3, %v1028
          %v1030 = vrot.slane %v925, %v1029
          %v1031 = vlaneseq
          %v1032 = vshrl.u32 %v1031, 7
          %v1033 = vsub.s32 3, %v1032
          %v1034 = vrot.slane %v926, %v1033
          %v1035 = vmul.f32 %v1025, %v1030
          %v1036 = vmul.f32 %v1023, %v1034
          %v1037 = vmul.f32 %v1026, %v1030
          %v1038 = vmul.f32 %v1024, %v1034
          %v1039 = vlaneseq
          %v1040 = vshrl.u32 %v1039, 7
          %v1041 = vsub.s32 4, %v1040
          %v1042 = vrot.slane %v925, %v1041
          %v1043 = vlaneseq
          %v1044 = vshrl.u32 %v1043, 7
          %v1045 = vsub.s32 4, %v1044
          %v1046 = vrot.slane %v926, %v1045
          %v1047 = vmul.f32 %v935, %v1042
          %v1048 = vmul.f32 %v936, %v1046
          %v1049 = vmul.f32 %v923, %v1042
          %v1050 = vmul.f32 %v924, %v1046
          %1051 = vrot.lane.b32.xlu0 %v935, 127
          %v1052 = vpop.permute.xlu0 %1051
          %1053 = vrot.lane.b32.xlu0 %v923, 127
          %v1054 = vpop.permute.xlu0 %1053
          %1055 = vrot.lane.b32.xlu0 %v936, 127
          %v1056 = vpop.permute.xlu0 %1055
          %1057 = vrot.lane.b32.xlu0 %v924, 127
          %v1058 = vpop.permute.xlu0 %1057
          %vm1059 = vcmp.lt.s32.totalorder %v946, 127
          %v1060 = vsel %vm1059, %v1052, %v1056
          %v1061 = vsel %vm1059, %v1054, %v1058
          %v1062 = vsel %vm1059, %v1056, %v1052
          %v1063 = vsel %vm1059, %v1058, %v1054
          %v1064 = vlaneseq
          %v1065 = vshrl.u32 %v1064, 7
          %v1066 = vsub.s32 5, %v1065
          %v1067 = vrot.slane %v925, %v1066
          %v1068 = vlaneseq
          %v1069 = vshrl.u32 %v1068, 7
          %v1070 = vsub.s32 5, %v1069
          %v1071 = vrot.slane %v926, %v1070
          %v1072 = vmul.f32 %v1060, %v1067
          %v1073 = vmul.f32 %v1062, %v1071
          %v1074 = vmul.f32 %v1061, %v1067
          %v1075 = vmul.f32 %v1063, %v1071
          %1076 = vrot.lane.b32.xlu0 %v935, 113
          %v1077 = vpop.permute.xlu0 %1076
          %1078 = vrot.lane.b32.xlu0 %v923, 113
          %v1079 = vpop.permute.xlu0 %1078
          %1080 = vrot.lane.b32.xlu0 %v936, 113
          %v1081 = vpop.permute.xlu0 %1080
          %1082 = vrot.lane.b32.xlu0 %v924, 113
          %v1083 = vpop.permute.xlu0 %1082
          %vm1084 = vcmp.lt.s32.totalorder %v946, 113
          %v1085 = vsel %vm1084, %v1077, %v1081
          %v1086 = vsel %vm1084, %v1079, %v1083
          %v1087 = vsel %vm1084, %v1081, %v1077
          %v1088 = vsel %vm1084, %v1083, %v1079
          %v1089 = vlaneseq
          %v1090 = vshrl.u32 %v1089, 7
          %v1091 = vsub.s32 6, %v1090
          %v1092 = vrot.slane %v925, %v1091
          %v1093 = vlaneseq
          %v1094 = vshrl.u32 %v1093, 7
          %v1095 = vsub.s32 6, %v1094
          %v1096 = vrot.slane %v926, %v1095
          %v1097 = vmul.f32 %v1085, %v1092
          %v1098 = vmul.f32 %v1087, %v1096
          %v1099 = vmul.f32 %v1086, %v1092
          %v1100 = vmul.f32 %v1088, %v1096
          %1101 = vrot.lane.b32.xlu0 %v935, 112
          %v1102 = vpop.permute.xlu0 %1101
          %1103 = vrot.lane.b32.xlu0 %v923, 112
          %v1104 = vpop.permute.xlu0 %1103
          %1105 = vrot.lane.b32.xlu0 %v936, 112
          %v1106 = vpop.permute.xlu0 %1105
          %1107 = vrot.lane.b32.xlu0 %v924, 112
          %v1108 = vpop.permute.xlu0 %1107
          %vm1109 = vcmp.lt.s32.totalorder %v946, 112
          %v1110 = vsel %vm1109, %v1102, %v1106
          %v1111 = vsel %vm1109, %v1104, %v1108
          %v1112 = vsel %vm1109, %v1106, %v1102
          %v1113 = vsel %vm1109, %v1108, %v1104
          %v1114 = vlaneseq
          %v1115 = vshrl.u32 %v1114, 7
          %v1116 = vsub.s32 7, %v1115
          %v1117 = vrot.slane %v925, %v1116
          %v1118 = vlaneseq
          %v1119 = vshrl.u32 %v1118, 7
          %v1120 = vsub.s32 7, %v1119
          %v1121 = vrot.slane %v926, %v1120
          %v1122 = vmul.f32 %v1110, %v1117
          %v1123 = vmul.f32 %v1112, %v1121
          %v1124 = vmul.f32 %v1111, %v1117
          %v1125 = vmul.f32 %v1113, %v1121
          %1126 = vrot.lane.b32.xlu0 %v935, 111
          %v1127 = vpop.permute.xlu0 %1126
          %1128 = vrot.lane.b32.xlu0 %v923, 111
          %v1129 = vpop.permute.xlu0 %1128
          %1130 = vrot.lane.b32.xlu0 %v936, 111
          %v1131 = vpop.permute.xlu0 %1130
          %1132 = vrot.lane.b32.xlu0 %v924, 111
          %v1133 = vpop.permute.xlu0 %1132
          %vm1134 = vcmp.lt.s32.totalorder %v946, 111
          %v1135 = vsel %vm1134, %v1127, %v1131
          %v1136 = vsel %vm1134, %v1129, %v1133
          %v1137 = vsel %vm1134, %v1131, %v1127
          %v1138 = vsel %vm1134, %v1133, %v1129
          %v1139 = vlaneseq
          %v1140 = vshrl.u32 %v1139, 7
          %v1141 = vsub.s32 0, %v1140
          %v1142 = vrot.slane %v927, %v1141
          %v1143 = vlaneseq
          %v1144 = vshrl.u32 %v1143, 7
          %v1145 = vsub.s32 0, %v1144
          %v1146 = vrot.slane %v928, %v1145
          %v1147 = vmul.f32 %v1135, %v1142
          %v1148 = vmul.f32 %v1137, %v1146
          %v1149 = vmul.f32 %v1136, %v1142
          %v1150 = vmul.f32 %v1138, %v1146
          %v1151 = vld [vmem:[#allocation9] sm:$0xff]
          %v1152 = vld [vmem:[#allocation9 + $0x8] sm:$0xff]
          %v1153 = vld [vmem:[#allocation11] sm:$0xff]
          %1155 = vset.pattern.permute.xlu0 0
          %1156 = vperm.xlu0 %1155, %v1153
          %v1157 = vpop.permute.xlu0 %1156
          %vm1159 = vcmask 130048
          %v1161 = vsel %vm1159, %v1152, 0
          %1163 = vmatprep.subr.mxu0 %v961
          %1164 = vmatpush1.msra.mxu0 %v960
          %1165 = vmatprep.subr.mxu0 %v963
          %1166 = vmatpush1.msra.mxu0 %v962
          %1167 = vmatprep.subr.mxu0 %v986
          %1168 = vmatpush1.msra.mxu0 %v985
          %1169 = vmatprep.subr.mxu0 %v988
          %1170 = vmatpush1.msra.mxu0 %v987
          %1171 = vmatprep.subr.mxu0 %v1011
          %1172 = vmatpush1.msra.mxu0 %v1010
          %1173 = vmatprep.subr.mxu0 %v1013
          %1174 = vmatpush1.msra.mxu0 %v1012
          %1175 = vmatprep.subr.mxu0 %v1036
          %1176 = vmatpush1.msra.mxu0 %v1035
          %1177 = vmatprep.subr.mxu0 %v1038
          %1178 = vmatpush1.msra.mxu0 %v1037
          %1179 = vmatprep.subr.mxu0 %v1048
          %1180 = vmatpush1.msra.mxu0 %v1047
          %1181 = vmatprep.subr.mxu0 %v1050
          %1182 = vmatpush1.msra.mxu0 %v1049
          %1183 = vmatprep.subr.mxu0 %v1073
          %1184 = vmatpush1.msra.mxu0 %v1072
          %1185 = vmatprep.subr.mxu0 %v1075
          %1186 = vmatpush1.msra.mxu0 %v1074
          %1187 = vmatprep.subr.mxu0 %v1098
          %1188 = vmatpush1.msra.mxu0 %v1097
          %1189 = vmatprep.subr.mxu0 %v1100
          %1190 = vmatpush1.msra.mxu0 %v1099
          %1191 = vmatprep.subr.mxu0 %v1123
          %1192 = vmatpush1.msra.mxu0 %v1122
          %1193 = vmatprep.subr.mxu0 %v1125
          %1194 = vmatpush1.msra.mxu0 %v1124
          %1195 = vmatprep.subr.mxu0 %v1148
          %1196 = vmatpush1.msra.mxu0 %v1147
          %1197 = vmatprep.subr.mxu0 %v1150
          %1198 = vmatpush1.msra.mxu0 %v1149
          %1199 = vmatprep.subr.mxu0 0.0
          %1200 = vmatpush1.msra.mxu0 0.0
          %1201 = vmatprep.subr.mxu0 0.0
          %1202 = vmatpush1.msra.mxu0 0.0
          %1203 = vmatprep.subr.mxu0 0.0
          %1204 = vmatpush1.msra.mxu0 0.0
          %1205 = vmatprep.subr.mxu0 0.0
          %1206 = vmatpush1.msra.mxu0 0.0
          %1207 = vmatprep.subr.mxu0 0.0
          %1208 = vmatpush1.msra.mxu0 0.0
          %1209 = vmatprep.subr.mxu0 0.0
          %1210 = vmatpush1.msra.mxu0 0.0
          %1211 = vmatprep.subr.mxu0 0.0
          %1212 = vmatpush1.msra.mxu0 0.0
          %1213 = vmatprep.subr.mxu0 0.0
          %1214 = vmatpush1.msra.mxu0 0.0
          %1215 = vmatprep.subr.mxu0 0.0
          %1216 = vmatpush1.msra.mxu0 0.0
          %1217 = vmatprep.subr.mxu0 0.0
          %1218 = vmatpush1.msra.mxu0 0.0
          %1219 = vmatprep.subr.mxu0 0.0
          %1220 = vmatpush1.msra.mxu0 0.0
          %1221 = vmatprep.subr.mxu0 0.0
          %1222 = vmatpush1.msra.mxu0 0.0
          %1223 = vmatprep.subr.mxu0 0.0
          %1224 = vmatpush1.msra.mxu0 0.0
          %1225 = vmatprep.subr.mxu0 0.0
          %1226 = vmatpush1.msra.mxu0 0.0
          %1227 = vmatprep.mubr.f32.mxu0 %v1161
          %1228 = vmatmul.mubr.f32.gmra.mrb[0].mxu0 %v1151
          %v1229 = vpop.f32.mrb[0].mxu0
          %v1230 = vadd.f32 %v1157, %v1229
          %v1231 = vpop.f32.mrb[0].mxu0
          %v1232 = vadd.f32 %v1157, %v1231
          %1233 = vdwg.mxu0
          %v1234 = vmax.f32 %v1230, 0.0
          %v1235 = vmax.f32 %v1232, 0.0
          %1236 = vrot.lane.b32.xlu0 %v1234, 17
          %v1237 = vpop.permute.xlu0 %1236
          %1238 = vrot.lane.b32.xlu0 %v1235, 17
          %v1239 = vpop.permute.xlu0 %1238
          %v1240 = vsel %vm947, %v1237, %v1239
          %v1241 = vsel %vm947, %v1239, %v1237
          %v1242 = vmul.f32 %v1241, %v955
          %v1243 = vmul.f32 %v1240, %v959
          %1244 = vrot.lane.b32.xlu0 %v1234, 16
          %v1245 = vpop.permute.xlu0 %1244
          %1246 = vrot.lane.b32.xlu0 %v1235, 16
          %v1247 = vpop.permute.xlu0 %1246
          %v1248 = vsel %vm972, %v1245, %v1247
          %v1249 = vsel %vm972, %v1247, %v1245
          %v1250 = vmul.f32 %v1249, %v980
          %v1251 = vmul.f32 %v1248, %v984
          %1252 = vrot.lane.b32.xlu0 %v1234, 15
          %v1253 = vpop.permute.xlu0 %1252
          %1254 = vrot.lane.b32.xlu0 %v1235, 15
          %v1255 = vpop.permute.xlu0 %1254
          %v1256 = vsel %vm997, %v1253, %v1255
          %v1257 = vsel %vm997, %v1255, %v1253
          %v1258 = vmul.f32 %v1257, %v1005
          %v1259 = vmul.f32 %v1256, %v1009
          %1260 = vrot.lane.b32.xlu0 %v1234, 1
          %v1261 = vpop.permute.xlu0 %1260
          %1262 = vrot.lane.b32.xlu0 %v1235, 1
          %v1263 = vpop.permute.xlu0 %1262
          %v1264 = vsel %vm1022, %v1261, %v1263
          %v1265 = vsel %vm1022, %v1263, %v1261
          %v1266 = vmul.f32 %v1265, %v1030
          %v1267 = vmul.f32 %v1264, %v1034
          %v1268 = vmul.f32 %v1234, %v1042
          %v1269 = vmul.f32 %v1235, %v1046
          %1270 = vrot.lane.b32.xlu0 %v1234, 127
          %v1271 = vpop.permute.xlu0 %1270
          %1272 = vrot.lane.b32.xlu0 %v1235, 127
          %v1273 = vpop.permute.xlu0 %1272
          %v1274 = vsel %vm1059, %v1271, %v1273
          %v1275 = vsel %vm1059, %v1273, %v1271
          %v1276 = vmul.f32 %v1274, %v1067
          %v1277 = vmul.f32 %v1275, %v1071
          %1278 = vrot.lane.b32.xlu0 %v1234, 113
          %v1279 = vpop.permute.xlu0 %1278
          %1280 = vrot.lane.b32.xlu0 %v1235, 113
          %v1281 = vpop.permute.xlu0 %1280
          %v1282 = vsel %vm1084, %v1279, %v1281
          %v1283 = vsel %vm1084, %v1281, %v1279
          %v1284 = vmul.f32 %v1282, %v1092
          %v1285 = vmul.f32 %v1283, %v1096
          %1286 = vrot.lane.b32.xlu0 %v1234, 112
          %v1287 = vpop.permute.xlu0 %1286
          %1288 = vrot.lane.b32.xlu0 %v1235, 112
          %v1289 = vpop.permute.xlu0 %1288
          %v1290 = vsel %vm1109, %v1287, %v1289
          %v1291 = vsel %vm1109, %v1289, %v1287
          %v1292 = vmul.f32 %v1290, %v1117
          %v1293 = vmul.f32 %v1291, %v1121
          %1294 = vrot.lane.b32.xlu0 %v1234, 111
          %v1295 = vpop.permute.xlu0 %1294
          %1296 = vrot.lane.b32.xlu0 %v1235, 111
          %v1297 = vpop.permute.xlu0 %1296
          %v1298 = vsel %vm1134, %v1295, %v1297
          %v1299 = vsel %vm1134, %v1297, %v1295
          %v1300 = vmul.f32 %v1298, %v1142
          %v1301 = vmul.f32 %v1299, %v1146
          %v1302 = vld [vmem:[#allocation12] sm:$0xff]
          %v1303 = vld [vmem:[#allocation14] sm:$0xff]
          %1305 = vset.pattern.permute.xlu0 0
          %1306 = vperm.xlu0 %1305, %v1303
          %v1307 = vpop.permute.xlu0 %1306
          %vm1309 = vcmask 588800
          %v1311 = vsel %vm1309, %v1302, 0
          %1313 = vmatprep.subr.mxu0 %v1243
          %1314 = vmatpush1.msra.mxu0 %v1242
          %1315 = vmatprep.subr.mxu0 %v1251
          %1316 = vmatpush1.msra.mxu0 %v1250
          %1317 = vmatprep.subr.mxu0 %v1259
          %1318 = vmatpush1.msra.mxu0 %v1258
          %1319 = vmatprep.subr.mxu0 %v1267
          %1320 = vmatpush1.msra.mxu0 %v1266
          %1321 = vmatprep.subr.mxu0 %v1269
          %1322 = vmatpush1.msra.mxu0 %v1268
          %1323 = vmatprep.subr.mxu0 %v1277
          %1324 = vmatpush1.msra.mxu0 %v1276
          %1325 = vmatprep.subr.mxu0 %v1285
          %1326 = vmatpush1.msra.mxu0 %v1284
          %1327 = vmatprep.subr.mxu0 %v1293
          %1328 = vmatpush1.msra.mxu0 %v1292
          %1329 = vmatprep.subr.mxu0 %v1301
          %1330 = vmatpush1.msra.mxu0 %v1300
          %1331 = vmatprep.subr.mxu0 0.0
          %1332 = vmatpush1.msra.mxu0 0.0
          %1333 = vmatprep.subr.mxu0 0.0
          %1334 = vmatpush1.msra.mxu0 0.0
          %1335 = vmatprep.subr.mxu0 0.0
          %1336 = vmatpush1.msra.mxu0 0.0
          %1337 = vmatprep.subr.mxu0 0.0
          %1338 = vmatpush1.msra.mxu0 0.0
          %1339 = vmatprep.subr.mxu0 0.0
          %1340 = vmatpush1.msra.mxu0 0.0
          %1341 = vmatprep.subr.mxu0 0.0
          %1342 = vmatpush1.msra.mxu0 0.0
          %1343 = vmatprep.subr.mxu0 0.0
          %1344 = vmatpush1.msra.mxu0 0.0
          %1345 = vmatprep.subr.mxu0 0.0
          %1346 = vmatpush1.msra.mxu0 0.0
          %1347 = vmatprep.subr.mxu0 0.0
          %1348 = vmatpush1.msra.mxu0 0.0
          %1349 = vmatprep.subr.mxu0 0.0
          %1350 = vmatpush1.msra.mxu0 0.0
          %1351 = vmatprep.subr.mxu0 0.0
          %1352 = vmatpush1.msra.mxu0 0.0
          %1353 = vmatprep.subr.mxu0 0.0
          %1354 = vmatpush1.msra.mxu0 0.0
          %1355 = vmatprep.subr.mxu0 0.0
          %1356 = vmatpush1.msra.mxu0 0.0
          %1357 = vmatprep.subr.mxu0 0.0
          %1358 = vmatpush1.msra.mxu0 0.0
          %1359 = vmatprep.subr.mxu0 0.0
          %1360 = vmatpush1.msra.mxu0 0.0
          %1361 = vmatprep.subr.mxu0 0.0
          %1362 = vmatpush1.msra.mxu0 0.0
          %1363 = vmatprep.subr.mxu0 0.0
          %1364 = vmatpush1.msra.mxu0 0.0
          %1365 = vmatprep.subr.mxu0 0.0
          %1366 = vmatpush1.msra.mxu0 0.0
          %1367 = vmatprep.subr.mxu0 0.0
          %1368 = vmatpush1.msra.mxu0 0.0
          %1369 = vmatprep.subr.mxu0 0.0
          %1370 = vmatpush1.msra.mxu0 0.0
          %1371 = vmatprep.subr.mxu0 0.0
          %1372 = vmatpush1.msra.mxu0 0.0
          %1373 = vmatprep.subr.mxu0 0.0
          %1374 = vmatpush1.msra.mxu0 0.0
          %1375 = vmatprep.subr.mxu0 0.0
          %1376 = vmatpush1.msra.mxu0 0.0
          %1377 = vmatprep.mubr.f32.mxu0 0.0
          %1378 = vmatmul.mubr.f32.gmra.mrb[0].mxu0 %v1311
          %v1379 = vpop.f32.mrb[0].mxu0
          %v1380 = vadd.f32 %v1307, %v1379
          %v1381 = vpop.f32.mrb[0].mxu0
          %v1382 = vadd.f32 %v1307, %v1381
          %1383 = vdwg.mxu0
          %v1384 = vadd.f32 %v1380, %v913
          %v1385 = vadd.f32 %v1382, %v914
          %v1386 = vld [vmem:[#allocation18] sm:$0xff]
          %v1387 = vld [vmem:[#allocation18 + $0x8] sm:$0xff]
          %v1388 = vld [vmem:[#allocation20] sm:$0xff]
          %v1389 = vld [vmem:[#allocation20 + $0x8] sm:$0xff]
          %1391 = vset.pattern.permute.xlu0 0
          %1392 = vperm.xlu0 %1391, %v1388
          %v1393 = vpop.permute.xlu0 %1392
          %1396 = vset.pattern.permute.xlu0 0
          %1397 = vperm.xlu0 %1396, %v1389
          %v1398 = vpop.permute.xlu0 %1397
          %vm1400 = vcmask 64512
          %v1402 = vsel %vm1400, %v1386, 0
          %v1405 = vsel %vm1400, %v1387, 0
          %1407 = vmatprep.subr.mxu0 %v1385
          %1408 = vmatpush1.msra.mxu0 %v1384
          %1409 = vmatprep.subr.mxu0 0.0
          %1410 = vmatpush1.msra.mxu0 0.0
          %1411 = vmatprep.subr.mxu0 0.0
          %1412 = vmatpush1.msra.mxu0 0.0
          %1413 = vmatprep.subr.mxu0 0.0
          %1414 = vmatpush1.msra.mxu0 0.0
          %1415 = vmatprep.subr.mxu0 0.0
          %1416 = vmatpush1.msra.mxu0 0.0
          %1417 = vmatprep.subr.mxu0 0.0
          %1418 = vmatpush1.msra.mxu0 0.0
          %1419 = vmatprep.subr.mxu0 0.0
          %1420 = vmatpush1.msra.mxu0 0.0
          %1421 = vmatprep.subr.mxu0 0.0
          %1422 = vmatpush1.msra.mxu0 0.0
          %1423 = vmatprep.subr.mxu0 0.0
          %1424 = vmatpush1.msra.mxu0 0.0
          %1425 = vmatprep.subr.mxu0 0.0
          %1426 = vmatpush1.msra.mxu0 0.0
          %1427 = vmatprep.subr.mxu0 0.0
          %1428 = vmatpush1.msra.mxu0 0.0
          %1429 = vmatprep.subr.mxu0 0.0
          %1430 = vmatpush1.msra.mxu0 0.0
          %1431 = vmatprep.subr.mxu0 0.0
          %1432 = vmatpush1.msra.mxu0 0.0
          %1433 = vmatprep.subr.mxu0 0.0
          %1434 = vmatpush1.msra.mxu0 0.0
          %1435 = vmatprep.subr.mxu0 0.0
          %1436 = vmatpush1.msra.mxu0 0.0
          %1437 = vmatprep.subr.mxu0 0.0
          %1438 = vmatpush1.msra.mxu0 0.0
          %1439 = vmatprep.subr.mxu0 0.0
          %1440 = vmatpush1.msra.mxu0 0.0
          %1441 = vmatprep.subr.mxu0 0.0
          %1442 = vmatpush1.msra.mxu0 0.0
          %1443 = vmatprep.subr.mxu0 0.0
          %1444 = vmatpush1.msra.mxu0 0.0
          %1445 = vmatprep.subr.mxu0 0.0
          %1446 = vmatpush1.msra.mxu0 0.0
          %1447 = vmatprep.subr.mxu0 0.0
          %1448 = vmatpush1.msra.mxu0 0.0
          %1449 = vmatprep.subr.mxu0 0.0
          %1450 = vmatpush1.msra.mxu0 0.0
          %1451 = vmatprep.subr.mxu0 0.0
          %1452 = vmatpush1.msra.mxu0 0.0
          %1453 = vmatprep.subr.mxu0 0.0
          %1454 = vmatpush1.msra.mxu0 0.0
          %1455 = vmatprep.subr.mxu0 0.0
          %1456 = vmatpush1.msra.mxu0 0.0
          %1457 = vmatprep.subr.mxu0 0.0
          %1458 = vmatpush1.msra.mxu0 0.0
          %1459 = vmatprep.subr.mxu0 0.0
          %1460 = vmatpush1.msra.mxu0 0.0
          %1461 = vmatprep.subr.mxu0 0.0
          %1462 = vmatpush1.msra.mxu0 0.0
          %1463 = vmatprep.subr.mxu0 0.0
          %1464 = vmatpush1.msra.mxu0 0.0
          %1465 = vmatprep.subr.mxu0 0.0
          %1466 = vmatpush1.msra.mxu0 0.0
          %1467 = vmatprep.subr.mxu0 0.0
          %1468 = vmatpush1.msra.mxu0 0.0
          %1469 = vmatprep.subr.mxu0 0.0
          %1470 = vmatpush1.msra.mxu0 0.0
          %1471 = vmatprep.mubr.f32.mxu0 0.0
          %1472 = vmatmul.mubr.f32.gmra.mrb[0].mxu0 %v1402
          %v1473 = vpop.f32.mrb[0].mxu0
          %v1474 = vadd.f32 %v1393, %v1473
          %v1475 = vpop.f32.mrb[0].mxu0
          %v1476 = vadd.f32 %v1393, %v1475
          %1477 = vmatprep.mubr.f32.mxu0 0.0
          %1478 = vmatmul.mubr.f32.gmra.mrb[0].mxu0 %v1405
          %v1479 = vpop.f32.mrb[0].mxu0
          %v1480 = vadd.f32 %v1398, %v1479
          %v1481 = vpop.f32.mrb[0].mxu0
          %v1482 = vadd.f32 %v1398, %v1481
          %1483 = vdwg.mxu0
          %v1484 = vmax.f32 %v1384, %v1385
          %1485 = vmax.xlane.f32.xlu0 %v1484
          %v1486 = vpop.xlane.xlu0 %1485
          %v1487 = vld [vmem:[#allocation15] sm:$0xff]
          %v1488 = vld [vmem:[#allocation17] sm:$0xff]
          %v1489 = vlaneseq
          %v1490 = vshrl.u32 %v1489, 7
          %v1491 = vsub.s32 0, %v1490
          %v1492 = vrot.slane %v1486, %v1491
          %v1493 = vmul.f32 %v1487, %v1492
          %v1494 = vadd.f32 %v1488, %v1493
          %v1495 = vlaneseq
          %v1496 = vshrl.u32 %v1495, 7
          %v1497 = vsub.s32 1, %v1496
          %v1498 = vrot.slane %v1486, %v1497
          %v1499 = vmul.f32 %v1487, %v1498
          %1501 = vrot.lane.b32.xlu0 %v1499, 127
          %v1502 = vpop.permute.xlu0 %1501
          %v1504 = vadd.f32 %v1494, %v1502
          %v1505 = vlaneseq
          %v1506 = vshrl.u32 %v1505, 7
          %v1507 = vsub.s32 2, %v1506
          %v1508 = vrot.slane %v1486, %v1507
          %v1509 = vmul.f32 %v1487, %v1508
          %1511 = vrot.lane.b32.xlu0 %v1509, 126
          %v1512 = vpop.permute.xlu0 %1511
          %v1514 = vadd.f32 %v1504, %v1512
          %v1515 = vlaneseq
          %v1516 = vshrl.u32 %v1515, 7
          %v1517 = vsub.s32 3, %v1516
          %v1518 = vrot.slane %v1486, %v1517
          %v1519 = vmul.f32 %v1487, %v1518
          %1521 = vrot.lane.b32.xlu0 %v1519, 125
          %v1522 = vpop.permute.xlu0 %1521
          %v1524 = vadd.f32 %v1514, %v1522
          %v1525 = vlaneseq
          %v1526 = vshrl.u32 %v1525, 7
          %v1527 = vsub.s32 4, %v1526
          %v1528 = vrot.slane %v1486, %v1527
          %v1529 = vmul.f32 %v1487, %v1528
          %1531 = vrot.lane.b32.xlu0 %v1529, 124
          %v1532 = vpop.permute.xlu0 %1531
          %v1534 = vadd.f32 %v1524, %v1532
          %v1535 = vlaneseq
          %v1536 = vshrl.u32 %v1535, 7
          %v1537 = vsub.s32 5, %v1536
          %v1538 = vrot.slane %v1486, %v1537
          %v1539 = vmul.f32 %v1487, %v1538
          %1541 = vrot.lane.b32.xlu0 %v1539, 123
          %v1542 = vpop.permute.xlu0 %1541
          %v1544 = vadd.f32 %v1534, %v1542
          %v1545 = vlaneseq
          %v1546 = vshrl.u32 %v1545, 7
          %v1547 = vsub.s32 6, %v1546
          %v1548 = vrot.slane %v1486, %v1547
          %v1549 = vmul.f32 %v1487, %v1548
          %1551 = vrot.lane.b32.xlu0 %v1549, 122
          %v1552 = vpop.permute.xlu0 %1551
          %v1554 = vadd.f32 %v1544, %v1552
          %v1555 = vlaneseq
          %v1556 = vshrl.u32 %v1555, 7
          %v1557 = vsub.s32 7, %v1556
          %v1558 = vrot.slane %v1486, %v1557
          %v1559 = vmul.f32 %v1487, %v1558
          %1561 = vrot.lane.b32.xlu0 %v1559, 121
          %v1562 = vpop.permute.xlu0 %1561
          %v1564 = vadd.f32 %v1554, %v1562
          %1566 = vset.pattern.permute.xlu0 0
          %1567 = vperm.xlu0 %1566, %v1564
          %v1568 = vpop.permute.xlu0 %1567
          %v1570 = vmul.f32 %v1568, %v1474
          %v1571 = vmul.f32 %v1568, %v1476
          %v1572 = vrot.slane %v1570, 4
          %v1573 = vadd.f32 %v1570, %v1572
          %v1574 = vrot.slane %v1573, 2
          %v1575 = vadd.f32 %v1573, %v1574
          %v1576 = vrot.slane %v1575, 1
          %v1577 = vadd.f32 %v1575, %v1576
          %v1578 = vrot.slane %v1571, 4
          %v1579 = vadd.f32 %v1571, %v1578
          %v1580 = vrot.slane %v1579, 2
          %v1581 = vadd.f32 %v1579, %v1580
          %v1582 = vrot.slane %v1581, 1
          %v1583 = vadd.f32 %v1581, %v1582
          %v1584 = vmul.f32 %v1577, 0.35355338
          %v1585 = vmul.f32 %v1583, 0.35355338
          %v1586 = vmax.f32 %v1584, %v1585
          %1587 = vmax.xlane.f32.xlu0 %v1586
          %v1588 = vpop.xlane.xlu0 %1587
          %v1589 = vsub.f32 %v1584, %v1588
          %v1590 = vsub.f32 %v1585, %v1588
          %v1591 = vmul.f32 %v1589, 1.442695
          %v1592 = vpow.pop %v1591
          %v1593 = vmul.f32 %v1590, 1.442695
          %v1594 = vpow.pop %v1593
          %v1595 = vadd.f32 %v1592, %v1594
          %1596 = vadd.xlane.f32.xlu0 %v1595
          %v1597 = vpop.xlane.xlu0 %1596
          %v1598 = vrcp.pop %v1597
          %v1599 = vmul.f32 %v1592, %v1598
          %v1600 = vmul.f32 %v1594, %v1598
          %v1601 = vmul.f32 %v1480, %v1599
          %v1602 = vmul.f32 %v1482, %v1600
          %v1603 = vadd.f32 %v1601, %v1602
          %1604 = vadd.xlane.f32.xlu0 %v1603
          %v1605 = vpop.xlane.xlu0 %1604
          %v1606 = vld [vmem:[%s17] sm:$0x1]
          %v1608 = vlaneseq
          %v1609 = vshrl.u32 %v1608, 7
          %v1610 = vsub.s32 0, %v1609
          %v1611 = vrot.slane %v1606, %v1610
          %v1613 = vadd.f32 %v1605, %v1611
          %1614 = vrot.lane.b32.xlu0 %v1611, 127
          %v1615 = vpop.permute.xlu0 %1614
          %v1617 = vadd.f32 %v1613, %v1615
          %v1618 = vld [vmem:[#allocation21] sm:$0xff]
          %1619 = vrot.lane.b32.xlu0 %v1384, 17
          %v1620 = vpop.permute.xlu0 %1619
          %1621 = vrot.lane.b32.xlu0 %v1385, 17
          %v1622 = vpop.permute.xlu0 %1621
          %v1623 = vsel %vm947, %v1620, %v1622
          %v1624 = vsel %vm947, %v1622, %v1620
          %v1625 = vmul.f32 %v1624, %v955
          %v1626 = vmul.f32 %v1623, %v959
          %1627 = vrot.lane.b32.xlu0 %v1384, 16
          %v1628 = vpop.permute.xlu0 %1627
          %1629 = vrot.lane.b32.xlu0 %v1385, 16
          %v1630 = vpop.permute.xlu0 %1629
          %v1631 = vsel %vm972, %v1628, %v1630
          %v1632 = vsel %vm972, %v1630, %v1628
          %v1633 = vmul.f32 %v1632, %v980
          %v1634 = vmul.f32 %v1631, %v984
          %1635 = vrot.lane.b32.xlu0 %v1384, 15
          %v1636 = vpop.permute.xlu0 %1635
          %1637 = vrot.lane.b32.xlu0 %v1385, 15
          %v1638 = vpop.permute.xlu0 %1637
          %v1639 = vsel %vm997, %v1636, %v1638
          %v1640 = vsel %vm997, %v1638, %v1636
          %v1641 = vmul.f32 %v1640, %v1005
          %v1642 = vmul.f32 %v1639, %v1009
          %1643 = vrot.lane.b32.xlu0 %v1384, 1
          %v1644 = vpop.permute.xlu0 %1643
          %1645 = vrot.lane.b32.xlu0 %v1385, 1
          %v1646 = vpop.permute.xlu0 %1645
          %v1647 = vsel %vm1022, %v1644, %v1646
          %v1648 = vsel %vm1022, %v1646, %v1644
          %v1649 = vmul.f32 %v1648, %v1030
          %v1650 = vmul.f32 %v1647, %v1034
          %v1651 = vmul.f32 %v1384, %v1042
          %v1652 = vmul.f32 %v1385, %v1046
          %1653 = vrot.lane.b32.xlu0 %v1384, 127
          %v1654 = vpop.permute.xlu0 %1653
          %1655 = vrot.lane.b32.xlu0 %v1385, 127
          %v1656 = vpop.permute.xlu0 %1655
          %v1657 = vsel %vm1059, %v1654, %v1656
          %v1658 = vsel %vm1059, %v1656, %v1654
          %v1659 = vmul.f32 %v1657, %v1067
          %v1660 = vmul.f32 %v1658, %v1071
          %1661 = vrot.lane.b32.xlu0 %v1384, 113
          %v1662 = vpop.permute.xlu0 %1661
          %1663 = vrot.lane.b32.xlu0 %v1385, 113
          %v1664 = vpop.permute.xlu0 %1663
          %v1665 = vsel %vm1084, %v1662, %v1664
          %v1666 = vsel %vm1084, %v1664, %v1662
          %v1667 = vmul.f32 %v1665, %v1092
          %v1668 = vmul.f32 %v1666, %v1096
          %1669 = vrot.lane.b32.xlu0 %v1384, 112
          %v1670 = vpop.permute.xlu0 %1669
          %1671 = vrot.lane.b32.xlu0 %v1385, 112
          %v1672 = vpop.permute.xlu0 %1671
          %v1673 = vsel %vm1109, %v1670, %v1672
          %v1674 = vsel %vm1109, %v1672, %v1670
          %v1675 = vmul.f32 %v1673, %v1117
          %v1676 = vmul.f32 %v1674, %v1121
          %1677 = vrot.lane.b32.xlu0 %v1384, 111
          %v1678 = vpop.permute.xlu0 %1677
          %1679 = vrot.lane.b32.xlu0 %v1385, 111
          %v1680 = vpop.permute.xlu0 %1679
          %v1681 = vsel %vm1134, %v1678, %v1680
          %v1682 = vsel %vm1134, %v1680, %v1678
          %v1683 = vmul.f32 %v1681, %v1142
          %v1684 = vmul.f32 %v1682, %v1146
          %v1685 = vld [vmem:[#allocation23] sm:$0xff]
          %1687 = vset.pattern.permute.xlu0 0
          %1688 = vperm.xlu0 %1687, %v1618
          %v1689 = vpop.permute.xlu0 %1688
          %v1691 = vmul.f32 %v1689, %v1625
          %v1692 = vmul.f32 %v1689, %v1626
          %1694 = vset.pattern.permute.xlu0 0
          %1695 = vperm.xlu0 %1694, %v1685
          %v1696 = vpop.permute.xlu0 %1695
          %v1698 = vadd.f32 %v1696, %v1691
          %v1699 = vadd.f32 %v1696, %v1692
          %1700 = vset.pattern.permute.xlu0 1
          %1701 = vperm.xlu0 %1700, %v1618
          %v1702 = vpop.permute.xlu0 %1701
          %v1704 = vmul.f32 %v1702, %v1633
          %v1705 = vmul.f32 %v1702, %v1634
          %v1706 = vadd.f32 %v1698, %v1704
          %v1707 = vadd.f32 %v1699, %v1705
          %1708 = vset.pattern.permute.xlu0 2
          %1709 = vperm.xlu0 %1708, %v1618
          %v1710 = vpop.permute.xlu0 %1709
          %v1712 = vmul.f32 %v1710, %v1641
          %v1713 = vmul.f32 %v1710, %v1642
          %v1714 = vadd.f32 %v1706, %v1712
          %v1715 = vadd.f32 %v1707, %v1713
          %1716 = vset.pattern.permute.xlu0 3
          %1717 = vperm.xlu0 %1716, %v1618
          %v1718 = vpop.permute.xlu0 %1717
          %v1720 = vmul.f32 %v1718, %v1649
          %v1721 = vmul.f32 %v1718, %v1650
          %v1722 = vadd.f32 %v1714, %v1720
          %v1723 = vadd.f32 %v1715, %v1721
          %1724 = vset.pattern.permute.xlu0 4
          %1725 = vperm.xlu0 %1724, %v1618
          %v1726 = vpop.permute.xlu0 %1725
          %v1728 = vmul.f32 %v1726, %v1651
          %v1729 = vmul.f32 %v1726, %v1652
          %v1730 = vadd.f32 %v1722, %v1728
          %v1731 = vadd.f32 %v1723, %v1729
          %1732 = vset.pattern.permute.xlu0 5
          %1733 = vperm.xlu0 %1732, %v1618
          %v1734 = vpop.permute.xlu0 %1733
          %v1736 = vmul.f32 %v1734, %v1659
          %v1737 = vmul.f32 %v1734, %v1660
          %v1738 = vadd.f32 %v1730, %v1736
          %v1739 = vadd.f32 %v1731, %v1737
          %1740 = vset.pattern.permute.xlu0 6
          %1741 = vperm.xlu0 %1740, %v1618
          %v1742 = vpop.permute.xlu0 %1741
          %v1744 = vmul.f32 %v1742, %v1667
          %v1745 = vmul.f32 %v1742, %v1668
          %v1746 = vadd.f32 %v1738, %v1744
          %v1747 = vadd.f32 %v1739, %v1745
          %1748 = vset.pattern.permute.xlu0 7
          %1749 = vperm.xlu0 %1748, %v1618
          %v1750 = vpop.permute.xlu0 %1749
          %v1752 = vmul.f32 %v1750, %v1675
          %v1753 = vmul.f32 %v1750, %v1676
          %v1754 = vadd.f32 %v1746, %v1752
          %v1755 = vadd.f32 %v1747, %v1753
          %1756 = vset.pattern.permute.xlu0 8
          %1757 = vperm.xlu0 %1756, %v1618
          %v1758 = vpop.permute.xlu0 %1757
          %v1760 = vmul.f32 %v1758, %v1683
          %v1761 = vmul.f32 %v1758, %v1684
          %v1762 = vadd.f32 %v1754, %v1760
          %v1763 = vadd.f32 %v1755, %v1761
          %1765 = vset.pattern.permute.xlu0 0
          %1766 = vperm.xlu0 %1765, %v1617
          %v1767 = vpop.permute.xlu0 %1766
          %v1769 = vadd.f32 %v1762, %v1767
          %v1770 = vadd.f32 %v1763, %v1767
          %v1771 = vadd.f32 %v1769, %v923
          %v1772 = vadd.f32 %v1770, %v924
          %v1773 = vld [vmem:[#allocation24] sm:$0xff]
          %v1774 = vld [vmem:[#allocation26] sm:$0xff]
          %1776 = vset.pattern.permute.xlu0 0
          %1777 = vperm.xlu0 %1776, %v1774
          %v1778 = vpop.permute.xlu0 %1777
          %v1781 = vsel %vm1400, %v1773, 0
          %1783 = vmatprep.subr.mxu0 %v1772
          %1784 = vmatpush1.msra.mxu0 %v1771
          %1785 = vmatprep.subr.mxu0 0.0
          %1786 = vmatpush1.msra.mxu0 0.0
          %1787 = vmatprep.subr.mxu0 0.0
          %1788 = vmatpush1.msra.mxu0 0.0
          %1789 = vmatprep.subr.mxu0 0.0
          %1790 = vmatpush1.msra.mxu0 0.0
          %1791 = vmatprep.subr.mxu0 0.0
          %1792 = vmatpush1.msra.mxu0 0.0
          %1793 = vmatprep.subr.mxu0 0.0
          %1794 = vmatpush1.msra.mxu0 0.0
          %1795 = vmatprep.subr.mxu0 0.0
          %1796 = vmatpush1.msra.mxu0 0.0
          %1797 = vmatprep.subr.mxu0 0.0
          %1798 = vmatpush1.msra.mxu0 0.0
          %1799 = vmatprep.subr.mxu0 0.0
          %1800 = vmatpush1.msra.mxu0 0.0
          %1801 = vmatprep.subr.mxu0 0.0
          %1802 = vmatpush1.msra.mxu0 0.0
          %1803 = vmatprep.subr.mxu0 0.0
          %1804 = vmatpush1.msra.mxu0 0.0
          %1805 = vmatprep.subr.mxu0 0.0
          %1806 = vmatpush1.msra.mxu0 0.0
          %1807 = vmatprep.subr.mxu0 0.0
          %1808 = vmatpush1.msra.mxu0 0.0
          %1809 = vmatprep.subr.mxu0 0.0
          %1810 = vmatpush1.msra.mxu0 0.0
          %1811 = vmatprep.subr.mxu0 0.0
          %1812 = vmatpush1.msra.mxu0 0.0
          %1813 = vmatprep.subr.mxu0 0.0
          %1814 = vmatpush1.msra.mxu0 0.0
          %1815 = vmatprep.subr.mxu0 0.0
          %1816 = vmatpush1.msra.mxu0 0.0
          %1817 = vmatprep.subr.mxu0 0.0
          %1818 = vmatpush1.msra.mxu0 0.0
          %1819 = vmatprep.subr.mxu0 0.0
          %1820 = vmatpush1.msra.mxu0 0.0
          %1821 = vmatprep.subr.mxu0 0.0
          %1822 = vmatpush1.msra.mxu0 0.0
          %1823 = vmatprep.subr.mxu0 0.0
          %1824 = vmatpush1.msra.mxu0 0.0
          %1825 = vmatprep.subr.mxu0 0.0
          %1826 = vmatpush1.msra.mxu0 0.0
          %1827 = vmatprep.subr.mxu0 0.0
          %1828 = vmatpush1.msra.mxu0 0.0
          %1829 = vmatprep.subr.mxu0 0.0
          %1830 = vmatpush1.msra.mxu0 0.0
          %1831 = vmatprep.subr.mxu0 0.0
          %1832 = vmatpush1.msra.mxu0 0.0
          %1833 = vmatprep.subr.mxu0 0.0
          %1834 = vmatpush1.msra.mxu0 0.0
          %1835 = vmatprep.subr.mxu0 0.0
          %1836 = vmatpush1.msra.mxu0 0.0
          %1837 = vmatprep.subr.mxu0 0.0
          %1838 = vmatpush1.msra.mxu0 0.0
          %1839 = vmatprep.subr.mxu0 0.0
          %1840 = vmatpush1.msra.mxu0 0.0
          %1841 = vmatprep.subr.mxu0 0.0
          %1842 = vmatpush1.msra.mxu0 0.0
          %1843 = vmatprep.subr.mxu0 0.0
          %1844 = vmatpush1.msra.mxu0 0.0
          %1845 = vmatprep.subr.mxu0 0.0
          %1846 = vmatpush1.msra.mxu0 0.0
          %1847 = vmatprep.mubr.f32.mxu0 0.0
          %1848 = vmatmul.mubr.f32.gmra.mrb[0].mxu0 %v1781
          %v1849 = vpop.f32.mrb[0].mxu0
          %v1850 = vadd.f32 %v1778, %v1849
          %v1851 = vpop.f32.mrb[0].mxu0
          %v1852 = vadd.f32 %v1778, %v1851
          %1853 = vdwg.mxu0
          %1854 = vst.msk [vmem:[#allocation2] sm:$0xff] %vm1159, %v1850
          %1856 = vrot.lane.b32.xlu0 %v1850, 112
          %v1857 = vpop.permute.xlu0 %1856
          %1859 = vst.msk [vmem:[#allocation2 + $0x8] sm:$0xff] %vm1159, %v1857
          %1860 = vrot.lane.b32.xlu0 %v1850, 96
          %v1861 = vpop.permute.xlu0 %1860
          %1863 = vst.msk [vmem:[#allocation2 + $0x10] sm:$0xff] %vm1159, %v1861
          %1864 = vrot.lane.b32.xlu0 %v1850, 80
          %v1865 = vpop.permute.xlu0 %1864
          %1867 = vst.msk [vmem:[#allocation2 + $0x18] sm:$0xff] %vm1159, %v1865
          %1868 = vrot.lane.b32.xlu0 %v1850, 64
          %v1869 = vpop.permute.xlu0 %1868
          %1871 = vst.msk [vmem:[#allocation2 + $0x20] sm:$0xff] %vm1159, %v1869
          %1872 = vrot.lane.b32.xlu0 %v1850, 48
          %v1873 = vpop.permute.xlu0 %1872
          %1875 = vst.msk [vmem:[#allocation2 + $0x28] sm:$0xff] %vm1159, %v1873
          %1876 = vrot.lane.b32.xlu0 %v1850, 32
          %v1877 = vpop.permute.xlu0 %1876
          %1879 = vst.msk [vmem:[#allocation2 + $0x30] sm:$0xff] %vm1159, %v1877
          %1880 = vrot.lane.b32.xlu0 %v1850, 16
          %v1881 = vpop.permute.xlu0 %1880
          %1883 = vst.msk [vmem:[#allocation2 + $0x38] sm:$0xff] %vm1159, %v1881
          %1884 = vst.msk [vmem:[#allocation2 + $0x40] sm:$0xff] %vm1159, %v1852
          %1886 = vrot.lane.b32.xlu0 %v1852, 112
          %v1887 = vpop.permute.xlu0 %1886
          %1889 = vst.msk [vmem:[#allocation2 + $0x48] sm:$0xff] %vm1159, %v1887
          %1890 = vrot.lane.b32.xlu0 %v1852, 96
          %v1891 = vpop.permute.xlu0 %1890
          %1893 = vst.msk [vmem:[#allocation2 + $0x50] sm:$0xff] %vm1159, %v1891
          %1894 = vrot.lane.b32.xlu0 %v1852, 80
          %v1895 = vpop.permute.xlu0 %1894
          %1897 = vst.msk [vmem:[#allocation2 + $0x58] sm:$0xff] %vm1159, %v1895
          %1898 = vrot.lane.b32.xlu0 %v1852, 64
          %v1899 = vpop.permute.xlu0 %1898
          %1901 = vst.msk [vmem:[#allocation2 + $0x60] sm:$0xff] %vm1159, %v1899
          %1902 = vrot.lane.b32.xlu0 %v1852, 48
          %v1903 = vpop.permute.xlu0 %1902
          %1905 = vst.msk [vmem:[#allocation2 + $0x68] sm:$0xff] %vm1159, %v1903
          %1906 = vrot.lane.b32.xlu0 %v1852, 32
          %v1907 = vpop.permute.xlu0 %1906
          %1909 = vst.msk [vmem:[#allocation2 + $0x70] sm:$0xff] %vm1159, %v1907
          %1910 = vrot.lane.b32.xlu0 %v1852, 16
          %v1911 = vpop.permute.xlu0 %1910
          %1913 = vst.msk [vmem:[#allocation2 + $0x78] sm:$0xff] %vm1159, %v1911
        $region172: #{_lambda_.1} parent=99 // pred_fallthru
          _
        %v1914 = vld [vmem:[%s831] sm:$0xff]
        %v1915 = vld [vmem:[%s831 + $0x8] sm:$0xff]
        %v1916 = vld [vmem:[%s831 + $0x10] sm:$0xff]
        %v1917 = vld [vmem:[%s831 + $0x18] sm:$0xff]
        %v1918 = vld [vmem:[%s831 + $0x20] sm:$0xff]
        %v1919 = vld [vmem:[%s831 + $0x28] sm:$0xff]
        %v1920 = vld [vmem:[%s831 + $0x30] sm:$0xff]
        %v1921 = vld [vmem:[%s831 + $0x38] sm:$0xff]
        %v1922 = vld [vmem:[%s831 + $0x40] sm:$0xff]
        %v1923 = vld [vmem:[%s831 + $0x48] sm:$0xff]
        %v1924 = vld [vmem:[%s831 + $0x50] sm:$0xff]
        %v1925 = vld [vmem:[%s831 + $0x58] sm:$0xff]
        %v1926 = vld [vmem:[%s831 + $0x60] sm:$0xff]
        %v1927 = vld [vmem:[%s831 + $0x68] sm:$0xff]
        %v1928 = vld [vmem:[%s831 + $0x70] sm:$0xff]
        %v1929 = vld [vmem:[%s831 + $0x78] sm:$0xff]
        %v1930 = vld [vmem:[%s831 + $0x80] sm:$0xff]
        %v1931 = vld [vmem:[%s831 + $0x88] sm:$0xff]
        %v1932 = vld [vmem:[%s831 + $0x90] sm:$0xff]
        %v1933 = vld [vmem:[%s831 + $0x98] sm:$0xff]
        %v1934 = vld [vmem:[%s831 + $0xa0] sm:$0xff]
        %v1935 = vld [vmem:[%s831 + $0xa8] sm:$0xff]
        %v1936 = vld [vmem:[%s831 + $0xb0] sm:$0xff]
        %v1937 = vld [vmem:[%s831 + $0xb8] sm:$0xff]
        %v1938 = vld [vmem:[%s831 + $0xc0] sm:$0xff]
        %v1939 = vld [vmem:[%s831 + $0xc8] sm:$0xff]
        %v1940 = vld [vmem:[%s831 + $0xd0] sm:$0xff]
        %v1941 = vld [vmem:[%s831 + $0xd8] sm:$0xff]
        %v1942 = vld [vmem:[%s831 + $0xe0] sm:$0xff]
        %v1943 = vld [vmem:[%s831 + $0xe8] sm:$0xff]
        %v1944 = vld [vmem:[%s831 + $0xf0] sm:$0xff]
        %v1945 = vld [vmem:[%s831 + $0xf8] sm:$0xff]
        %v1946 = vld [vmem:[%s831 + $0x100] sm:$0xff]
        %v1947 = vld [vmem:[%s831 + $0x108] sm:$0xff]
        %v1948 = vld [vmem:[%s831 + $0x110] sm:$0xff]
        %v1949 = vld [vmem:[%s831 + $0x118] sm:$0xff]
        %v1950 = vld [vmem:[%s831 + $0x120] sm:$0xff]
        %v1951 = vld [vmem:[%s831 + $0x128] sm:$0xff]
        %v1952 = vld [vmem:[%s831 + $0x130] sm:$0xff]
        %v1953 = vld [vmem:[%s831 + $0x138] sm:$0xff]
        %v1954 = vld [vmem:[%s831 + $0x140] sm:$0xff]
        %v1955 = vld [vmem:[%s831 + $0x148] sm:$0xff]
        %v1956 = vld [vmem:[%s831 + $0x150] sm:$0xff]
        %v1957 = vld [vmem:[%s831 + $0x158] sm:$0xff]
        %v1958 = vld [vmem:[%s831 + $0x160] sm:$0xff]
        %v1959 = vld [vmem:[%s831 + $0x168] sm:$0xff]
        %v1960 = vld [vmem:[%s831 + $0x170] sm:$0xff]
        %v1961 = vld [vmem:[%s831 + $0x178] sm:$0xff]
        %v1962 = vld [vmem:[%s831 + $0x180] sm:$0xff]
        %v1963 = vld [vmem:[%s831 + $0x188] sm:$0xff]
        %v1964 = vld [vmem:[%s831 + $0x190] sm:$0xff]
        %v1965 = vld [vmem:[%s831 + $0x198] sm:$0xff]
        %v1966 = vld [vmem:[%s831 + $0x1a0] sm:$0xff]
        %v1967 = vld [vmem:[%s831 + $0x1a8] sm:$0xff]
        %v1968 = vld [vmem:[%s831 + $0x1b0] sm:$0xff]
        %v1969 = vld [vmem:[%s831 + $0x1b8] sm:$0xff]
        %v1970 = vld [vmem:[%s831 + $0x1c0] sm:$0xff]
        %v1971 = vld [vmem:[%s831 + $0x1c8] sm:$0xff]
        %v1972 = vld [vmem:[%s831 + $0x1d0] sm:$0xff]
        %v1973 = vld [vmem:[%s831 + $0x1d8] sm:$0xff]
        %v1974 = vld [vmem:[%s831 + $0x1e0] sm:$0xff]
        %v1975 = vld [vmem:[%s831 + $0x1e8] sm:$0xff]
        %v1976 = vld [vmem:[%s831 + $0x1f0] sm:$0xff]
        %v1977 = vld [vmem:[%s831 + $0x1f8] sm:$0xff]
        %v1978 = vld [vmem:[#allocation2] sm:$0xff]
        %v1979 = vld [vmem:[#allocation2 + $0x8] sm:$0xff]
        %v1980 = vld [vmem:[#allocation2 + $0x10] sm:$0xff]
        %v1981 = vld [vmem:[#allocation2 + $0x18] sm:$0xff]
        %v1982 = vld [vmem:[#allocation2 + $0x20] sm:$0xff]
        %v1983 = vld [vmem:[#allocation2 + $0x28] sm:$0xff]
        %v1984 = vld [vmem:[#allocation2 + $0x30] sm:$0xff]
        %v1985 = vld [vmem:[#allocation2 + $0x38] sm:$0xff]
        %v1986 = vld [vmem:[#allocation2 + $0x40] sm:$0xff]
        %v1987 = vld [vmem:[#allocation2 + $0x48] sm:$0xff]
        %v1988 = vld [vmem:[#allocation2 + $0x50] sm:$0xff]
        %v1989 = vld [vmem:[#allocation2 + $0x58] sm:$0xff]
        %v1990 = vld [vmem:[#allocation2 + $0x60] sm:$0xff]
        %v1991 = vld [vmem:[#allocation2 + $0x68] sm:$0xff]
        %v1992 = vld [vmem:[#allocation2 + $0x70] sm:$0xff]
        %v1993 = vld [vmem:[#allocation2 + $0x78] sm:$0xff]
        %1994 = vmatprep.subr.mxu0 0.0
        %1995 = vmatpush1.msra.mxu0 %v1978
        %1996 = vmatprep.subr.mxu0 0.0
        %1997 = vmatpush1.msra.mxu0 %v1979
        %1998 = vmatprep.subr.mxu0 0.0
        %1999 = vmatpush1.msra.mxu0 %v1980
        %2000 = vmatprep.subr.mxu0 0.0
        %2001 = vmatpush1.msra.mxu0 %v1981
        %2002 = vmatprep.subr.mxu0 0.0
        %2003 = vmatpush1.msra.mxu0 %v1982
        %2004 = vmatprep.subr.mxu0 0.0
        %2005 = vmatpush1.msra.mxu0 %v1983
        %2006 = vmatprep.subr.mxu0 0.0
        %2007 = vmatpush1.msra.mxu0 %v1984
        %2008 = vmatprep.subr.mxu0 0.0
        %2009 = vmatpush1.msra.mxu0 %v1985
        %2010 = vmatprep.subr.mxu0 0.0
        %2011 = vmatpush1.msra.mxu0 %v1986
        %2012 = vmatprep.subr.mxu0 0.0
        %2013 = vmatpush1.msra.mxu0 %v1987
        %2014 = vmatprep.subr.mxu0 0.0
        %2015 = vmatpush1.msra.mxu0 %v1988
        %2016 = vmatprep.subr.mxu0 0.0
        %2017 = vmatpush1.msra.mxu0 %v1989
        %2018 = vmatprep.subr.mxu0 0.0
        %2019 = vmatpush1.msra.mxu0 %v1990
        %2020 = vmatprep.subr.mxu0 0.0
        %2021 = vmatpush1.msra.mxu0 %v1991
        %2022 = vmatprep.subr.mxu0 0.0
        %2023 = vmatpush1.msra.mxu0 %v1992
        %2024 = vmatprep.subr.mxu0 0.0
        %2025 = vmatpush1.msra.mxu0 %v1993
        %2026 = vmatprep.subr.mxu0 0.0
        %2027 = vmatpush1.msra.mxu0 0.0
        %2028 = vmatprep.subr.mxu0 0.0
        %2029 = vmatpush1.msra.mxu0 0.0
        %2030 = vmatprep.subr.mxu0 0.0
        %2031 = vmatpush1.msra.mxu0 0.0
        %2032 = vmatprep.subr.mxu0 0.0
        %2033 = vmatpush1.msra.mxu0 0.0
        %2034 = vmatprep.subr.mxu0 0.0
        %2035 = vmatpush1.msra.mxu0 0.0
        %2036 = vmatprep.subr.mxu0 0.0
        %2037 = vmatpush1.msra.mxu0 0.0
        %2038 = vmatprep.subr.mxu0 0.0
        %2039 = vmatpush1.msra.mxu0 0.0
        %2040 = vmatprep.subr.mxu0 0.0
        %2041 = vmatpush1.msra.mxu0 0.0
        %2042 = vmatprep.subr.mxu0 0.0
        %2043 = vmatpush1.msra.mxu0 0.0
        %2044 = vmatprep.subr.mxu0 0.0
        %2045 = vmatpush1.msra.mxu0 0.0
        %2046 = vmatprep.subr.mxu0 0.0
        %2047 = vmatpush1.msra.mxu0 0.0
        %2048 = vmatprep.subr.mxu0 0.0
        %2049 = vmatpush1.msra.mxu0 0.0
        %2050 = vmatprep.subr.mxu0 0.0
        %2051 = vmatpush1.msra.mxu0 0.0
        %2052 = vmatprep.subr.mxu0 0.0
        %2053 = vmatpush1.msra.mxu0 0.0
        %2054 = vmatprep.subr.mxu0 0.0
        %2055 = vmatpush1.msra.mxu0 0.0
        %2056 = vmatprep.subr.mxu0 0.0
        %2057 = vmatpush1.msra.mxu0 0.0
        %2058 = vmatprep.mubr.f32.mxu0 0.0
        %2059 = vmatmul.mubr.f32.gmra.mrb[0].mxu0 %v1914
        %v2060 = vpop.f32.mrb[0].mxu0
        %v2061 = vadd.f32 0.0, %v2060
        %v2062 = vpop.f32.mrb[0].mxu0
        %2063 = vmatprep.mubr.f32.mxu0 0.0
        %2064 = vmatmul.mubr.f32.gmra.mrb[0].mxu0 %v1915
        %v2065 = vpop.f32.mrb[0].mxu0
        %v2066 = vadd.f32 0.0, %v2065
        %v2067 = vpop.f32.mrb[0].mxu0
        %2068 = vmatprep.mubr.f32.mxu0 0.0
        %2069 = vmatmul.mubr.f32.gmra.mrb[0].mxu0 %v1916
        %v2070 = vpop.f32.mrb[0].mxu0
        %v2071 = vadd.f32 0.0, %v2070
        %v2072 = vpop.f32.mrb[0].mxu0
        %2073 = vmatprep.mubr.f32.mxu0 0.0
        %2074 = vmatmul.mubr.f32.gmra.mrb[0].mxu0 %v1917
        %v2075 = vpop.f32.mrb[0].mxu0
        %v2076 = vadd.f32 0.0, %v2075
        %v2077 = vpop.f32.mrb[0].mxu0
        %2078 = vmatprep.mubr.f32.mxu0 0.0
        %2079 = vmatmul.mubr.f32.gmra.mrb[0].mxu0 %v1918
        %v2080 = vpop.f32.mrb[0].mxu0
        %v2081 = vadd.f32 0.0, %v2080
        %v2082 = vpop.f32.mrb[0].mxu0
        %2083 = vmatprep.mubr.f32.mxu0 0.0
        %2084 = vmatmul.mubr.f32.gmra.mrb[0].mxu0 %v1919
        %v2085 = vpop.f32.mrb[0].mxu0
        %v2086 = vadd.f32 0.0, %v2085
        %v2087 = vpop.f32.mrb[0].mxu0
        %2088 = vmatprep.mubr.f32.mxu0 0.0
        %2089 = vmatmul.mubr.f32.gmra.mrb[0].mxu0 %v1920
        %v2090 = vpop.f32.mrb[0].mxu0
        %v2091 = vadd.f32 0.0, %v2090
        %v2092 = vpop.f32.mrb[0].mxu0
        %2093 = vmatprep.mubr.f32.mxu0 0.0
        %2094 = vmatmul.mubr.f32.gmra.mrb[0].mxu0 %v1921
        %v2095 = vpop.f32.mrb[0].mxu0
        %v2096 = vadd.f32 0.0, %v2095
        %v2097 = vpop.f32.mrb[0].mxu0
        %2098 = vmatprep.mubr.f32.mxu0 0.0
        %2099 = vmatmul.mubr.f32.gmra.mrb[0].mxu0 %v1922
        %v2100 = vpop.f32.mrb[0].mxu0
        %v2101 = vadd.f32 0.0, %v2100
        %v2102 = vpop.f32.mrb[0].mxu0
        %2103 = vmatprep.mubr.f32.mxu0 0.0
        %2104 = vmatmul.mubr.f32.gmra.mrb[0].mxu0 %v1923
        %v2105 = vpop.f32.mrb[0].mxu0
        %v2106 = vadd.f32 0.0, %v2105
        %v2107 = vpop.f32.mrb[0].mxu0
        %2108 = vmatprep.mubr.f32.mxu0 0.0
        %2109 = vmatmul.mubr.f32.gmra.mrb[0].mxu0 %v1924
        %v2110 = vpop.f32.mrb[0].mxu0
        %v2111 = vadd.f32 0.0, %v2110
        %v2112 = vpop.f32.mrb[0].mxu0
        %2113 = vmatprep.mubr.f32.mxu0 0.0
        %2114 = vmatmul.mubr.f32.gmra.mrb[0].mxu0 %v1925
        %v2115 = vpop.f32.mrb[0].mxu0
        %v2116 = vadd.f32 0.0, %v2115
        %v2117 = vpop.f32.mrb[0].mxu0
        %2118 = vmatprep.mubr.f32.mxu0 0.0
        %2119 = vmatmul.mubr.f32.gmra.mrb[0].mxu0 %v1926
        %v2120 = vpop.f32.mrb[0].mxu0
        %v2121 = vadd.f32 0.0, %v2120
        %v2122 = vpop.f32.mrb[0].mxu0
        %2123 = vmatprep.mubr.f32.mxu0 0.0
        %2124 = vmatmul.mubr.f32.gmra.mrb[0].mxu0 %v1927
        %v2125 = vpop.f32.mrb[0].mxu0
        %v2126 = vadd.f32 0.0, %v2125
        %v2127 = vpop.f32.mrb[0].mxu0
        %2128 = vmatprep.mubr.f32.mxu0 0.0
        %2129 = vmatmul.mubr.f32.gmra.mrb[0].mxu0 %v1928
        %v2130 = vpop.f32.mrb[0].mxu0
        %v2131 = vadd.f32 0.0, %v2130
        %v2132 = vpop.f32.mrb[0].mxu0
        %2133 = vmatprep.mubr.f32.mxu0 0.0
        %2134 = vmatmul.mubr.f32.gmra.mrb[0].mxu0 %v1929
        %v2135 = vpop.f32.mrb[0].mxu0
        %v2136 = vadd.f32 0.0, %v2135
        %v2137 = vpop.f32.mrb[0].mxu0
        %2138 = vmatprep.mubr.f32.mxu0 0.0
        %2139 = vmatmul.mubr.f32.gmra.mrb[0].mxu0 %v1930
        %v2140 = vpop.f32.mrb[0].mxu0
        %v2141 = vadd.f32 0.0, %v2140
        %v2142 = vpop.f32.mrb[0].mxu0
        %2143 = vmatprep.mubr.f32.mxu0 0.0
        %2144 = vmatmul.mubr.f32.gmra.mrb[0].mxu0 %v1931
        %v2145 = vpop.f32.mrb[0].mxu0
        %v2146 = vadd.f32 0.0, %v2145
        %v2147 = vpop.f32.mrb[0].mxu0
        %2148 = vmatprep.mubr.f32.mxu0 0.0
        %2149 = vmatmul.mubr.f32.gmra.mrb[0].mxu0 %v1932
        %v2150 = vpop.f32.mrb[0].mxu0
        %v2151 = vadd.f32 0.0, %v2150
        %v2152 = vpop.f32.mrb[0].mxu0
        %2153 = vmatprep.mubr.f32.mxu0 0.0
        %2154 = vmatmul.mubr.f32.gmra.mrb[0].mxu0 %v1933
        %v2155 = vpop.f32.mrb[0].mxu0
        %v2156 = vadd.f32 0.0, %v2155
        %v2157 = vpop.f32.mrb[0].mxu0
        %2158 = vmatprep.mubr.f32.mxu0 0.0
        %2159 = vmatmul.mubr.f32.gmra.mrb[0].mxu0 %v1934
        %v2160 = vpop.f32.mrb[0].mxu0
        %v2161 = vadd.f32 0.0, %v2160
        %v2162 = vpop.f32.mrb[0].mxu0
        %2163 = vmatprep.mubr.f32.mxu0 0.0
        %2164 = vmatmul.mubr.f32.gmra.mrb[0].mxu0 %v1935
        %v2165 = vpop.f32.mrb[0].mxu0
        %v2166 = vadd.f32 0.0, %v2165
        %v2167 = vpop.f32.mrb[0].mxu0
        %2168 = vmatprep.mubr.f32.mxu0 0.0
        %2169 = vmatmul.mubr.f32.gmra.mrb[0].mxu0 %v1936
        %v2170 = vpop.f32.mrb[0].mxu0
        %v2171 = vadd.f32 0.0, %v2170
        %v2172 = vpop.f32.mrb[0].mxu0
        %2173 = vmatprep.mubr.f32.mxu0 0.0
        %2174 = vmatmul.mubr.f32.gmra.mrb[0].mxu0 %v1937
        %v2175 = vpop.f32.mrb[0].mxu0
        %v2176 = vadd.f32 0.0, %v2175
        %v2177 = vpop.f32.mrb[0].mxu0
        %2178 = vmatprep.mubr.f32.mxu0 0.0
        %2179 = vmatmul.mubr.f32.gmra.mrb[0].mxu0 %v1938
        %v2180 = vpop.f32.mrb[0].mxu0
        %v2181 = vadd.f32 0.0, %v2180
        %v2182 = vpop.f32.mrb[0].mxu0
        %2183 = vmatprep.mubr.f32.mxu0 0.0
        %2184 = vmatmul.mubr.f32.gmra.mrb[0].mxu0 %v1939
        %v2185 = vpop.f32.mrb[0].mxu0
        %v2186 = vadd.f32 0.0, %v2185
        %v2187 = vpop.f32.mrb[0].mxu0
        %2188 = vmatprep.mubr.f32.mxu0 0.0
        %2189 = vmatmul.mubr.f32.gmra.mrb[0].mxu0 %v1940
        %v2190 = vpop.f32.mrb[0].mxu0
        %v2191 = vadd.f32 0.0, %v2190
        %v2192 = vpop.f32.mrb[0].mxu0
        %2193 = vmatprep.mubr.f32.mxu0 0.0
        %2194 = vmatmul.mubr.f32.gmra.mrb[0].mxu0 %v1941
        %v2195 = vpop.f32.mrb[0].mxu0
        %v2196 = vadd.f32 0.0, %v2195
        %v2197 = vpop.f32.mrb[0].mxu0
        %2198 = vmatprep.mubr.f32.mxu0 0.0
        %2199 = vmatmul.mubr.f32.gmra.mrb[0].mxu0 %v1942
        %v2200 = vpop.f32.mrb[0].mxu0
        %v2201 = vadd.f32 0.0, %v2200
        %v2202 = vpop.f32.mrb[0].mxu0
        %2203 = vmatprep.mubr.f32.mxu0 0.0
        %2204 = vmatmul.mubr.f32.gmra.mrb[0].mxu0 %v1943
        %v2205 = vpop.f32.mrb[0].mxu0
        %v2206 = vadd.f32 0.0, %v2205
        %v2207 = vpop.f32.mrb[0].mxu0
        %2208 = vmatprep.mubr.f32.mxu0 0.0
        %2209 = vmatmul.mubr.f32.gmra.mrb[0].mxu0 %v1944
        %v2210 = vpop.f32.mrb[0].mxu0
        %v2211 = vadd.f32 0.0, %v2210
        %v2212 = vpop.f32.mrb[0].mxu0
        %2213 = vmatprep.mubr.f32.mxu0 0.0
        %2214 = vmatmul.mubr.f32.gmra.mrb[0].mxu0 %v1945
        %v2215 = vpop.f32.mrb[0].mxu0
        %v2216 = vadd.f32 0.0, %v2215
        %v2217 = vpop.f32.mrb[0].mxu0
        %2218 = vmatprep.mubr.f32.mxu0 0.0
        %2219 = vmatmul.mubr.f32.gmra.mrb[0].mxu0 %v1946
        %v2220 = vpop.f32.mrb[0].mxu0
        %v2221 = vadd.f32 0.0, %v2220
        %v2222 = vpop.f32.mrb[0].mxu0
        %2223 = vmatprep.mubr.f32.mxu0 0.0
        %2224 = vmatmul.mubr.f32.gmra.mrb[0].mxu0 %v1947
        %v2225 = vpop.f32.mrb[0].mxu0
        %v2226 = vadd.f32 0.0, %v2225
        %v2227 = vpop.f32.mrb[0].mxu0
        %2228 = vmatprep.mubr.f32.mxu0 0.0
        %2229 = vmatmul.mubr.f32.gmra.mrb[0].mxu0 %v1948
        %v2230 = vpop.f32.mrb[0].mxu0
        %v2231 = vadd.f32 0.0, %v2230
        %v2232 = vpop.f32.mrb[0].mxu0
        %2233 = vmatprep.mubr.f32.mxu0 0.0
        %2234 = vmatmul.mubr.f32.gmra.mrb[0].mxu0 %v1949
        %v2235 = vpop.f32.mrb[0].mxu0
        %v2236 = vadd.f32 0.0, %v2235
        %v2237 = vpop.f32.mrb[0].mxu0
        %2238 = vmatprep.mubr.f32.mxu0 0.0
        %2239 = vmatmul.mubr.f32.gmra.mrb[0].mxu0 %v1950
        %v2240 = vpop.f32.mrb[0].mxu0
        %v2241 = vadd.f32 0.0, %v2240
        %v2242 = vpop.f32.mrb[0].mxu0
        %2243 = vmatprep.mubr.f32.mxu0 0.0
        %2244 = vmatmul.mubr.f32.gmra.mrb[0].mxu0 %v1951
        %v2245 = vpop.f32.mrb[0].mxu0
        %v2246 = vadd.f32 0.0, %v2245
        %v2247 = vpop.f32.mrb[0].mxu0
        %2248 = vmatprep.mubr.f32.mxu0 0.0
        %2249 = vmatmul.mubr.f32.gmra.mrb[0].mxu0 %v1952
        %v2250 = vpop.f32.mrb[0].mxu0
        %v2251 = vadd.f32 0.0, %v2250
        %v2252 = vpop.f32.mrb[0].mxu0
        %2253 = vmatprep.mubr.f32.mxu0 0.0
        %2254 = vmatmul.mubr.f32.gmra.mrb[0].mxu0 %v1953
        %v2255 = vpop.f32.mrb[0].mxu0
        %v2256 = vadd.f32 0.0, %v2255
        %v2257 = vpop.f32.mrb[0].mxu0
        %2258 = vmatprep.mubr.f32.mxu0 0.0
        %2259 = vmatmul.mubr.f32.gmra.mrb[0].mxu0 %v1954
        %v2260 = vpop.f32.mrb[0].mxu0
        %v2261 = vadd.f32 0.0, %v2260
        %v2262 = vpop.f32.mrb[0].mxu0
        %2263 = vmatprep.mubr.f32.mxu0 0.0
        %2264 = vmatmul.mubr.f32.gmra.mrb[0].mxu0 %v1955
        %v2265 = vpop.f32.mrb[0].mxu0
        %v2266 = vadd.f32 0.0, %v2265
        %v2267 = vpop.f32.mrb[0].mxu0
        %2268 = vmatprep.mubr.f32.mxu0 0.0
        %2269 = vmatmul.mubr.f32.gmra.mrb[0].mxu0 %v1956
        %v2270 = vpop.f32.mrb[0].mxu0
        %v2271 = vadd.f32 0.0, %v2270
        %v2272 = vpop.f32.mrb[0].mxu0
        %2273 = vmatprep.mubr.f32.mxu0 0.0
        %2274 = vmatmul.mubr.f32.gmra.mrb[0].mxu0 %v1957
        %v2275 = vpop.f32.mrb[0].mxu0
        %v2276 = vadd.f32 0.0, %v2275
        %v2277 = vpop.f32.mrb[0].mxu0
        %2278 = vmatprep.mubr.f32.mxu0 0.0
        %2279 = vmatmul.mubr.f32.gmra.mrb[0].mxu0 %v1958
        %v2280 = vpop.f32.mrb[0].mxu0
        %v2281 = vadd.f32 0.0, %v2280
        %v2282 = vpop.f32.mrb[0].mxu0
        %2283 = vmatprep.mubr.f32.mxu0 0.0
        %2284 = vmatmul.mubr.f32.gmra.mrb[0].mxu0 %v1959
        %v2285 = vpop.f32.mrb[0].mxu0
        %v2286 = vadd.f32 0.0, %v2285
        %v2287 = vpop.f32.mrb[0].mxu0
        %2288 = vmatprep.mubr.f32.mxu0 0.0
        %2289 = vmatmul.mubr.f32.gmra.mrb[0].mxu0 %v1960
        %v2290 = vpop.f32.mrb[0].mxu0
        %v2291 = vadd.f32 0.0, %v2290
        %v2292 = vpop.f32.mrb[0].mxu0
        %2293 = vmatprep.mubr.f32.mxu0 0.0
        %2294 = vmatmul.mubr.f32.gmra.mrb[0].mxu0 %v1961
        %v2295 = vpop.f32.mrb[0].mxu0
        %v2296 = vadd.f32 0.0, %v2295
        %v2297 = vpop.f32.mrb[0].mxu0
        %2298 = vmatprep.mubr.f32.mxu0 0.0
        %2299 = vmatmul.mubr.f32.gmra.mrb[0].mxu0 %v1962
        %v2300 = vpop.f32.mrb[0].mxu0
        %v2301 = vadd.f32 0.0, %v2300
        %v2302 = vpop.f32.mrb[0].mxu0
        %2303 = vmatprep.mubr.f32.mxu0 0.0
        %2304 = vmatmul.mubr.f32.gmra.mrb[0].mxu0 %v1963
        %v2305 = vpop.f32.mrb[0].mxu0
        %v2306 = vadd.f32 0.0, %v2305
        %v2307 = vpop.f32.mrb[0].mxu0
        %2308 = vmatprep.mubr.f32.mxu0 0.0
        %2309 = vmatmul.mubr.f32.gmra.mrb[0].mxu0 %v1964
        %v2310 = vpop.f32.mrb[0].mxu0
        %v2311 = vadd.f32 0.0, %v2310
        %v2312 = vpop.f32.mrb[0].mxu0
        %2313 = vmatprep.mubr.f32.mxu0 0.0
        %2314 = vmatmul.mubr.f32.gmra.mrb[0].mxu0 %v1965
        %v2315 = vpop.f32.mrb[0].mxu0
        %v2316 = vadd.f32 0.0, %v2315
        %v2317 = vpop.f32.mrb[0].mxu0
        %2318 = vmatprep.mubr.f32.mxu0 0.0
        %2319 = vmatmul.mubr.f32.gmra.mrb[0].mxu0 %v1966
        %v2320 = vpop.f32.mrb[0].mxu0
        %v2321 = vadd.f32 0.0, %v2320
        %v2322 = vpop.f32.mrb[0].mxu0
        %2323 = vmatprep.mubr.f32.mxu0 0.0
        %2324 = vmatmul.mubr.f32.gmra.mrb[0].mxu0 %v1967
        %v2325 = vpop.f32.mrb[0].mxu0
        %v2326 = vadd.f32 0.0, %v2325
        %v2327 = vpop.f32.mrb[0].mxu0
        %2328 = vmatprep.mubr.f32.mxu0 0.0
        %2329 = vmatmul.mubr.f32.gmra.mrb[0].mxu0 %v1968
        %v2330 = vpop.f32.mrb[0].mxu0
        %v2331 = vadd.f32 0.0, %v2330
        %v2332 = vpop.f32.mrb[0].mxu0
        %2333 = vmatprep.mubr.f32.mxu0 0.0
        %2334 = vmatmul.mubr.f32.gmra.mrb[0].mxu0 %v1969
        %v2335 = vpop.f32.mrb[0].mxu0
        %v2336 = vadd.f32 0.0, %v2335
        %v2337 = vpop.f32.mrb[0].mxu0
        %2338 = vmatprep.mubr.f32.mxu0 0.0
        %2339 = vmatmul.mubr.f32.gmra.mrb[0].mxu0 %v1970
        %v2340 = vpop.f32.mrb[0].mxu0
        %v2341 = vadd.f32 0.0, %v2340
        %v2342 = vpop.f32.mrb[0].mxu0
        %2343 = vmatprep.mubr.f32.mxu0 0.0
        %2344 = vmatmul.mubr.f32.gmra.mrb[0].mxu0 %v1971
        %v2345 = vpop.f32.mrb[0].mxu0
        %v2346 = vadd.f32 0.0, %v2345
        %v2347 = vpop.f32.mrb[0].mxu0
        %2348 = vmatprep.mubr.f32.mxu0 0.0
        %2349 = vmatmul.mubr.f32.gmra.mrb[0].mxu0 %v1972
        %v2350 = vpop.f32.mrb[0].mxu0
        %v2351 = vadd.f32 0.0, %v2350
        %v2352 = vpop.f32.mrb[0].mxu0
        %2353 = vmatprep.mubr.f32.mxu0 0.0
        %2354 = vmatmul.mubr.f32.gmra.mrb[0].mxu0 %v1973
        %v2355 = vpop.f32.mrb[0].mxu0
        %v2356 = vadd.f32 0.0, %v2355
        %v2357 = vpop.f32.mrb[0].mxu0
        %2358 = vmatprep.mubr.f32.mxu0 0.0
        %2359 = vmatmul.mubr.f32.gmra.mrb[0].mxu0 %v1974
        %v2360 = vpop.f32.mrb[0].mxu0
        %v2361 = vadd.f32 0.0, %v2360
        %v2362 = vpop.f32.mrb[0].mxu0
        %2363 = vmatprep.mubr.f32.mxu0 0.0
        %2364 = vmatmul.mubr.f32.gmra.mrb[0].mxu0 %v1975
        %v2365 = vpop.f32.mrb[0].mxu0
        %v2366 = vadd.f32 0.0, %v2365
        %v2367 = vpop.f32.mrb[0].mxu0
        %2368 = vmatprep.mubr.f32.mxu0 0.0
        %2369 = vmatmul.mubr.f32.gmra.mrb[0].mxu0 %v1976
        %v2370 = vpop.f32.mrb[0].mxu0
        %v2371 = vadd.f32 0.0, %v2370
        %v2372 = vpop.f32.mrb[0].mxu0
        %2373 = vmatprep.mubr.f32.mxu0 0.0
        %2374 = vmatmul.mubr.f32.gmra.mrb[0].mxu0 %v1977
        %v2375 = vpop.f32.mrb[0].mxu0
        %v2376 = vadd.f32 0.0, %v2375
        %v2377 = vpop.f32.mrb[0].mxu0
        %2378 = vdwg.mxu0
        %v2379 = vld [vmem:[#allocation27] sm:$0xff]
        %v2380 = vld [vmem:[#allocation27 + $0x8] sm:$0xff]
        %v2381 = vld [vmem:[#allocation27 + $0x10] sm:$0xff]
        %v2382 = vld [vmem:[#allocation27 + $0x18] sm:$0xff]
        %vm2383 = vcmask 130048
        %v2385 = vsel %vm2383, %v2061, 0
        %v2388 = vsel %vm2383, %v2066, 0
        %v2391 = vsel %vm2383, %v2071, 0
        %v2394 = vsel %vm2383, %v2076, 0
        %v2397 = vsel %vm2383, %v2081, 0
        %v2400 = vsel %vm2383, %v2086, 0
        %v2403 = vsel %vm2383, %v2091, 0
        %v2406 = vsel %vm2383, %v2096, 0
        %v2409 = vsel %vm2383, %v2101, 0
        %v2412 = vsel %vm2383, %v2106, 0
        %v2415 = vsel %vm2383, %v2111, 0
        %v2418 = vsel %vm2383, %v2116, 0
        %v2421 = vsel %vm2383, %v2121, 0
        %v2424 = vsel %vm2383, %v2126, 0
        %v2427 = vsel %vm2383, %v2131, 0
        %v2430 = vsel %vm2383, %v2136, 0
        %v2433 = vsel %vm2383, %v2141, 0
        %v2436 = vsel %vm2383, %v2146, 0
        %v2439 = vsel %vm2383, %v2151, 0
        %v2442 = vsel %vm2383, %v2156, 0
        %v2445 = vsel %vm2383, %v2161, 0
        %v2448 = vsel %vm2383, %v2166, 0
        %v2451 = vsel %vm2383, %v2171, 0
        %v2454 = vsel %vm2383, %v2176, 0
        %v2457 = vsel %vm2383, %v2181, 0
        %v2460 = vsel %vm2383, %v2186, 0
        %v2463 = vsel %vm2383, %v2191, 0
        %v2466 = vsel %vm2383, %v2196, 0
        %v2469 = vsel %vm2383, %v2201, 0
        %v2472 = vsel %vm2383, %v2206, 0
        %v2475 = vsel %vm2383, %v2211, 0
        %v2478 = vsel %vm2383, %v2216, 0
        %v2481 = vsel %vm2383, %v2221, 0
        %v2484 = vsel %vm2383, %v2226, 0
        %v2487 = vsel %vm2383, %v2231, 0
        %v2490 = vsel %vm2383, %v2236, 0
        %v2493 = vsel %vm2383, %v2241, 0
        %v2496 = vsel %vm2383, %v2246, 0
        %v2499 = vsel %vm2383, %v2251, 0
        %v2502 = vsel %vm2383, %v2256, 0
        %v2505 = vsel %vm2383, %v2261, 0
        %v2508 = vsel %vm2383, %v2266, 0
        %v2511 = vsel %vm2383, %v2271, 0
        %v2514 = vsel %vm2383, %v2276, 0
        %v2517 = vsel %vm2383, %v2281, 0
        %v2520 = vsel %vm2383, %v2286, 0
        %v2523 = vsel %vm2383, %v2291, 0
        %v2526 = vsel %vm2383, %v2296, 0
        %v2529 = vsel %vm2383, %v2301, 0
        %v2532 = vsel %vm2383, %v2306, 0
        %v2535 = vsel %vm2383, %v2311, 0
        %v2538 = vsel %vm2383, %v2316, 0
        %v2541 = vsel %vm2383, %v2321, 0
        %v2544 = vsel %vm2383, %v2326, 0
        %v2547 = vsel %vm2383, %v2331, 0
        %v2550 = vsel %vm2383, %v2336, 0
        %v2553 = vsel %vm2383, %v2341, 0
        %v2556 = vsel %vm2383, %v2346, 0
        %v2559 = vsel %vm2383, %v2351, 0
        %v2562 = vsel %vm2383, %v2356, 0
        %v2565 = vsel %vm2383, %v2361, 0
        %v2568 = vsel %vm2383, %v2366, 0
        %v2571 = vsel %vm2383, %v2371, 0
        %v2574 = vsel %vm2383, %v2376, 0
        %2576 = vmatprep.subr.mxu0 %v2380
        %2577 = vmatpush1.msra.mxu0 %v2379
        %2578 = vmatprep.subr.mxu0 %v2382
        %2579 = vmatpush1.msra.mxu0 %v2381
        %2580 = vmatprep.subr.mxu0 0.0
        %2581 = vmatpush1.msra.mxu0 0.0
        %2582 = vmatprep.subr.mxu0 0.0
        %2583 = vmatpush1.msra.mxu0 0.0
        %2584 = vmatprep.subr.mxu0 0.0
        %2585 = vmatpush1.msra.mxu0 0.0
        %2586 = vmatprep.subr.mxu0 0.0
        %2587 = vmatpush1.msra.mxu0 0.0
        %2588 = vmatprep.subr.mxu0 0.0
        %2589 = vmatpush1.msra.mxu0 0.0
        %2590 = vmatprep.subr.mxu0 0.0
        %2591 = vmatpush1.msra.mxu0 0.0
        %2592 = vmatprep.subr.mxu0 0.0
        %2593 = vmatpush1.msra.mxu0 0.0
        %2594 = vmatprep.subr.mxu0 0.0
        %2595 = vmatpush1.msra.mxu0 0.0
        %2596 = vmatprep.subr.mxu0 0.0
        %2597 = vmatpush1.msra.mxu0 0.0
        %2598 = vmatprep.subr.mxu0 0.0
        %2599 = vmatpush1.msra.mxu0 0.0
        %2600 = vmatprep.subr.mxu0 0.0
        %2601 = vmatpush1.msra.mxu0 0.0
        %2602 = vmatprep.subr.mxu0 0.0
        %2603 = vmatpush1.msra.mxu0 0.0
        %2604 = vmatprep.subr.mxu0 0.0
        %2605 = vmatpush1.msra.mxu0 0.0
        %2606 = vmatprep.subr.mxu0 0.0
        %2607 = vmatpush1.msra.mxu0 0.0
        %2608 = vmatprep.subr.mxu0 0.0
        %2609 = vmatpush1.msra.mxu0 0.0
        %2610 = vmatprep.subr.mxu0 0.0
        %2611 = vmatpush1.msra.mxu0 0.0
        %2612 = vmatprep.subr.mxu0 0.0
        %2613 = vmatpush1.msra.mxu0 0.0
        %2614 = vmatprep.subr.mxu0 0.0
        %2615 = vmatpush1.msra.mxu0 0.0
        %2616 = vmatprep.subr.mxu0 0.0
        %2617 = vmatpush1.msra.mxu0 0.0
        %2618 = vmatprep.subr.mxu0 0.0
        %2619 = vmatpush1.msra.mxu0 0.0
        %2620 = vmatprep.subr.mxu0 0.0
        %2621 = vmatpush1.msra.mxu0 0.0
        %2622 = vmatprep.subr.mxu0 0.0
        %2623 = vmatpush1.msra.mxu0 0.0
        %2624 = vmatprep.subr.mxu0 0.0
        %2625 = vmatpush1.msra.mxu0 0.0
        %2626 = vmatprep.subr.mxu0 0.0
        %2627 = vmatpush1.msra.mxu0 0.0
        %2628 = vmatprep.subr.mxu0 0.0
        %2629 = vmatpush1.msra.mxu0 0.0
        %2630 = vmatprep.subr.mxu0 0.0
        %2631 = vmatpush1.msra.mxu0 0.0
        %2632 = vmatprep.subr.mxu0 0.0
        %2633 = vmatpush1.msra.mxu0 0.0
        %2634 = vmatprep.subr.mxu0 0.0
        %2635 = vmatpush1.msra.mxu0 0.0
        %2636 = vmatprep.subr.mxu0 0.0
        %2637 = vmatpush1.msra.mxu0 0.0
        %2638 = vmatprep.subr.mxu0 0.0
        %2639 = vmatpush1.msra.mxu0 0.0
        %2640 = vmatprep.mubr.f32.mxu0 0.0
        %2641 = vmatmul.mubr.f32.gmra.mrb[0].mxu0 %v2385
        %v2642 = vpop.f32.mrb[0].mxu0
        %v2643 = vadd.f32 0.0, %v2642
        %v2644 = vpop.f32.mrb[0].mxu0
        %v2645 = vadd.f32 0.0, %v2644
        %2646 = vmatprep.mubr.f32.mxu0 0.0
        %2647 = vmatmul.mubr.f32.gmra.mrb[0].mxu0 %v2388
        %v2648 = vpop.f32.mrb[0].mxu0
        %v2649 = vadd.f32 0.0, %v2648
        %v2650 = vpop.f32.mrb[0].mxu0
        %v2651 = vadd.f32 0.0, %v2650
        %2652 = vmatprep.mubr.f32.mxu0 0.0
        %2653 = vmatmul.mubr.f32.gmra.mrb[0].mxu0 %v2391
        %v2654 = vpop.f32.mrb[0].mxu0
        %v2655 = vadd.f32 0.0, %v2654
        %v2656 = vpop.f32.mrb[0].mxu0
        %v2657 = vadd.f32 0.0, %v2656
        %2658 = vmatprep.mubr.f32.mxu0 0.0
        %2659 = vmatmul.mubr.f32.gmra.mrb[0].mxu0 %v2394
        %v2660 = vpop.f32.mrb[0].mxu0
        %v2661 = vadd.f32 0.0, %v2660
        %v2662 = vpop.f32.mrb[0].mxu0
        %v2663 = vadd.f32 0.0, %v2662
        %2664 = vmatprep.mubr.f32.mxu0 0.0
        %2665 = vmatmul.mubr.f32.gmra.mrb[0].mxu0 %v2397
        %v2666 = vpop.f32.mrb[0].mxu0
        %v2667 = vadd.f32 0.0, %v2666
        %v2668 = vpop.f32.mrb[0].mxu0
        %v2669 = vadd.f32 0.0, %v2668
        %2670 = vmatprep.mubr.f32.mxu0 0.0
        %2671 = vmatmul.mubr.f32.gmra.mrb[0].mxu0 %v2400
        %v2672 = vpop.f32.mrb[0].mxu0
        %v2673 = vadd.f32 0.0, %v2672
        %v2674 = vpop.f32.mrb[0].mxu0
        %v2675 = vadd.f32 0.0, %v2674
        %2676 = vmatprep.mubr.f32.mxu0 0.0
        %2677 = vmatmul.mubr.f32.gmra.mrb[0].mxu0 %v2403
        %v2678 = vpop.f32.mrb[0].mxu0
        %v2679 = vadd.f32 0.0, %v2678
        %v2680 = vpop.f32.mrb[0].mxu0
        %v2681 = vadd.f32 0.0, %v2680
        %2682 = vmatprep.mubr.f32.mxu0 0.0
        %2683 = vmatmul.mubr.f32.gmra.mrb[0].mxu0 %v2406
        %v2684 = vpop.f32.mrb[0].mxu0
        %v2685 = vadd.f32 0.0, %v2684
        %v2686 = vpop.f32.mrb[0].mxu0
        %v2687 = vadd.f32 0.0, %v2686
        %2688 = vmatprep.mubr.f32.mxu0 0.0
        %2689 = vmatmul.mubr.f32.gmra.mrb[0].mxu0 %v2409
        %v2690 = vpop.f32.mrb[0].mxu0
        %v2691 = vadd.f32 0.0, %v2690
        %v2692 = vpop.f32.mrb[0].mxu0
        %v2693 = vadd.f32 0.0, %v2692
        %2694 = vmatprep.mubr.f32.mxu0 0.0
        %2695 = vmatmul.mubr.f32.gmra.mrb[0].mxu0 %v2412
        %v2696 = vpop.f32.mrb[0].mxu0
        %v2697 = vadd.f32 0.0, %v2696
        %v2698 = vpop.f32.mrb[0].mxu0
        %v2699 = vadd.f32 0.0, %v2698
        %2700 = vmatprep.mubr.f32.mxu0 0.0
        %2701 = vmatmul.mubr.f32.gmra.mrb[0].mxu0 %v2415
        %v2702 = vpop.f32.mrb[0].mxu0
        %v2703 = vadd.f32 0.0, %v2702
        %v2704 = vpop.f32.mrb[0].mxu0
        %v2705 = vadd.f32 0.0, %v2704
        %2706 = vmatprep.mubr.f32.mxu0 0.0
        %2707 = vmatmul.mubr.f32.gmra.mrb[0].mxu0 %v2418
        %v2708 = vpop.f32.mrb[0].mxu0
        %v2709 = vadd.f32 0.0, %v2708
        %v2710 = vpop.f32.mrb[0].mxu0
        %v2711 = vadd.f32 0.0, %v2710
        %2712 = vmatprep.mubr.f32.mxu0 0.0
        %2713 = vmatmul.mubr.f32.gmra.mrb[0].mxu0 %v2421
        %v2714 = vpop.f32.mrb[0].mxu0
        %v2715 = vadd.f32 0.0, %v2714
        %v2716 = vpop.f32.mrb[0].mxu0
        %v2717 = vadd.f32 0.0, %v2716
        %2718 = vmatprep.mubr.f32.mxu0 0.0
        %2719 = vmatmul.mubr.f32.gmra.mrb[0].mxu0 %v2424
        %v2720 = vpop.f32.mrb[0].mxu0
        %v2721 = vadd.f32 0.0, %v2720
        %v2722 = vpop.f32.mrb[0].mxu0
        %v2723 = vadd.f32 0.0, %v2722
        %2724 = vmatprep.mubr.f32.mxu0 0.0
        %2725 = vmatmul.mubr.f32.gmra.mrb[0].mxu0 %v2427
        %v2726 = vpop.f32.mrb[0].mxu0
        %v2727 = vadd.f32 0.0, %v2726
        %v2728 = vpop.f32.mrb[0].mxu0
        %v2729 = vadd.f32 0.0, %v2728
        %2730 = vmatprep.mubr.f32.mxu0 0.0
        %2731 = vmatmul.mubr.f32.gmra.mrb[0].mxu0 %v2430
        %v2732 = vpop.f32.mrb[0].mxu0
        %v2733 = vadd.f32 0.0, %v2732
        %v2734 = vpop.f32.mrb[0].mxu0
        %v2735 = vadd.f32 0.0, %v2734
        %2736 = vmatprep.mubr.f32.mxu0 0.0
        %2737 = vmatmul.mubr.f32.gmra.mrb[0].mxu0 %v2433
        %v2738 = vpop.f32.mrb[0].mxu0
        %v2739 = vadd.f32 0.0, %v2738
        %v2740 = vpop.f32.mrb[0].mxu0
        %v2741 = vadd.f32 0.0, %v2740
        %2742 = vmatprep.mubr.f32.mxu0 0.0
        %2743 = vmatmul.mubr.f32.gmra.mrb[0].mxu0 %v2436
        %v2744 = vpop.f32.mrb[0].mxu0
        %v2745 = vadd.f32 0.0, %v2744
        %v2746 = vpop.f32.mrb[0].mxu0
        %v2747 = vadd.f32 0.0, %v2746
        %2748 = vmatprep.mubr.f32.mxu0 0.0
        %2749 = vmatmul.mubr.f32.gmra.mrb[0].mxu0 %v2439
        %v2750 = vpop.f32.mrb[0].mxu0
        %v2751 = vadd.f32 0.0, %v2750
        %v2752 = vpop.f32.mrb[0].mxu0
        %v2753 = vadd.f32 0.0, %v2752
        %2754 = vmatprep.mubr.f32.mxu0 0.0
        %2755 = vmatmul.mubr.f32.gmra.mrb[0].mxu0 %v2442
        %v2756 = vpop.f32.mrb[0].mxu0
        %v2757 = vadd.f32 0.0, %v2756
        %v2758 = vpop.f32.mrb[0].mxu0
        %v2759 = vadd.f32 0.0, %v2758
        %2760 = vmatprep.mubr.f32.mxu0 0.0
        %2761 = vmatmul.mubr.f32.gmra.mrb[0].mxu0 %v2445
        %v2762 = vpop.f32.mrb[0].mxu0
        %v2763 = vadd.f32 0.0, %v2762
        %v2764 = vpop.f32.mrb[0].mxu0
        %v2765 = vadd.f32 0.0, %v2764
        %2766 = vmatprep.mubr.f32.mxu0 0.0
        %2767 = vmatmul.mubr.f32.gmra.mrb[0].mxu0 %v2448
        %v2768 = vpop.f32.mrb[0].mxu0
        %v2769 = vadd.f32 0.0, %v2768
        %v2770 = vpop.f32.mrb[0].mxu0
        %v2771 = vadd.f32 0.0, %v2770
        %2772 = vmatprep.mubr.f32.mxu0 0.0
        %2773 = vmatmul.mubr.f32.gmra.mrb[0].mxu0 %v2451
        %v2774 = vpop.f32.mrb[0].mxu0
        %v2775 = vadd.f32 0.0, %v2774
        %v2776 = vpop.f32.mrb[0].mxu0
        %v2777 = vadd.f32 0.0, %v2776
        %2778 = vmatprep.mubr.f32.mxu0 0.0
        %2779 = vmatmul.mubr.f32.gmra.mrb[0].mxu0 %v2454
        %v2780 = vpop.f32.mrb[0].mxu0
        %v2781 = vadd.f32 0.0, %v2780
        %v2782 = vpop.f32.mrb[0].mxu0
        %v2783 = vadd.f32 0.0, %v2782
        %2784 = vmatprep.mubr.f32.mxu0 0.0
        %2785 = vmatmul.mubr.f32.gmra.mrb[0].mxu0 %v2457
        %v2786 = vpop.f32.mrb[0].mxu0
        %v2787 = vadd.f32 0.0, %v2786
        %v2788 = vpop.f32.mrb[0].mxu0
        %v2789 = vadd.f32 0.0, %v2788
        %2790 = vmatprep.mubr.f32.mxu0 0.0
        %2791 = vmatmul.mubr.f32.gmra.mrb[0].mxu0 %v2460
        %v2792 = vpop.f32.mrb[0].mxu0
        %v2793 = vadd.f32 0.0, %v2792
        %v2794 = vpop.f32.mrb[0].mxu0
        %v2795 = vadd.f32 0.0, %v2794
        %2796 = vmatprep.mubr.f32.mxu0 0.0
        %2797 = vmatmul.mubr.f32.gmra.mrb[0].mxu0 %v2463
        %v2798 = vpop.f32.mrb[0].mxu0
        %v2799 = vadd.f32 0.0, %v2798
        %v2800 = vpop.f32.mrb[0].mxu0
        %v2801 = vadd.f32 0.0, %v2800
        %2802 = vmatprep.mubr.f32.mxu0 0.0
        %2803 = vmatmul.mubr.f32.gmra.mrb[0].mxu0 %v2466
        %v2804 = vpop.f32.mrb[0].mxu0
        %v2805 = vadd.f32 0.0, %v2804
        %v2806 = vpop.f32.mrb[0].mxu0
        %v2807 = vadd.f32 0.0, %v2806
        %2808 = vmatprep.mubr.f32.mxu0 0.0
        %2809 = vmatmul.mubr.f32.gmra.mrb[0].mxu0 %v2469
        %v2810 = vpop.f32.mrb[0].mxu0
        %v2811 = vadd.f32 0.0, %v2810
        %v2812 = vpop.f32.mrb[0].mxu0
        %v2813 = vadd.f32 0.0, %v2812
        %2814 = vmatprep.mubr.f32.mxu0 0.0
        %2815 = vmatmul.mubr.f32.gmra.mrb[0].mxu0 %v2472
        %v2816 = vpop.f32.mrb[0].mxu0
        %v2817 = vadd.f32 0.0, %v2816
        %v2818 = vpop.f32.mrb[0].mxu0
        %v2819 = vadd.f32 0.0, %v2818
        %2820 = vmatprep.mubr.f32.mxu0 0.0
        %2821 = vmatmul.mubr.f32.gmra.mrb[0].mxu0 %v2475
        %v2822 = vpop.f32.mrb[0].mxu0
        %v2823 = vadd.f32 0.0, %v2822
        %v2824 = vpop.f32.mrb[0].mxu0
        %v2825 = vadd.f32 0.0, %v2824
        %2826 = vmatprep.mubr.f32.mxu0 0.0
        %2827 = vmatmul.mubr.f32.gmra.mrb[0].mxu0 %v2478
        %v2828 = vpop.f32.mrb[0].mxu0
        %v2829 = vadd.f32 0.0, %v2828
        %v2830 = vpop.f32.mrb[0].mxu0
        %v2831 = vadd.f32 0.0, %v2830
        %2832 = vmatprep.mubr.f32.mxu0 0.0
        %2833 = vmatmul.mubr.f32.gmra.mrb[0].mxu0 %v2481
        %v2834 = vpop.f32.mrb[0].mxu0
        %v2835 = vadd.f32 0.0, %v2834
        %v2836 = vpop.f32.mrb[0].mxu0
        %v2837 = vadd.f32 0.0, %v2836
        %2838 = vmatprep.mubr.f32.mxu0 0.0
        %2839 = vmatmul.mubr.f32.gmra.mrb[0].mxu0 %v2484
        %v2840 = vpop.f32.mrb[0].mxu0
        %v2841 = vadd.f32 0.0, %v2840
        %v2842 = vpop.f32.mrb[0].mxu0
        %v2843 = vadd.f32 0.0, %v2842
        %2844 = vmatprep.mubr.f32.mxu0 0.0
        %2845 = vmatmul.mubr.f32.gmra.mrb[0].mxu0 %v2487
        %v2846 = vpop.f32.mrb[0].mxu0
        %v2847 = vadd.f32 0.0, %v2846
        %v2848 = vpop.f32.mrb[0].mxu0
        %v2849 = vadd.f32 0.0, %v2848
        %2850 = vmatprep.mubr.f32.mxu0 0.0
        %2851 = vmatmul.mubr.f32.gmra.mrb[0].mxu0 %v2490
        %v2852 = vpop.f32.mrb[0].mxu0
        %v2853 = vadd.f32 0.0, %v2852
        %v2854 = vpop.f32.mrb[0].mxu0
        %v2855 = vadd.f32 0.0, %v2854
        %2856 = vmatprep.mubr.f32.mxu0 0.0
        %2857 = vmatmul.mubr.f32.gmra.mrb[0].mxu0 %v2493
        %v2858 = vpop.f32.mrb[0].mxu0
        %v2859 = vadd.f32 0.0, %v2858
        %v2860 = vpop.f32.mrb[0].mxu0
        %v2861 = vadd.f32 0.0, %v2860
        %2862 = vmatprep.mubr.f32.mxu0 0.0
        %2863 = vmatmul.mubr.f32.gmra.mrb[0].mxu0 %v2496
        %v2864 = vpop.f32.mrb[0].mxu0
        %v2865 = vadd.f32 0.0, %v2864
        %v2866 = vpop.f32.mrb[0].mxu0
        %v2867 = vadd.f32 0.0, %v2866
        %2868 = vmatprep.mubr.f32.mxu0 0.0
        %2869 = vmatmul.mubr.f32.gmra.mrb[0].mxu0 %v2499
        %v2870 = vpop.f32.mrb[0].mxu0
        %v2871 = vadd.f32 0.0, %v2870
        %v2872 = vpop.f32.mrb[0].mxu0
        %v2873 = vadd.f32 0.0, %v2872
        %2874 = vmatprep.mubr.f32.mxu0 0.0
        %2875 = vmatmul.mubr.f32.gmra.mrb[0].mxu0 %v2502
        %v2876 = vpop.f32.mrb[0].mxu0
        %v2877 = vadd.f32 0.0, %v2876
        %v2878 = vpop.f32.mrb[0].mxu0
        %v2879 = vadd.f32 0.0, %v2878
        %2880 = vmatprep.mubr.f32.mxu0 0.0
        %2881 = vmatmul.mubr.f32.gmra.mrb[0].mxu0 %v2505
        %v2882 = vpop.f32.mrb[0].mxu0
        %v2883 = vadd.f32 0.0, %v2882
        %v2884 = vpop.f32.mrb[0].mxu0
        %v2885 = vadd.f32 0.0, %v2884
        %2886 = vmatprep.mubr.f32.mxu0 0.0
        %2887 = vmatmul.mubr.f32.gmra.mrb[0].mxu0 %v2508
        %v2888 = vpop.f32.mrb[0].mxu0
        %v2889 = vadd.f32 0.0, %v2888
        %v2890 = vpop.f32.mrb[0].mxu0
        %v2891 = vadd.f32 0.0, %v2890
        %2892 = vmatprep.mubr.f32.mxu0 0.0
        %2893 = vmatmul.mubr.f32.gmra.mrb[0].mxu0 %v2511
        %v2894 = vpop.f32.mrb[0].mxu0
        %v2895 = vadd.f32 0.0, %v2894
        %v2896 = vpop.f32.mrb[0].mxu0
        %v2897 = vadd.f32 0.0, %v2896
        %2898 = vmatprep.mubr.f32.mxu0 0.0
        %2899 = vmatmul.mubr.f32.gmra.mrb[0].mxu0 %v2514
        %v2900 = vpop.f32.mrb[0].mxu0
        %v2901 = vadd.f32 0.0, %v2900
        %v2902 = vpop.f32.mrb[0].mxu0
        %v2903 = vadd.f32 0.0, %v2902
        %2904 = vmatprep.mubr.f32.mxu0 0.0
        %2905 = vmatmul.mubr.f32.gmra.mrb[0].mxu0 %v2517
        %v2906 = vpop.f32.mrb[0].mxu0
        %v2907 = vadd.f32 0.0, %v2906
        %v2908 = vpop.f32.mrb[0].mxu0
        %v2909 = vadd.f32 0.0, %v2908
        %2910 = vmatprep.mubr.f32.mxu0 0.0
        %2911 = vmatmul.mubr.f32.gmra.mrb[0].mxu0 %v2520
        %v2912 = vpop.f32.mrb[0].mxu0
        %v2913 = vadd.f32 0.0, %v2912
        %v2914 = vpop.f32.mrb[0].mxu0
        %v2915 = vadd.f32 0.0, %v2914
        %2916 = vmatprep.mubr.f32.mxu0 0.0
        %2917 = vmatmul.mubr.f32.gmra.mrb[0].mxu0 %v2523
        %v2918 = vpop.f32.mrb[0].mxu0
        %v2919 = vadd.f32 0.0, %v2918
        %v2920 = vpop.f32.mrb[0].mxu0
        %v2921 = vadd.f32 0.0, %v2920
        %2922 = vmatprep.mubr.f32.mxu0 0.0
        %2923 = vmatmul.mubr.f32.gmra.mrb[0].mxu0 %v2526
        %v2924 = vpop.f32.mrb[0].mxu0
        %v2925 = vadd.f32 0.0, %v2924
        %v2926 = vpop.f32.mrb[0].mxu0
        %v2927 = vadd.f32 0.0, %v2926
        %2928 = vmatprep.mubr.f32.mxu0 0.0
        %2929 = vmatmul.mubr.f32.gmra.mrb[0].mxu0 %v2529
        %v2930 = vpop.f32.mrb[0].mxu0
        %v2931 = vadd.f32 0.0, %v2930
        %v2932 = vpop.f32.mrb[0].mxu0
        %v2933 = vadd.f32 0.0, %v2932
        %2934 = vmatprep.mubr.f32.mxu0 0.0
        %2935 = vmatmul.mubr.f32.gmra.mrb[0].mxu0 %v2532
        %v2936 = vpop.f32.mrb[0].mxu0
        %v2937 = vadd.f32 0.0, %v2936
        %v2938 = vpop.f32.mrb[0].mxu0
        %v2939 = vadd.f32 0.0, %v2938
        %2940 = vmatprep.mubr.f32.mxu0 0.0
        %2941 = vmatmul.mubr.f32.gmra.mrb[0].mxu0 %v2535
        %v2942 = vpop.f32.mrb[0].mxu0
        %v2943 = vadd.f32 0.0, %v2942
        %v2944 = vpop.f32.mrb[0].mxu0
        %v2945 = vadd.f32 0.0, %v2944
        %2946 = vmatprep.mubr.f32.mxu0 0.0
        %2947 = vmatmul.mubr.f32.gmra.mrb[0].mxu0 %v2538
        %v2948 = vpop.f32.mrb[0].mxu0
        %v2949 = vadd.f32 0.0, %v2948
        %v2950 = vpop.f32.mrb[0].mxu0
        %v2951 = vadd.f32 0.0, %v2950
        %2952 = vmatprep.mubr.f32.mxu0 0.0
        %2953 = vmatmul.mubr.f32.gmra.mrb[0].mxu0 %v2541
        %v2954 = vpop.f32.mrb[0].mxu0
        %v2955 = vadd.f32 0.0, %v2954
        %v2956 = vpop.f32.mrb[0].mxu0
        %v2957 = vadd.f32 0.0, %v2956
        %2958 = vmatprep.mubr.f32.mxu0 0.0
        %2959 = vmatmul.mubr.f32.gmra.mrb[0].mxu0 %v2544
        %v2960 = vpop.f32.mrb[0].mxu0
        %v2961 = vadd.f32 0.0, %v2960
        %v2962 = vpop.f32.mrb[0].mxu0
        %v2963 = vadd.f32 0.0, %v2962
        %2964 = vmatprep.mubr.f32.mxu0 0.0
        %2965 = vmatmul.mubr.f32.gmra.mrb[0].mxu0 %v2547
        %v2966 = vpop.f32.mrb[0].mxu0
        %v2967 = vadd.f32 0.0, %v2966
        %v2968 = vpop.f32.mrb[0].mxu0
        %v2969 = vadd.f32 0.0, %v2968
        %2970 = vmatprep.mubr.f32.mxu0 0.0
        %2971 = vmatmul.mubr.f32.gmra.mrb[0].mxu0 %v2550
        %v2972 = vpop.f32.mrb[0].mxu0
        %v2973 = vadd.f32 0.0, %v2972
        %v2974 = vpop.f32.mrb[0].mxu0
        %v2975 = vadd.f32 0.0, %v2974
        %2976 = vmatprep.mubr.f32.mxu0 0.0
        %2977 = vmatmul.mubr.f32.gmra.mrb[0].mxu0 %v2553
        %v2978 = vpop.f32.mrb[0].mxu0
        %v2979 = vadd.f32 0.0, %v2978
        %v2980 = vpop.f32.mrb[0].mxu0
        %v2981 = vadd.f32 0.0, %v2980
        %2982 = vmatprep.mubr.f32.mxu0 0.0
        %2983 = vmatmul.mubr.f32.gmra.mrb[0].mxu0 %v2556
        %v2984 = vpop.f32.mrb[0].mxu0
        %v2985 = vadd.f32 0.0, %v2984
        %v2986 = vpop.f32.mrb[0].mxu0
        %v2987 = vadd.f32 0.0, %v2986
        %2988 = vmatprep.mubr.f32.mxu0 0.0
        %2989 = vmatmul.mubr.f32.gmra.mrb[0].mxu0 %v2559
        %v2990 = vpop.f32.mrb[0].mxu0
        %v2991 = vadd.f32 0.0, %v2990
        %v2992 = vpop.f32.mrb[0].mxu0
        %v2993 = vadd.f32 0.0, %v2992
        %2994 = vmatprep.mubr.f32.mxu0 0.0
        %2995 = vmatmul.mubr.f32.gmra.mrb[0].mxu0 %v2562
        %v2996 = vpop.f32.mrb[0].mxu0
        %v2997 = vadd.f32 0.0, %v2996
        %v2998 = vpop.f32.mrb[0].mxu0
        %v2999 = vadd.f32 0.0, %v2998
        %3000 = vmatprep.mubr.f32.mxu0 0.0
        %3001 = vmatmul.mubr.f32.gmra.mrb[0].mxu0 %v2565
        %v3002 = vpop.f32.mrb[0].mxu0
        %v3003 = vadd.f32 0.0, %v3002
        %v3004 = vpop.f32.mrb[0].mxu0
        %v3005 = vadd.f32 0.0, %v3004
        %3006 = vmatprep.mubr.f32.mxu0 0.0
        %3007 = vmatmul.mubr.f32.gmra.mrb[0].mxu0 %v2568
        %v3008 = vpop.f32.mrb[0].mxu0
        %v3009 = vadd.f32 0.0, %v3008
        %v3010 = vpop.f32.mrb[0].mxu0
        %v3011 = vadd.f32 0.0, %v3010
        %3012 = vmatprep.mubr.f32.mxu0 0.0
        %3013 = vmatmul.mubr.f32.gmra.mrb[0].mxu0 %v2571
        %v3014 = vpop.f32.mrb[0].mxu0
        %v3015 = vadd.f32 0.0, %v3014
        %v3016 = vpop.f32.mrb[0].mxu0
        %v3017 = vadd.f32 0.0, %v3016
        %3018 = vmatprep.mubr.f32.mxu0 0.0
        %3019 = vmatmul.mubr.f32.gmra.mrb[0].mxu0 %v2574
        %v3020 = vpop.f32.mrb[0].mxu0
        %v3021 = vadd.f32 0.0, %v3020
        %v3022 = vpop.f32.mrb[0].mxu0
        %v3023 = vadd.f32 0.0, %v3022
        %3024 = vdwg.mxu0
        %3025 = vst [vmem:[%s897] sm:$0xff] %v2643
        %3026 = vst [vmem:[%s897 + $0x8] sm:$0xff] %v2645
        %3027 = vst [vmem:[%s897 + $0x10] sm:$0xff] %v2649
        %3028 = vst [vmem:[%s897 + $0x18] sm:$0xff] %v2651
        %3029 = vst [vmem:[%s897 + $0x20] sm:$0xff] %v2655
        %3030 = vst [vmem:[%s897 + $0x28] sm:$0xff] %v2657
        %3031 = vst [vmem:[%s897 + $0x30] sm:$0xff] %v2661
        %3032 = vst [vmem:[%s897 + $0x38] sm:$0xff] %v2663
        %3033 = vst [vmem:[%s897 + $0x40] sm:$0xff] %v2667
        %3034 = vst [vmem:[%s897 + $0x48] sm:$0xff] %v2669
        %3035 = vst [vmem:[%s897 + $0x50] sm:$0xff] %v2673
        %3036 = vst [vmem:[%s897 + $0x58] sm:$0xff] %v2675
        %3037 = vst [vmem:[%s897 + $0x60] sm:$0xff] %v2679
        %3038 = vst [vmem:[%s897 + $0x68] sm:$0xff] %v2681
        %3039 = vst [vmem:[%s897 + $0x70] sm:$0xff] %v2685
        %3040 = vst [vmem:[%s897 + $0x78] sm:$0xff] %v2687
        %s3041 = scalar_lea.vmem %s897, 128 [#allocation30]
        %3042 = vst [vmem:[%s3041] sm:$0xff] %v2691
        %3043 = vst [vmem:[%s3041 + $0x8] sm:$0xff] %v2693
        %3044 = vst [vmem:[%s3041 + $0x10] sm:$0xff] %v2697
        %3045 = vst [vmem:[%s3041 + $0x18] sm:$0xff] %v2699
        %3046 = vst [vmem:[%s3041 + $0x20] sm:$0xff] %v2703
        %3047 = vst [vmem:[%s3041 + $0x28] sm:$0xff] %v2705
        %3048 = vst [vmem:[%s3041 + $0x30] sm:$0xff] %v2709
        %3049 = vst [vmem:[%s3041 + $0x38] sm:$0xff] %v2711
        %3050 = vst [vmem:[%s3041 + $0x40] sm:$0xff] %v2715
        %3051 = vst [vmem:[%s3041 + $0x48] sm:$0xff] %v2717
        %3052 = vst [vmem:[%s3041 + $0x50] sm:$0xff] %v2721
        %3053 = vst [vmem:[%s3041 + $0x58] sm:$0xff] %v2723
        %3054 = vst [vmem:[%s3041 + $0x60] sm:$0xff] %v2727
        %3055 = vst [vmem:[%s3041 + $0x68] sm:$0xff] %v2729
        %3056 = vst [vmem:[%s3041 + $0x70] sm:$0xff] %v2733
        %3057 = vst [vmem:[%s3041 + $0x78] sm:$0xff] %v2735
        %s3058 = scalar_lea.vmem %s897, 256 [#allocation30]
        %3059 = vst [vmem:[%s3058] sm:$0xff] %v2739
        %3060 = vst [vmem:[%s3058 + $0x8] sm:$0xff] %v2741
        %3061 = vst [vmem:[%s3058 + $0x10] sm:$0xff] %v2745
        %3062 = vst [vmem:[%s3058 + $0x18] sm:$0xff] %v2747
        %3063 = vst [vmem:[%s3058 + $0x20] sm:$0xff] %v2751
        %3064 = vst [vmem:[%s3058 + $0x28] sm:$0xff] %v2753
        %3065 = vst [vmem:[%s3058 + $0x30] sm:$0xff] %v2757
        %3066 = vst [vmem:[%s3058 + $0x38] sm:$0xff] %v2759
        %3067 = vst [vmem:[%s3058 + $0x40] sm:$0xff] %v2763
        %3068 = vst [vmem:[%s3058 + $0x48] sm:$0xff] %v2765
        %3069 = vst [vmem:[%s3058 + $0x50] sm:$0xff] %v2769
        %3070 = vst [vmem:[%s3058 + $0x58] sm:$0xff] %v2771
        %3071 = vst [vmem:[%s3058 + $0x60] sm:$0xff] %v2775
        %3072 = vst [vmem:[%s3058 + $0x68] sm:$0xff] %v2777
        %3073 = vst [vmem:[%s3058 + $0x70] sm:$0xff] %v2781
        %3074 = vst [vmem:[%s3058 + $0x78] sm:$0xff] %v2783
        %s3075 = scalar_lea.vmem %s897, 384 [#allocation30]
        %3076 = vst [vmem:[%s3075] sm:$0xff] %v2787
        %3077 = vst [vmem:[%s3075 + $0x8] sm:$0xff] %v2789
        %3078 = vst [vmem:[%s3075 + $0x10] sm:$0xff] %v2793
        %3079 = vst [vmem:[%s3075 + $0x18] sm:$0xff] %v2795
        %3080 = vst [vmem:[%s3075 + $0x20] sm:$0xff] %v2799
        %3081 = vst [vmem:[%s3075 + $0x28] sm:$0xff] %v2801
        %3082 = vst [vmem:[%s3075 + $0x30] sm:$0xff] %v2805
        %3083 = vst [vmem:[%s3075 + $0x38] sm:$0xff] %v2807
        %3084 = vst [vmem:[%s3075 + $0x40] sm:$0xff] %v2811
        %3085 = vst [vmem:[%s3075 + $0x48] sm:$0xff] %v2813
        %3086 = vst [vmem:[%s3075 + $0x50] sm:$0xff] %v2817
        %3087 = vst [vmem:[%s3075 + $0x58] sm:$0xff] %v2819
        %3088 = vst [vmem:[%s3075 + $0x60] sm:$0xff] %v2823
        %3089 = vst [vmem:[%s3075 + $0x68] sm:$0xff] %v2825
        %3090 = vst [vmem:[%s3075 + $0x70] sm:$0xff] %v2829
        %3091 = vst [vmem:[%s3075 + $0x78] sm:$0xff] %v2831
        %s3092 = scalar_lea.vmem %s897, 512 [#allocation30]
        %3093 = vst [vmem:[%s3092] sm:$0xff] %v2835
        %3094 = vst [vmem:[%s3092 + $0x8] sm:$0xff] %v2837
        %3095 = vst [vmem:[%s3092 + $0x10] sm:$0xff] %v2841
        %3096 = vst [vmem:[%s3092 + $0x18] sm:$0xff] %v2843
        %3097 = vst [vmem:[%s3092 + $0x20] sm:$0xff] %v2847
        %3098 = vst [vmem:[%s3092 + $0x28] sm:$0xff] %v2849
        %3099 = vst [vmem:[%s3092 + $0x30] sm:$0xff] %v2853
        %3100 = vst [vmem:[%s3092 + $0x38] sm:$0xff] %v2855
        %3101 = vst [vmem:[%s3092 + $0x40] sm:$0xff] %v2859
        %3102 = vst [vmem:[%s3092 + $0x48] sm:$0xff] %v2861
        %3103 = vst [vmem:[%s3092 + $0x50] sm:$0xff] %v2865
        %3104 = vst [vmem:[%s3092 + $0x58] sm:$0xff] %v2867
        %3105 = vst [vmem:[%s3092 + $0x60] sm:$0xff] %v2871
        %3106 = vst [vmem:[%s3092 + $0x68] sm:$0xff] %v2873
        %3107 = vst [vmem:[%s3092 + $0x70] sm:$0xff] %v2877
        %3108 = vst [vmem:[%s3092 + $0x78] sm:$0xff] %v2879
        %s3109 = scalar_lea.vmem %s897, 640 [#allocation30]
        %3110 = vst [vmem:[%s3109] sm:$0xff] %v2883
        %3111 = vst [vmem:[%s3109 + $0x8] sm:$0xff] %v2885
        %3112 = vst [vmem:[%s3109 + $0x10] sm:$0xff] %v2889
        %3113 = vst [vmem:[%s3109 + $0x18] sm:$0xff] %v2891
        %3114 = vst [vmem:[%s3109 + $0x20] sm:$0xff] %v2895
        %3115 = vst [vmem:[%s3109 + $0x28] sm:$0xff] %v2897
        %3116 = vst [vmem:[%s3109 + $0x30] sm:$0xff] %v2901
        %3117 = vst [vmem:[%s3109 + $0x38] sm:$0xff] %v2903
        %3118 = vst [vmem:[%s3109 + $0x40] sm:$0xff] %v2907
        %3119 = vst [vmem:[%s3109 + $0x48] sm:$0xff] %v2909
        %3120 = vst [vmem:[%s3109 + $0x50] sm:$0xff] %v2913
        %3121 = vst [vmem:[%s3109 + $0x58] sm:$0xff] %v2915
        %3122 = vst [vmem:[%s3109 + $0x60] sm:$0xff] %v2919
        %3123 = vst [vmem:[%s3109 + $0x68] sm:$0xff] %v2921
        %3124 = vst [vmem:[%s3109 + $0x70] sm:$0xff] %v2925
        %3125 = vst [vmem:[%s3109 + $0x78] sm:$0xff] %v2927
        %s3126 = scalar_lea.vmem %s897, 768 [#allocation30]
        %3127 = vst [vmem:[%s3126] sm:$0xff] %v2931
        %3128 = vst [vmem:[%s3126 + $0x8] sm:$0xff] %v2933
        %3129 = vst [vmem:[%s3126 + $0x10] sm:$0xff] %v2937
        %3130 = vst [vmem:[%s3126 + $0x18] sm:$0xff] %v2939
        %3131 = vst [vmem:[%s3126 + $0x20] sm:$0xff] %v2943
        %3132 = vst [vmem:[%s3126 + $0x28] sm:$0xff] %v2945
        %3133 = vst [vmem:[%s3126 + $0x30] sm:$0xff] %v2949
        %3134 = vst [vmem:[%s3126 + $0x38] sm:$0xff] %v2951
        %3135 = vst [vmem:[%s3126 + $0x40] sm:$0xff] %v2955
        %3136 = vst [vmem:[%s3126 + $0x48] sm:$0xff] %v2957
        %3137 = vst [vmem:[%s3126 + $0x50] sm:$0xff] %v2961
        %3138 = vst [vmem:[%s3126 + $0x58] sm:$0xff] %v2963
        %3139 = vst [vmem:[%s3126 + $0x60] sm:$0xff] %v2967
        %3140 = vst [vmem:[%s3126 + $0x68] sm:$0xff] %v2969
        %3141 = vst [vmem:[%s3126 + $0x70] sm:$0xff] %v2973
        %3142 = vst [vmem:[%s3126 + $0x78] sm:$0xff] %v2975
        %s3143 = scalar_lea.vmem %s897, 896 [#allocation30]
        %3144 = vst [vmem:[%s3143] sm:$0xff] %v2979
        %3145 = vst [vmem:[%s3143 + $0x8] sm:$0xff] %v2981
        %3146 = vst [vmem:[%s3143 + $0x10] sm:$0xff] %v2985
        %3147 = vst [vmem:[%s3143 + $0x18] sm:$0xff] %v2987
        %3148 = vst [vmem:[%s3143 + $0x20] sm:$0xff] %v2991
        %3149 = vst [vmem:[%s3143 + $0x28] sm:$0xff] %v2993
        %3150 = vst [vmem:[%s3143 + $0x30] sm:$0xff] %v2997
        %3151 = vst [vmem:[%s3143 + $0x38] sm:$0xff] %v2999
        %3152 = vst [vmem:[%s3143 + $0x40] sm:$0xff] %v3003
        %3153 = vst [vmem:[%s3143 + $0x48] sm:$0xff] %v3005
        %3154 = vst [vmem:[%s3143 + $0x50] sm:$0xff] %v3009
        %3155 = vst [vmem:[%s3143 + $0x58] sm:$0xff] %v3011
        %3156 = vst [vmem:[%s3143 + $0x60] sm:$0xff] %v3015
        %3157 = vst [vmem:[%s3143 + $0x68] sm:$0xff] %v3017
        %3158 = vst [vmem:[%s3143 + $0x70] sm:$0xff] %v3021
        %3159 = vst [vmem:[%s3143 + $0x78] sm:$0xff] %v3023
        %s3160 = sand.u32 %s500, 1
        %s3161 = scalar_lea.sflag [#allocation5], %s3160
        %s3162 = sand.u32 %s500, 1
        %s3163 = smul.addr %s3162, 1024
        %s3164 = scalar_lea.vmem [#allocation30], %s3163
        // Predicated region
        $region173: #{_lambda_.1} parent=99 // pred_check
          %p3165 = pneg %p510
        $region174: #{_lambda_.1} parent=99 // pred_check_branch
          %3167 = sbr.rel (%p3165) target = $region176
        $region175: #{_lambda_.1} parent=99 // pred_region
          #allocation32 [shape = 'u32[6]{0}', space=smem, size = 0x18, scoped, tag = 'DMA stride descriptor']
          %s3168 = smul.u32 8, %s48
          %s3170 = ssub.s32 16384, 16384
          %3171 = vsyncadd %s3161, %s3170
          %s3172 = smul.addr %s3168, 2
          %s3173 = smul.addr %s47, 512
          %s3174 = sadd.s32 %s3172, %s3173
          %s3175 = smul.addr %s3174, 128
          %s3176 = scalar_lea.hbm %s20, %s3175
          %s3178 = sshll.u32 1, 14
          %s3179 = sxor.u32 4294967295, %s3178
          %s3182 = sshll.u32 7, 18
          %s3183 = sxor.u32 4294967295, %s3182
          %s3184 = sand.u32 0, %s3183
          %s3186 = sor.u32 %s3184, 0
          %s3188 = sshll.u32 3, 24
          %s3189 = sxor.u32 4294967295, %s3188
          %s3190 = sand.u32 %s3186, %s3189
          %s3192 = sor.u32 %s3190, 0
          %s3193 = sshll.u32 %s3164, 4
          %s3194 = int_to_ptr.vmem [resolvable:$true] %s3193
          %3200 = sst [smem:[#allocation32]] 2048
          %s3201 = scalar_lea.smem [#allocation32], 1
          %3202 = sst [smem:[%s3201]] 8192
          %s3203 = scalar_lea.smem [#allocation32], 2
          %3204 = sst [smem:[%s3203]] 8
          %s3205 = scalar_lea.smem [#allocation32], 3
          %3206 = sst [smem:[%s3205]] 256
          %s3207 = scalar_lea.smem [#allocation32], 4
          %3208 = sst [smem:[%s3207]] 256
          %s3209 = scalar_lea.smem [#allocation32], 5
          %3210 = sst [smem:[%s3209]] 16
          %3212 = dma.general %s3194, 16384, %s3176, %s3161, [#allocation31], [#allocation32], %s3192, 0
        $region176: #{_lambda_.1} parent=99 // pred_fallthru
          _
      $region100: #{_lambda_.1} parent=5 // pred_fallthru
        _
      %p3213 = scmp.le.s32.totalorder 2, %s38
      // Predicated region
      $region177: #{_lambda_.1} parent=5 // pred_check
        %p3214 = pneg %p3213
      $region178: #{_lambda_.1} parent=5 // pred_check_branch
        %3216 = sbr.rel (%p3214) target = $region180
      $region179: #{_lambda_.1} parent=5 // pred_region
        %s3217 = ssub.s32 %s38, 2
        // Predicated region
        $region181: #{_lambda_.1} parent=179 // pred_check
          %p3218 = pneg %p516
        $region182: #{_lambda_.1} parent=179 // pred_check_branch
          %3220 = sbr.rel (%p3218) target = $region184
        $region183: #{_lambda_.1} parent=179 // pred_region
          %s3221 = sand.u32 %s501, 1
          %s3222 = scalar_lea.sflag [#allocation5], %s3221
          %s3223 = sand.u32 %s501, 1
          %s3224 = smul.addr %s3223, 1024
          %s3225 = scalar_lea.vmem [#allocation30], %s3224
          %3226 = dma.done %s3222, 16384
        $region184: #{_lambda_.1} parent=179 // pred_fallthru
          _
      $region180: #{_lambda_.1} parent=5 // pred_fallthru
        _
    $region6: #{_lambda_.1} parent=1 // loop_footer
      %s42 = sadd.s32 1, %s38
    $region7: #{_lambda_.1} parent=1 // loop_footer_branch
      %37 = sbr.rel target = $region3
    $region8: #{_lambda_.1} parent=1 // loop_exit
      _
    %3227 = vsyncpa [#allocation4], 1
    %s3228 = scalar_lea.sflag [#allocation4], 1
    %3229 = vsyncpa %s3228, 1
    %3230 = vsyncpa [#allocation7], 1
    %3231 = vsyncpa [#allocation10], 1
    %3232 = vsyncpa [#allocation13], 1
    %3233 = vsyncpa [#allocation16], 1
    %3234 = vsyncpa [#allocation19], 1
    %3235 = vsyncpa [#allocation22], 1
    %3236 = vsyncpa [#allocation25], 1
    %3237 = vsyncpa [#allocation28], 1
    %3238 = vsyncpa [#allocation5], 1
    %s3239 = scalar_lea.sflag [#allocation5], 1
    %3240 = vsyncpa %s3239, 1

</llo_original>
